<compile_context>
chip_gen: v7x
topology: tpu7x:2x2x1
jax: 0.10.0
libtpu: 0.0.40
codegen_flags: <defaults>
</compile_context>

<pallas_src>
import functools

import jax
import jax.numpy as jnp
from jax.experimental import pallas as pl
from jax.experimental.pallas import tpu as pltpu


# ----------------------------------------------------------------------------
# Fused decoder kernel: one grid step = one batch tile, everything in VMEM.
# ----------------------------------------------------------------------------
def _fused_decoder_kernel(y_ref, enc_ref, h0_ref, c0_ref,
                          wih0_ref, wihr_ref, whh_ref, b_ref,
                          wm_ref, wd_ref, batt_ref, wout_ref, bout_ref,
                          logits_ref, hT_ref, cT_ref,
                          xbuf_ref,
                          *, hidden, seq_len, n_layers, batch_tile,
                          use_attention):
    H, T, L, Bt = hidden, seq_len, n_layers, batch_tile
    f32 = jnp.float32

    def sigmoid(v):
        # 1/(1+exp(-v)); exp + approx reciprocal both run on the EUP slot.
        return pl.reciprocal(1.0 + jnp.exp(-v), approx=True)

    h0_all = h0_ref[...]                         # (Bt, L, H)
    c0_all = c0_ref[...]                         # (Bt, L, H)

    for l in range(L):                           # static layer loop
        if l == 0:
            x_flat = y_ref[...]                  # (Bt*T, I)  batch-major rows
            w_in = wih0_ref[...]                 # (I, 4H)
        else:
            x_flat = xbuf_ref[...].reshape(Bt * T, H)   # previous layer output
            w_in = wihr_ref[l - 1]               # (H, 4H)
        bias = b_ref[l:l + 1, :]                 # (1, 4H)  (b_ih + b_hh)
        # Hoisted input projection for ALL batch rows & timesteps: 1 matmul.
        xg = (jnp.dot(x_flat, w_in, preferred_element_type=f32) + bias
              ).reshape(Bt, T, 4 * H)            # (Bt, T, 4H)
        whh = whh_ref[l]                         # (H, 4H)
        h = h0_all[:, l, :]                      # (Bt, H)
        c = c0_all[:, l, :]                      # (Bt, H)
        for t in range(T):                       # static unroll of recurrence
            # Only the recurrent matmul stays on the serial critical path.
            pre = xg[:, t, :] + jnp.dot(h, whh, preferred_element_type=f32)
            sg = sigmoid(pre)                    # PyTorch gate order: i,f,g,o
            i_g = sg[:, 0 * H:1 * H]
            f_g = sg[:, 1 * H:2 * H]
            o_g = sg[:, 3 * H:4 * H]
            g_g = jnp.tanh(pre[:, 2 * H:3 * H])
            c = f_g * c + i_g * g_g
            h = o_g * jnp.tanh(c)
            xbuf_ref[:, t, :] = h                # layer output, stays in VMEM
        hT_ref[:, l, :] = h
        cT_ref[:, l, :] = c
        # TODO(synk): inter-layer LSTM dropout omitted (p=0 / eval -> identity)

    dec3 = xbuf_ref[...]                         # (Bt, T, H) top-layer output
    dec_flat = dec3.reshape(Bt * T, H)
    if use_attention:
        ctx = enc_ref[...]                       # (Bt, S, H)
        # scores = dec @ ctx^T (batched einsum, contracts feature dim)
        scores = jnp.einsum('bth,bsh->bts', dec3, ctx,
                            preferred_element_type=f32)          # (Bt, T, S)
        scores = scores - jnp.max(scores, axis=-1, keepdims=True)
        e = jnp.exp(scores)
        attn = e * pl.reciprocal(jnp.sum(e, axis=-1, keepdims=True),
                                 approx=True)                    # softmax
        mix = jnp.einsum('bts,bsh->bth', attn, ctx,
                         preferred_element_type=f32)             # (Bt, T, H)
        comb = (jnp.dot(mix.reshape(Bt * T, H), wm_ref[...],
                        preferred_element_type=f32)
                + jnp.dot(dec_flat, wd_ref[...], preferred_element_type=f32)
                + batt_ref[...])
        dec_flat = jnp.tanh(comb)                                # (Bt*T, H)
        # attention map is not emitted: the caller discards it.

    # Output linear, lane-dense store: (Bt*T, 128-padded output_size).
    logits_ref[...] = (jnp.dot(dec_flat, wout_ref[...],
                               preferred_element_type=f32)
                       + bout_ref[...])


def _forward_impl(y, enc, h0, c0,
                  wih0, wih_rest, whh_all, b_all,
                  w_mix, w_dec, b_att, wout_p, bout_p,
                  *, n_layers, hidden, output_size, use_attention):
    """y: (B,T,I), enc: (B,S,H), h0/c0: (L,B,H). Returns (logits, (hT, cT))."""
    B, T, I = y.shape
    S = enc.shape[1]
    H = hidden
    L = n_layers
    LR = wih_rest.shape[0]
    OP = wout_p.shape[1]

    # Batch tile: up to 8 batch rows share one in-kernel recurrence so the
    # gate math and the recurrent matmul are vectorized over sublanes.
    Bt = min(B, 8)
    if (Bt * T) % 8 != 0:
        Bt = B                      # single tile -> block equals full extent
    Bp = ((B + Bt - 1) // Bt) * Bt
    pad = Bp - B

    # Tiny one-off layout shuffles so each grid step owns a (Bt, L, H) block.
    h0_b = jnp.transpose(h0, (1, 0, 2))          # (B, L, H)
    c0_b = jnp.transpose(c0, (1, 0, 2))
    if pad:
        y = jnp.pad(y, ((0, pad), (0, 0), (0, 0)))
        enc = jnp.pad(enc, ((0, pad), (0, 0), (0, 0)))
        h0_b = jnp.pad(h0_b, ((0, pad), (0, 0), (0, 0)))
        c0_b = jnp.pad(c0_b, ((0, pad), (0, 0), (0, 0)))
    y_flat = y.reshape(Bp * T, I)                # batch-major rows (b*T + t)

    kernel = functools.partial(_fused_decoder_kernel, hidden=H, seq_len=T,
                               n_layers=L, batch_tile=Bt,
                               use_attention=use_attention)
    logits_p, hT_b, cT_b = pl.pallas_call(
        kernel,
        out_shape=(jax.ShapeDtypeStruct((Bp * T, OP), jnp.float32),
                   jax.ShapeDtypeStruct((Bp, L, H), jnp.float32),
                   jax.ShapeDtypeStruct((Bp, L, H), jnp.float32)),
        grid_spec=pltpu.PrefetchScalarGridSpec(
            num_scalar_prefetch=0,
            grid=(Bp // Bt,),
            in_specs=[
                pl.BlockSpec((Bt * T, I), lambda b: (b, 0)),         # y (flat)
                pl.BlockSpec((Bt, S, H), lambda b: (b, 0, 0)),       # encoder outs
                pl.BlockSpec((Bt, L, H), lambda b: (b, 0, 0)),       # h0
                pl.BlockSpec((Bt, L, H), lambda b: (b, 0, 0)),       # c0
                pl.BlockSpec((I, 4 * H), lambda b: (0, 0)),          # W_ih layer 0
                pl.BlockSpec((LR, H, 4 * H), lambda b: (0, 0, 0)),   # W_ih layers 1+
                pl.BlockSpec((L, H, 4 * H), lambda b: (0, 0, 0)),    # W_hh all
                pl.BlockSpec((L, 4 * H), lambda b: (0, 0)),          # biases
                pl.BlockSpec((H, H), lambda b: (0, 0)),              # attn W (mix)
                pl.BlockSpec((H, H), lambda b: (0, 0)),              # attn W (dec)
                pl.BlockSpec((1, H), lambda b: (0, 0)),              # attn bias
                pl.BlockSpec((H, OP), lambda b: (0, 0)),             # out W (padded)
                pl.BlockSpec((1, OP), lambda b: (0, 0)),             # out b (padded)
            ],
            out_specs=(
                pl.BlockSpec((Bt * T, OP), lambda b: (b, 0)),        # logits
                pl.BlockSpec((Bt, L, H), lambda b: (b, 0, 0)),       # hT
                pl.BlockSpec((Bt, L, H), lambda b: (b, 0, 0)),       # cT
            ),
            scratch_shapes=[pltpu.VMEM((Bt, T, H), jnp.float32)],    # layer outs
        ),
        compiler_params=pltpu.CompilerParams(
            dimension_semantics=("parallel",)),   # batch tiles sharded (v7x)
    )(y_flat, enc, h0_b, c0_b, wih0, wih_rest, whh_all, b_all,
      w_mix, w_dec, b_att, wout_p, bout_p)

    logits = logits_p[:B * T, :output_size]
    decoder_hidden = (jnp.transpose(hT_b[:B], (1, 0, 2)),
                      jnp.transpose(cT_b[:B], (1, 0, 2)))
    return logits, decoder_hidden


# ----------------------------------------------------------------------------
# Module wrapper: parameter setup in kernel-friendly layout (done once).
# ----------------------------------------------------------------------------
class LSTMInstructionDecoderPallas:
    def __init__(self, output_size, max_len, input_size, hidden_size, n_layers,
                 input_dropout_p=0.0, dropout_p=0.0, bidirectional=True,
                 use_attention=True, key=jax.random.PRNGKey(42)):
        self.max_len = max_len
        self.output_size = output_size
        self.input_size = input_size
        self.n_layers = n_layers
        self.bidirectional_encoder = bidirectional
        self.hidden_size = hidden_size * 2 if bidirectional else hidden_size
        self.use_attention = use_attention
        # TODO(synk): input_dropout / inter-layer LSTM dropout omitted
        # (p=0 and eval-mode semantics -> identity).

        H = self.hidden_size
        keys = jax.random.split(key, 4 * n_layers + 4)
        k_lstm = 1.0 / jnp.sqrt(H)

        def u(k, shape, scale):
            return jax.random.uniform(k, shape, jnp.float32, -scale, scale)

        self.lstm_params = []
        for l in range(n_layers):
            in_dim = input_size if l == 0 else H
            w_ih = u(keys[4 * l + 0], (4 * H, in_dim), k_lstm)
            w_hh = u(keys[4 * l + 1], (4 * H, H), k_lstm)
            b_ih = u(keys[4 * l + 2], (4 * H,), k_lstm)
            b_hh = u(keys[4 * l + 3], (4 * H,), k_lstm)
            self.lstm_params.append((w_ih, w_hh, b_ih, b_hh))

        k_att = 1.0 / jnp.sqrt(2 * H)
        self.attn_w = u(keys[-4], (H, 2 * H), k_att)
        self.attn_b = u(keys[-3], (H,), k_att)

        k_out = 1.0 / jnp.sqrt(H)
        self.out_w = u(keys[-2], (output_size, H), k_out)
        self.out_b = u(keys[-1], (output_size,), k_out)

        # --- kernel-layout parameters (prepared once) ---
        self._wih0 = jnp.transpose(self.lstm_params[0][0])          # (I, 4H)
        rest = [jnp.transpose(self.lstm_params[l][0]) for l in range(1, n_layers)]
        self._wih_rest = (jnp.stack(rest, axis=0) if rest
                          else jnp.zeros((1, H, 4 * H), jnp.float32))  # dummy
        self._whh_all = jnp.stack(
            [jnp.transpose(p[1]) for p in self.lstm_params], axis=0)   # (L, H, 4H)
        self._b_all = jnp.stack(
            [p[2] + p[3] for p in self.lstm_params], axis=0)           # (L, 4H)

        # TODO(synk): DecoderAttention definition not in the source file;
        # assumes Linear(2H->H) over cat(mix, dec) -- verify concat order.
        self._w_mix = jnp.transpose(self.attn_w[:, :H])                # (H, H)
        self._w_dec = jnp.transpose(self.attn_w[:, H:])                # (H, H)
        self._b_att = self.attn_b.reshape(1, H)

        O = output_size
        OP = ((O + 127) // 128) * 128                                  # lane-dense
        wout_t = jnp.transpose(self.out_w)                             # (H, O)
        self._wout_p = jnp.pad(wout_t, ((0, 0), (0, OP - O)))
        self._bout_p = jnp.pad(self.out_b.reshape(1, O), ((0, 0), (0, OP - O)))

        self._forward = jax.jit(functools.partial(
            _forward_impl, n_layers=n_layers, hidden=H,
            output_size=output_size, use_attention=use_attention))

    def _cat_directions(self, h):
        # (#dirs * #layers, B, hid) -> (#layers, B, #dirs * hid)
        if self.bidirectional_encoder:
            h = jnp.concatenate([h[0::2], h[1::2]], axis=2)
        return h

    def _init_state(self, encoder_hidden):
        if encoder_hidden is None:
            return None
        if isinstance(encoder_hidden, tuple):
            return tuple(self._cat_directions(h) for h in encoder_hidden)
        return self._cat_directions(encoder_hidden)

    def __call__(self, y, encoder_outs, encoder_hidden):
        h0, c0 = self._init_state(encoder_hidden)   # each (n_layers, B, H)
        return self._forward(y, encoder_outs, h0, c0,
                             self._wih0, self._wih_rest, self._whh_all,
                             self._b_all, self._w_mix, self._w_dec, self._b_att,
                             self._wout_p, self._bout_p)


# ----------------------------------------------------------------------------
if __name__ == "__main__":
    output_size = 10
    max_len = 8
    input_size = 32
    hidden_size = 16        # encoder hidden per direction; decoder uses 2x = 32
    n_layers = 2
    B, T, S = 2, 8, 8

    model = LSTMInstructionDecoderPallas(
        output_size, max_len, input_size, hidden_size, n_layers,
        bidirectional=True, use_attention=True,
        key=jax.random.PRNGKey(42))
    H = model.hidden_size   # 32

    k1, k2, k3, k4 = jax.random.split(jax.random.PRNGKey(0), 4)
    y = jax.random.normal(k1, (B, T, input_size), jnp.float32)
    encoder_outs = jax.random.normal(k2, (B, S, H), jnp.float32)
    enc_h = jax.random.normal(k3, (2 * n_layers, B, hidden_size), jnp.float32)
    enc_c = jax.random.normal(k4, (2 * n_layers, B, hidden_size), jnp.float32)

    logits, hidden = model(y, encoder_outs, (enc_h, enc_c))
    jax.block_until_ready(logits)
    jax.block_until_ready(hidden)

    assert logits.shape == (B * T, output_size)
    assert hidden[0].shape == (n_layers, B, H)
    assert hidden[1].shape == (n_layers, B, H)
    print("KERNEL_OK")
</pallas_src>

<mosaic_0001>
module attributes {stable_mosaic.version = 11 : i64} {
  func.func @_fused_decoder_kernel(%arg0: i32, %arg1: memref<16x32xf32, #tpu.memory_space<vmem>>, %arg2: memref<2x8x32xf32, #tpu.memory_space<vmem>>, %arg3: memref<2x2x32xf32, #tpu.memory_space<vmem>>, %arg4: memref<2x2x32xf32, #tpu.memory_space<vmem>>, %arg5: memref<32x128xf32, #tpu.memory_space<vmem>>, %arg6: memref<1x32x128xf32, #tpu.memory_space<vmem>>, %arg7: memref<2x32x128xf32, #tpu.memory_space<vmem>>, %arg8: memref<2x128xf32, #tpu.memory_space<vmem>>, %arg9: memref<32x32xf32, #tpu.memory_space<vmem>>, %arg10: memref<32x32xf32, #tpu.memory_space<vmem>>, %arg11: memref<1x32xf32, #tpu.memory_space<vmem>>, %arg12: memref<32x128xf32, #tpu.memory_space<vmem>>, %arg13: memref<1x128xf32, #tpu.memory_space<vmem>>, %arg14: memref<16x128xf32, #tpu.memory_space<vmem>>, %arg15: memref<2x2x32xf32, #tpu.memory_space<vmem>>, %arg16: memref<2x2x32xf32, #tpu.memory_space<vmem>>, %arg17: memref<2x8x32xf32, #tpu.memory_space<vmem>>) attributes {dimension_semantics = [#tpu.dimension_semantics<parallel>], iteration_bounds = array<i64: 1>, scalar_prefetch = 0 : i64, scratch_operands = 1 : i64, tpu.core_type = #tpu.core_type<tc>, window_params = [{transform_indices = @transform_0, window_bounds = array<i64: 16, 32>}, {transform_indices = @transform_1, window_bounds = array<i64: 2, 8, 32>}, {transform_indices = @transform_2, window_bounds = array<i64: 2, 2, 32>}, {transform_indices = @transform_3, window_bounds = array<i64: 2, 2, 32>}, {pipeline_mode = #tpu.pipeline_mode<synchronous>, transform_indices = @transform_4, window_bounds = array<i64: 32, 128>}, {pipeline_mode = #tpu.pipeline_mode<synchronous>, transform_indices = @transform_5, window_bounds = array<i64: 1, 32, 128>}, {pipeline_mode = #tpu.pipeline_mode<synchronous>, transform_indices = @transform_6, window_bounds = array<i64: 2, 32, 128>}, {pipeline_mode = #tpu.pipeline_mode<synchronous>, transform_indices = @transform_7, window_bounds = array<i64: 2, 128>}, {pipeline_mode = #tpu.pipeline_mode<synchronous>, transform_indices = @transform_8, window_bounds = array<i64: 32, 32>}, {pipeline_mode = #tpu.pipeline_mode<synchronous>, transform_indices = @transform_9, window_bounds = array<i64: 32, 32>}, {pipeline_mode = #tpu.pipeline_mode<synchronous>, transform_indices = @transform_10, window_bounds = array<i64: 1, 32>}, {pipeline_mode = #tpu.pipeline_mode<synchronous>, transform_indices = @transform_11, window_bounds = array<i64: 32, 128>}, {pipeline_mode = #tpu.pipeline_mode<synchronous>, transform_indices = @transform_12, window_bounds = array<i64: 1, 128>}, {transform_indices = @transform_13, window_bounds = array<i64: 16, 128>}, {transform_indices = @transform_14, window_bounds = array<i64: 2, 2, 32>}, {transform_indices = @transform_15, window_bounds = array<i64: 2, 2, 32>}]} {
    %c0 = arith.constant 0 : index
    %c0_0 = arith.constant 0 : index
    %c0_1 = arith.constant 0 : index
    %0 = vector.load %arg3[%c0, %c0_0, %c0_1] : memref<2x2x32xf32, #tpu.memory_space<vmem>>, vector<2x2x32xf32>
    %c0_2 = arith.constant 0 : index
    %c0_3 = arith.constant 0 : index
    %c0_4 = arith.constant 0 : index
    %1 = vector.load %arg4[%c0_2, %c0_3, %c0_4] : memref<2x2x32xf32, #tpu.memory_space<vmem>>, vector<2x2x32xf32>
    %c0_5 = arith.constant 0 : index
    %c0_6 = arith.constant 0 : index
    %2 = vector.load %arg1[%c0_5, %c0_6] : memref<16x32xf32, #tpu.memory_space<vmem>>, vector<16x32xf32>
    %c0_7 = arith.constant 0 : index
    %c0_8 = arith.constant 0 : index
    %3 = vector.load %arg5[%c0_7, %c0_8] : memref<32x128xf32, #tpu.memory_space<vmem>>, vector<32x128xf32>
    %c0_9 = arith.constant 0 : index
    %c0_10 = arith.constant 0 : index
    %4 = vector.load %arg8[%c0_9, %c0_10] : memref<2x128xf32, #tpu.memory_space<vmem>>, vector<1x128xf32>
    %cst = arith.constant dense<0.000000e+00> : vector<16x128xf32>
    %5 = tpu.matmul %2, %3, %cst {dimension_numbers = #tpu.dot_dimension_numbers<[1], [0], [0], [1], [0, 0, 1, 1], [], []>} : vector<16x32xf32>, vector<32x128xf32>, vector<16x128xf32> -> vector<16x128xf32>
    %6 = vector.broadcast %4 : vector<1x128xf32> to vector<16x128xf32>
    %7 = arith.addf %5, %6 : vector<16x128xf32>
    %8 = vector.shape_cast %7 : vector<16x128xf32> to vector<2x8x128xf32>
    %c0_11 = arith.constant 0 : index
    %c0_12 = arith.constant 0 : index
    %c0_13 = arith.constant 0 : index
    %9 = vector.load %arg7[%c0_11, %c0_12, %c0_13] : memref<2x32x128xf32, #tpu.memory_space<vmem>>, vector<1x32x128xf32>
    %10 = vector.shape_cast %9 : vector<1x32x128xf32> to vector<32x128xf32>
    %11 = vector.extract_strided_slice %0 {offsets = [0, 0, 0], sizes = [2, 1, 32], strides = [1, 1, 1]} : vector<2x2x32xf32> to vector<2x1x32xf32>
    %12 = vector.shape_cast %11 : vector<2x1x32xf32> to vector<2x32xf32>
    %13 = vector.extract_strided_slice %1 {offsets = [0, 0, 0], sizes = [2, 1, 32], strides = [1, 1, 1]} : vector<2x2x32xf32> to vector<2x1x32xf32>
    %14 = vector.shape_cast %13 : vector<2x1x32xf32> to vector<2x32xf32>
    %15 = vector.extract_strided_slice %8 {offsets = [0, 0, 0], sizes = [2, 1, 128], strides = [1, 1, 1]} : vector<2x8x128xf32> to vector<2x1x128xf32>
    %16 = vector.shape_cast %15 : vector<2x1x128xf32> to vector<2x128xf32>
    %cst_14 = arith.constant dense<0.000000e+00> : vector<2x128xf32>
    %17 = tpu.matmul %12, %10, %cst_14 {dimension_numbers = #tpu.dot_dimension_numbers<[1], [0], [0], [1], [0, 0, 1, 1], [], []>} : vector<2x32xf32>, vector<32x128xf32>, vector<2x128xf32> -> vector<2x128xf32>
    %18 = arith.addf %16, %17 : vector<2x128xf32>
    %cst_15 = arith.constant 0.000000e+00 : f32
    %19 = vector.broadcast %cst_15 : f32 to vector<2x128xf32>
    %20 = arith.subf %19, %18 : vector<2x128xf32>
    %21 = math.exp %20 : vector<2x128xf32>
    %cst_16 = arith.constant 1.000000e+00 : f32
    %22 = vector.broadcast %cst_16 : f32 to vector<2x128xf32>
    %23 = arith.addf %22, %21 : vector<2x128xf32>
    %24 = tpu.reciprocal %23 {approx = true} : vector<2x128xf32> -> vector<2x128xf32>
    %25 = vector.extract_strided_slice %24 {offsets = [0, 0], sizes = [2, 32], strides = [1, 1]} : vector<2x128xf32> to vector<2x32xf32>
    %26 = vector.extract_strided_slice %24 {offsets = [0, 32], sizes = [2, 32], strides = [1, 1]} : vector<2x128xf32> to vector<2x32xf32>
    %27 = vector.extract_strided_slice %24 {offsets = [0, 96], sizes = [2, 32], strides = [1, 1]} : vector<2x128xf32> to vector<2x32xf32>
    %28 = vector.extract_strided_slice %18 {offsets = [0, 64], sizes = [2, 32], strides = [1, 1]} : vector<2x128xf32> to vector<2x32xf32>
    %29 = math.tanh %28 : vector<2x32xf32>
    %30 = arith.mulf %26, %14 : vector<2x32xf32>
    %31 = arith.mulf %25, %29 : vector<2x32xf32>
    %32 = arith.addf %30, %31 : vector<2x32xf32>
    %33 = math.tanh %32 : vector<2x32xf32>
    %34 = arith.mulf %27, %33 : vector<2x32xf32>
    %c0_17 = arith.constant 0 : index
    %c0_18 = arith.constant 0 : index
    %c0_19 = arith.constant 0 : index
    %35 = vector.load %arg17[%c0_17, %c0_18, %c0_19] : memref<2x8x32xf32, #tpu.memory_space<vmem>>, vector<2x1x32xf32>
    %36 = vector.shape_cast %35 : vector<2x1x32xf32> to vector<2x32xf32>
    %37 = vector.shape_cast %34 : vector<2x32xf32> to vector<2x1x32xf32>
    tpu.vector_store %arg17[%c0_17, %c0_18, %c0_19], %37 {strides = array<i32>} : memref<2x8x32xf32, #tpu.memory_space<vmem>>, vector<2x1x32xf32>,
    %38 = vector.extract_strided_slice %8 {offsets = [0, 1, 0], sizes = [2, 1, 128], strides = [1, 1, 1]} : vector<2x8x128xf32> to vector<2x1x128xf32>
    %39 = vector.shape_cast %38 : vector<2x1x128xf32> to vector<2x128xf32>
    %cst_20 = arith.constant dense<0.000000e+00> : vector<2x128xf32>
    %40 = tpu.matmul %34, %10, %cst_20 {dimension_numbers = #tpu.dot_dimension_numbers<[1], [0], [0], [1], [0, 0, 1, 1], [], []>} : vector<2x32xf32>, vector<32x128xf32>, vector<2x128xf32> -> vector<2x128xf32>
    %41 = arith.addf %39, %40 : vector<2x128xf32>
    %cst_21 = arith.constant 0.000000e+00 : f32
    %42 = vector.broadcast %cst_21 : f32 to vector<2x128xf32>
    %43 = arith.subf %42, %41 : vector<2x128xf32>
    %44 = math.exp %43 : vector<2x128xf32>
    %cst_22 = arith.constant 1.000000e+00 : f32
    %45 = vector.broadcast %cst_22 : f32 to vector<2x128xf32>
    %46 = arith.addf %45, %44 : vector<2x128xf32>
    %47 = tpu.reciprocal %46 {approx = true} : vector<2x128xf32> -> vector<2x128xf32>
    %48 = vector.extract_strided_slice %47 {offsets = [0, 0], sizes = [2, 32], strides = [1, 1]} : vector<2x128xf32> to vector<2x32xf32>
    %49 = vector.extract_strided_slice %47 {offsets = [0, 32], sizes = [2, 32], strides = [1, 1]} : vector<2x128xf32> to vector<2x32xf32>
    %50 = vector.extract_strided_slice %47 {offsets = [0, 96], sizes = [2, 32], strides = [1, 1]} : vector<2x128xf32> to vector<2x32xf32>
    %51 = vector.extract_strided_slice %41 {offsets = [0, 64], sizes = [2, 32], strides = [1, 1]} : vector<2x128xf32> to vector<2x32xf32>
    %52 = math.tanh %51 : vector<2x32xf32>
    %53 = arith.mulf %49, %32 : vector<2x32xf32>
    %54 = arith.mulf %48, %52 : vector<2x32xf32>
    %55 = arith.addf %53, %54 : vector<2x32xf32>
    %56 = math.tanh %55 : vector<2x32xf32>
    %57 = arith.mulf %50, %56 : vector<2x32xf32>
    %c0_23 = arith.constant 0 : index
    %c1 = arith.constant 1 : index
    %c0_24 = arith.constant 0 : index
    %58 = vector.load %arg17[%c0_23, %c1, %c0_24] : memref<2x8x32xf32, #tpu.memory_space<vmem>>, vector<2x1x32xf32>
    %59 = vector.shape_cast %58 : vector<2x1x32xf32> to vector<2x32xf32>
    %60 = vector.shape_cast %57 : vector<2x32xf32> to vector<2x1x32xf32>
    tpu.vector_store %arg17[%c0_23, %c1, %c0_24], %60 {strides = array<i32>} : memref<2x8x32xf32, #tpu.memory_space<vmem>>, vector<2x1x32xf32>,
    %61 = vector.extract_strided_slice %8 {offsets = [0, 2, 0], sizes = [2, 1, 128], strides = [1, 1, 1]} : vector<2x8x128xf32> to vector<2x1x128xf32>
    %62 = vector.shape_cast %61 : vector<2x1x128xf32> to vector<2x128xf32>
    %cst_25 = arith.constant dense<0.000000e+00> : vector<2x128xf32>
    %63 = tpu.matmul %57, %10, %cst_25 {dimension_numbers = #tpu.dot_dimension_numbers<[1], [0], [0], [1], [0, 0, 1, 1], [], []>} : vector<2x32xf32>, vector<32x128xf32>, vector<2x128xf32> -> vector<2x128xf32>
    %64 = arith.addf %62, %63 : vector<2x128xf32>
    %cst_26 = arith.constant 0.000000e+00 : f32
    %65 = vector.broadcast %cst_26 : f32 to vector<2x128xf32>
    %66 = arith.subf %65, %64 : vector<2x128xf32>
    %67 = math.exp %66 : vector<2x128xf32>
    %cst_27 = arith.constant 1.000000e+00 : f32
    %68 = vector.broadcast %cst_27 : f32 to vector<2x128xf32>
    %69 = arith.addf %68, %67 : vector<2x128xf32>
    %70 = tpu.reciprocal %69 {approx = true} : vector<2x128xf32> -> vector<2x128xf32>
    %71 = vector.extract_strided_slice %70 {offsets = [0, 0], sizes = [2, 32], strides = [1, 1]} : vector<2x128xf32> to vector<2x32xf32>
    %72 = vector.extract_strided_slice %70 {offsets = [0, 32], sizes = [2, 32], strides = [1, 1]} : vector<2x128xf32> to vector<2x32xf32>
    %73 = vector.extract_strided_slice %70 {offsets = [0, 96], sizes = [2, 32], strides = [1, 1]} : vector<2x128xf32> to vector<2x32xf32>
    %74 = vector.extract_strided_slice %64 {offsets = [0, 64], sizes = [2, 32], strides = [1, 1]} : vector<2x128xf32> to vector<2x32xf32>
    %75 = math.tanh %74 : vector<2x32xf32>
    %76 = arith.mulf %72, %55 : vector<2x32xf32>
    %77 = arith.mulf %71, %75 : vector<2x32xf32>
    %78 = arith.addf %76, %77 : vector<2x32xf32>
    %79 = math.tanh %78 : vector<2x32xf32>
    %80 = arith.mulf %73, %79 : vector<2x32xf32>
    %c0_28 = arith.constant 0 : index
    %c2 = arith.constant 2 : index
    %c0_29 = arith.constant 0 : index
    %81 = vector.load %arg17[%c0_28, %c2, %c0_29] : memref<2x8x32xf32, #tpu.memory_space<vmem>>, vector<2x1x32xf32>
    %82 = vector.shape_cast %81 : vector<2x1x32xf32> to vector<2x32xf32>
    %83 = vector.shape_cast %80 : vector<2x32xf32> to vector<2x1x32xf32>
    tpu.vector_store %arg17[%c0_28, %c2, %c0_29], %83 {strides = array<i32>} : memref<2x8x32xf32, #tpu.memory_space<vmem>>, vector<2x1x32xf32>,
    %84 = vector.extract_strided_slice %8 {offsets = [0, 3, 0], sizes = [2, 1, 128], strides = [1, 1, 1]} : vector<2x8x128xf32> to vector<2x1x128xf32>
    %85 = vector.shape_cast %84 : vector<2x1x128xf32> to vector<2x128xf32>
    %cst_30 = arith.constant dense<0.000000e+00> : vector<2x128xf32>
    %86 = tpu.matmul %80, %10, %cst_30 {dimension_numbers = #tpu.dot_dimension_numbers<[1], [0], [0], [1], [0, 0, 1, 1], [], []>} : vector<2x32xf32>, vector<32x128xf32>, vector<2x128xf32> -> vector<2x128xf32>
    %87 = arith.addf %85, %86 : vector<2x128xf32>
    %cst_31 = arith.constant 0.000000e+00 : f32
    %88 = vector.broadcast %cst_31 : f32 to vector<2x128xf32>
    %89 = arith.subf %88, %87 : vector<2x128xf32>
    %90 = math.exp %89 : vector<2x128xf32>
    %cst_32 = arith.constant 1.000000e+00 : f32
    %91 = vector.broadcast %cst_32 : f32 to vector<2x128xf32>
    %92 = arith.addf %91, %90 : vector<2x128xf32>
    %93 = tpu.reciprocal %92 {approx = true} : vector<2x128xf32> -> vector<2x128xf32>
    %94 = vector.extract_strided_slice %93 {offsets = [0, 0], sizes = [2, 32], strides = [1, 1]} : vector<2x128xf32> to vector<2x32xf32>
    %95 = vector.extract_strided_slice %93 {offsets = [0, 32], sizes = [2, 32], strides = [1, 1]} : vector<2x128xf32> to vector<2x32xf32>
    %96 = vector.extract_strided_slice %93 {offsets = [0, 96], sizes = [2, 32], strides = [1, 1]} : vector<2x128xf32> to vector<2x32xf32>
    %97 = vector.extract_strided_slice %87 {offsets = [0, 64], sizes = [2, 32], strides = [1, 1]} : vector<2x128xf32> to vector<2x32xf32>
    %98 = math.tanh %97 : vector<2x32xf32>
    %99 = arith.mulf %95, %78 : vector<2x32xf32>
    %100 = arith.mulf %94, %98 : vector<2x32xf32>
    %101 = arith.addf %99, %100 : vector<2x32xf32>
    %102 = math.tanh %101 : vector<2x32xf32>
    %103 = arith.mulf %96, %102 : vector<2x32xf32>
    %c0_33 = arith.constant 0 : index
    %c3 = arith.constant 3 : index
    %c0_34 = arith.constant 0 : index
    %104 = vector.load %arg17[%c0_33, %c3, %c0_34] : memref<2x8x32xf32, #tpu.memory_space<vmem>>, vector<2x1x32xf32>
    %105 = vector.shape_cast %104 : vector<2x1x32xf32> to vector<2x32xf32>
    %106 = vector.shape_cast %103 : vector<2x32xf32> to vector<2x1x32xf32>
    tpu.vector_store %arg17[%c0_33, %c3, %c0_34], %106 {strides = array<i32>} : memref<2x8x32xf32, #tpu.memory_space<vmem>>, vector<2x1x32xf32>,
    %107 = vector.extract_strided_slice %8 {offsets = [0, 4, 0], sizes = [2, 1, 128], strides = [1, 1, 1]} : vector<2x8x128xf32> to vector<2x1x128xf32>
    %108 = vector.shape_cast %107 : vector<2x1x128xf32> to vector<2x128xf32>
    %cst_35 = arith.constant dense<0.000000e+00> : vector<2x128xf32>
    %109 = tpu.matmul %103, %10, %cst_35 {dimension_numbers = #tpu.dot_dimension_numbers<[1], [0], [0], [1], [0, 0, 1, 1], [], []>} : vector<2x32xf32>, vector<32x128xf32>, vector<2x128xf32> -> vector<2x128xf32>
    %110 = arith.addf %108, %109 : vector<2x128xf32>
    %cst_36 = arith.constant 0.000000e+00 : f32
    %111 = vector.broadcast %cst_36 : f32 to vector<2x128xf32>
    %112 = arith.subf %111, %110 : vector<2x128xf32>
    %113 = math.exp %112 : vector<2x128xf32>
    %cst_37 = arith.constant 1.000000e+00 : f32
    %114 = vector.broadcast %cst_37 : f32 to vector<2x128xf32>
    %115 = arith.addf %114, %113 : vector<2x128xf32>
    %116 = tpu.reciprocal %115 {approx = true} : vector<2x128xf32> -> vector<2x128xf32>
    %117 = vector.extract_strided_slice %116 {offsets = [0, 0], sizes = [2, 32], strides = [1, 1]} : vector<2x128xf32> to vector<2x32xf32>
    %118 = vector.extract_strided_slice %116 {offsets = [0, 32], sizes = [2, 32], strides = [1, 1]} : vector<2x128xf32> to vector<2x32xf32>
    %119 = vector.extract_strided_slice %116 {offsets = [0, 96], sizes = [2, 32], strides = [1, 1]} : vector<2x128xf32> to vector<2x32xf32>
    %120 = vector.extract_strided_slice %110 {offsets = [0, 64], sizes = [2, 32], strides = [1, 1]} : vector<2x128xf32> to vector<2x32xf32>
    %121 = math.tanh %120 : vector<2x32xf32>
    %122 = arith.mulf %118, %101 : vector<2x32xf32>
    %123 = arith.mulf %117, %121 : vector<2x32xf32>
    %124 = arith.addf %122, %123 : vector<2x32xf32>
    %125 = math.tanh %124 : vector<2x32xf32>
    %126 = arith.mulf %119, %125 : vector<2x32xf32>
    %c0_38 = arith.constant 0 : index
    %c4 = arith.constant 4 : index
    %c0_39 = arith.constant 0 : index
    %127 = vector.load %arg17[%c0_38, %c4, %c0_39] : memref<2x8x32xf32, #tpu.memory_space<vmem>>, vector<2x1x32xf32>
    %128 = vector.shape_cast %127 : vector<2x1x32xf32> to vector<2x32xf32>
    %129 = vector.shape_cast %126 : vector<2x32xf32> to vector<2x1x32xf32>
    tpu.vector_store %arg17[%c0_38, %c4, %c0_39], %129 {strides = array<i32>} : memref<2x8x32xf32, #tpu.memory_space<vmem>>, vector<2x1x32xf32>,
    %130 = vector.extract_strided_slice %8 {offsets = [0, 5, 0], sizes = [2, 1, 128], strides = [1, 1, 1]} : vector<2x8x128xf32> to vector<2x1x128xf32>
    %131 = vector.shape_cast %130 : vector<2x1x128xf32> to vector<2x128xf32>
    %cst_40 = arith.constant dense<0.000000e+00> : vector<2x128xf32>
    %132 = tpu.matmul %126, %10, %cst_40 {dimension_numbers = #tpu.dot_dimension_numbers<[1], [0], [0], [1], [0, 0, 1, 1], [], []>} : vector<2x32xf32>, vector<32x128xf32>, vector<2x128xf32> -> vector<2x128xf32>
    %133 = arith.addf %131, %132 : vector<2x128xf32>
    %cst_41 = arith.constant 0.000000e+00 : f32
    %134 = vector.broadcast %cst_41 : f32 to vector<2x128xf32>
    %135 = arith.subf %134, %133 : vector<2x128xf32>
    %136 = math.exp %135 : vector<2x128xf32>
    %cst_42 = arith.constant 1.000000e+00 : f32
    %137 = vector.broadcast %cst_42 : f32 to vector<2x128xf32>
    %138 = arith.addf %137, %136 : vector<2x128xf32>
    %139 = tpu.reciprocal %138 {approx = true} : vector<2x128xf32> -> vector<2x128xf32>
    %140 = vector.extract_strided_slice %139 {offsets = [0, 0], sizes = [2, 32], strides = [1, 1]} : vector<2x128xf32> to vector<2x32xf32>
    %141 = vector.extract_strided_slice %139 {offsets = [0, 32], sizes = [2, 32], strides = [1, 1]} : vector<2x128xf32> to vector<2x32xf32>
    %142 = vector.extract_strided_slice %139 {offsets = [0, 96], sizes = [2, 32], strides = [1, 1]} : vector<2x128xf32> to vector<2x32xf32>
    %143 = vector.extract_strided_slice %133 {offsets = [0, 64], sizes = [2, 32], strides = [1, 1]} : vector<2x128xf32> to vector<2x32xf32>
    %144 = math.tanh %143 : vector<2x32xf32>
    %145 = arith.mulf %141, %124 : vector<2x32xf32>
    %146 = arith.mulf %140, %144 : vector<2x32xf32>
    %147 = arith.addf %145, %146 : vector<2x32xf32>
    %148 = math.tanh %147 : vector<2x32xf32>
    %149 = arith.mulf %142, %148 : vector<2x32xf32>
    %c0_43 = arith.constant 0 : index
    %c5 = arith.constant 5 : index
    %c0_44 = arith.constant 0 : index
    %150 = vector.load %arg17[%c0_43, %c5, %c0_44] : memref<2x8x32xf32, #tpu.memory_space<vmem>>, vector<2x1x32xf32>
    %151 = vector.shape_cast %150 : vector<2x1x32xf32> to vector<2x32xf32>
    %152 = vector.shape_cast %149 : vector<2x32xf32> to vector<2x1x32xf32>
    tpu.vector_store %arg17[%c0_43, %c5, %c0_44], %152 {strides = array<i32>} : memref<2x8x32xf32, #tpu.memory_space<vmem>>, vector<2x1x32xf32>,
    %153 = vector.extract_strided_slice %8 {offsets = [0, 6, 0], sizes = [2, 1, 128], strides = [1, 1, 1]} : vector<2x8x128xf32> to vector<2x1x128xf32>
    %154 = vector.shape_cast %153 : vector<2x1x128xf32> to vector<2x128xf32>
    %cst_45 = arith.constant dense<0.000000e+00> : vector<2x128xf32>
    %155 = tpu.matmul %149, %10, %cst_45 {dimension_numbers = #tpu.dot_dimension_numbers<[1], [0], [0], [1], [0, 0, 1, 1], [], []>} : vector<2x32xf32>, vector<32x128xf32>, vector<2x128xf32> -> vector<2x128xf32>
    %156 = arith.addf %154, %155 : vector<2x128xf32>
    %cst_46 = arith.constant 0.000000e+00 : f32
    %157 = vector.broadcast %cst_46 : f32 to vector<2x128xf32>
    %158 = arith.subf %157, %156 : vector<2x128xf32>
    %159 = math.exp %158 : vector<2x128xf32>
    %cst_47 = arith.constant 1.000000e+00 : f32
    %160 = vector.broadcast %cst_47 : f32 to vector<2x128xf32>
    %161 = arith.addf %160, %159 : vector<2x128xf32>
    %162 = tpu.reciprocal %161 {approx = true} : vector<2x128xf32> -> vector<2x128xf32>
    %163 = vector.extract_strided_slice %162 {offsets = [0, 0], sizes = [2, 32], strides = [1, 1]} : vector<2x128xf32> to vector<2x32xf32>
    %164 = vector.extract_strided_slice %162 {offsets = [0, 32], sizes = [2, 32], strides = [1, 1]} : vector<2x128xf32> to vector<2x32xf32>
    %165 = vector.extract_strided_slice %162 {offsets = [0, 96], sizes = [2, 32], strides = [1, 1]} : vector<2x128xf32> to vector<2x32xf32>
    %166 = vector.extract_strided_slice %156 {offsets = [0, 64], sizes = [2, 32], strides = [1, 1]} : vector<2x128xf32> to vector<2x32xf32>
    %167 = math.tanh %166 : vector<2x32xf32>
    %168 = arith.mulf %164, %147 : vector<2x32xf32>
    %169 = arith.mulf %163, %167 : vector<2x32xf32>
    %170 = arith.addf %168, %169 : vector<2x32xf32>
    %171 = math.tanh %170 : vector<2x32xf32>
    %172 = arith.mulf %165, %171 : vector<2x32xf32>
    %c0_48 = arith.constant 0 : index
    %c6 = arith.constant 6 : index
    %c0_49 = arith.constant 0 : index
    %173 = vector.load %arg17[%c0_48, %c6, %c0_49] : memref<2x8x32xf32, #tpu.memory_space<vmem>>, vector<2x1x32xf32>
    %174 = vector.shape_cast %173 : vector<2x1x32xf32> to vector<2x32xf32>
    %175 = vector.shape_cast %172 : vector<2x32xf32> to vector<2x1x32xf32>
    tpu.vector_store %arg17[%c0_48, %c6, %c0_49], %175 {strides = array<i32>} : memref<2x8x32xf32, #tpu.memory_space<vmem>>, vector<2x1x32xf32>,
    %176 = vector.extract_strided_slice %8 {offsets = [0, 7, 0], sizes = [2, 1, 128], strides = [1, 1, 1]} : vector<2x8x128xf32> to vector<2x1x128xf32>
    %177 = vector.shape_cast %176 : vector<2x1x128xf32> to vector<2x128xf32>
    %cst_50 = arith.constant dense<0.000000e+00> : vector<2x128xf32>
    %178 = tpu.matmul %172, %10, %cst_50 {dimension_numbers = #tpu.dot_dimension_numbers<[1], [0], [0], [1], [0, 0, 1, 1], [], []>} : vector<2x32xf32>, vector<32x128xf32>, vector<2x128xf32> -> vector<2x128xf32>
    %179 = arith.addf %177, %178 : vector<2x128xf32>
    %cst_51 = arith.constant 0.000000e+00 : f32
    %180 = vector.broadcast %cst_51 : f32 to vector<2x128xf32>
    %181 = arith.subf %180, %179 : vector<2x128xf32>
    %182 = math.exp %181 : vector<2x128xf32>
    %cst_52 = arith.constant 1.000000e+00 : f32
    %183 = vector.broadcast %cst_52 : f32 to vector<2x128xf32>
    %184 = arith.addf %183, %182 : vector<2x128xf32>
    %185 = tpu.reciprocal %184 {approx = true} : vector<2x128xf32> -> vector<2x128xf32>
    %186 = vector.extract_strided_slice %185 {offsets = [0, 0], sizes = [2, 32], strides = [1, 1]} : vector<2x128xf32> to vector<2x32xf32>
    %187 = vector.extract_strided_slice %185 {offsets = [0, 32], sizes = [2, 32], strides = [1, 1]} : vector<2x128xf32> to vector<2x32xf32>
    %188 = vector.extract_strided_slice %185 {offsets = [0, 96], sizes = [2, 32], strides = [1, 1]} : vector<2x128xf32> to vector<2x32xf32>
    %189 = vector.extract_strided_slice %179 {offsets = [0, 64], sizes = [2, 32], strides = [1, 1]} : vector<2x128xf32> to vector<2x32xf32>
    %190 = math.tanh %189 : vector<2x32xf32>
    %191 = arith.mulf %187, %170 : vector<2x32xf32>
    %192 = arith.mulf %186, %190 : vector<2x32xf32>
    %193 = arith.addf %191, %192 : vector<2x32xf32>
    %194 = math.tanh %193 : vector<2x32xf32>
    %195 = arith.mulf %188, %194 : vector<2x32xf32>
    %c0_53 = arith.constant 0 : index
    %c7 = arith.constant 7 : index
    %c0_54 = arith.constant 0 : index
    %196 = vector.load %arg17[%c0_53, %c7, %c0_54] : memref<2x8x32xf32, #tpu.memory_space<vmem>>, vector<2x1x32xf32>
    %197 = vector.shape_cast %196 : vector<2x1x32xf32> to vector<2x32xf32>
    %198 = vector.shape_cast %195 : vector<2x32xf32> to vector<2x1x32xf32>
    tpu.vector_store %arg17[%c0_53, %c7, %c0_54], %198 {strides = array<i32>} : memref<2x8x32xf32, #tpu.memory_space<vmem>>, vector<2x1x32xf32>,
    %c0_55 = arith.constant 0 : index
    %c0_56 = arith.constant 0 : index
    %c0_57 = arith.constant 0 : index
    %199 = vector.load %arg15[%c0_55, %c0_56, %c0_57] : memref<2x2x32xf32, #tpu.memory_space<vmem>>, vector<2x1x32xf32>
    %200 = vector.shape_cast %199 : vector<2x1x32xf32> to vector<2x32xf32>
    %201 = vector.shape_cast %195 : vector<2x32xf32> to vector<2x1x32xf32>
    tpu.vector_store %arg15[%c0_55, %c0_56, %c0_57], %201 {strides = array<i32>} : memref<2x2x32xf32, #tpu.memory_space<vmem>>, vector<2x1x32xf32>,
    %c0_58 = arith.constant 0 : index
    %c0_59 = arith.constant 0 : index
    %c0_60 = arith.constant 0 : index
    %202 = vector.load %arg16[%c0_58, %c0_59, %c0_60] : memref<2x2x32xf32, #tpu.memory_space<vmem>>, vector<2x1x32xf32>
    %203 = vector.shape_cast %202 : vector<2x1x32xf32> to vector<2x32xf32>
    %204 = vector.shape_cast %193 : vector<2x32xf32> to vector<2x1x32xf32>
    tpu.vector_store %arg16[%c0_58, %c0_59, %c0_60], %204 {strides = array<i32>} : memref<2x2x32xf32, #tpu.memory_space<vmem>>, vector<2x1x32xf32>,
    %c0_61 = arith.constant 0 : index
    %c0_62 = arith.constant 0 : index
    %c0_63 = arith.constant 0 : index
    %205 = vector.load %arg17[%c0_61, %c0_62, %c0_63] : memref<2x8x32xf32, #tpu.memory_space<vmem>>, vector<2x8x32xf32>
    %206 = vector.shape_cast %205 : vector<2x8x32xf32> to vector<16x32xf32>
    %c0_64 = arith.constant 0 : index
    %c0_65 = arith.constant 0 : index
    %c0_66 = arith.constant 0 : index
    %207 = vector.load %arg6[%c0_64, %c0_65, %c0_66] : memref<1x32x128xf32, #tpu.memory_space<vmem>>, vector<1x32x128xf32>
    %208 = vector.shape_cast %207 : vector<1x32x128xf32> to vector<32x128xf32>
    %c1_67 = arith.constant 1 : index
    %c0_68 = arith.constant 0 : index
    %209 = vector.load %arg8[%c1_67, %c0_68] : memref<2x128xf32, #tpu.memory_space<vmem>>, vector<1x128xf32>
    %cst_69 = arith.constant dense<0.000000e+00> : vector<16x128xf32>
    %210 = tpu.matmul %206, %208, %cst_69 {dimension_numbers = #tpu.dot_dimension_numbers<[1], [0], [0], [1], [0, 0, 1, 1], [], []>} : vector<16x32xf32>, vector<32x128xf32>, vector<16x128xf32> -> vector<16x128xf32>
    %211 = vector.broadcast %209 : vector<1x128xf32> to vector<16x128xf32>
    %212 = arith.addf %210, %211 : vector<16x128xf32>
    %213 = vector.shape_cast %212 : vector<16x128xf32> to vector<2x8x128xf32>
    %c1_70 = arith.constant 1 : index
    %c0_71 = arith.constant 0 : index
    %c0_72 = arith.constant 0 : index
    %214 = vector.load %arg7[%c1_70, %c0_71, %c0_72] : memref<2x32x128xf32, #tpu.memory_space<vmem>>, vector<1x32x128xf32>
    %215 = vector.shape_cast %214 : vector<1x32x128xf32> to vector<32x128xf32>
    %216 = vector.extract_strided_slice %0 {offsets = [0, 1, 0], sizes = [2, 1, 32], strides = [1, 1, 1]} : vector<2x2x32xf32> to vector<2x1x32xf32>
    %217 = vector.shape_cast %216 : vector<2x1x32xf32> to vector<2x32xf32>
    %218 = vector.extract_strided_slice %1 {offsets = [0, 1, 0], sizes = [2, 1, 32], strides = [1, 1, 1]} : vector<2x2x32xf32> to vector<2x1x32xf32>
    %219 = vector.shape_cast %218 : vector<2x1x32xf32> to vector<2x32xf32>
    %220 = vector.extract_strided_slice %213 {offsets = [0, 0, 0], sizes = [2, 1, 128], strides = [1, 1, 1]} : vector<2x8x128xf32> to vector<2x1x128xf32>
    %221 = vector.shape_cast %220 : vector<2x1x128xf32> to vector<2x128xf32>
    %cst_73 = arith.constant dense<0.000000e+00> : vector<2x128xf32>
    %222 = tpu.matmul %217, %215, %cst_73 {dimension_numbers = #tpu.dot_dimension_numbers<[1], [0], [0], [1], [0, 0, 1, 1], [], []>} : vector<2x32xf32>, vector<32x128xf32>, vector<2x128xf32> -> vector<2x128xf32>
    %223 = arith.addf %221, %222 : vector<2x128xf32>
    %cst_74 = arith.constant 0.000000e+00 : f32
    %224 = vector.broadcast %cst_74 : f32 to vector<2x128xf32>
    %225 = arith.subf %224, %223 : vector<2x128xf32>
    %226 = math.exp %225 : vector<2x128xf32>
    %cst_75 = arith.constant 1.000000e+00 : f32
    %227 = vector.broadcast %cst_75 : f32 to vector<2x128xf32>
    %228 = arith.addf %227, %226 : vector<2x128xf32>
    %229 = tpu.reciprocal %228 {approx = true} : vector<2x128xf32> -> vector<2x128xf32>
    %230 = vector.extract_strided_slice %229 {offsets = [0, 0], sizes = [2, 32], strides = [1, 1]} : vector<2x128xf32> to vector<2x32xf32>
    %231 = vector.extract_strided_slice %229 {offsets = [0, 32], sizes = [2, 32], strides = [1, 1]} : vector<2x128xf32> to vector<2x32xf32>
    %232 = vector.extract_strided_slice %229 {offsets = [0, 96], sizes = [2, 32], strides = [1, 1]} : vector<2x128xf32> to vector<2x32xf32>
    %233 = vector.extract_strided_slice %223 {offsets = [0, 64], sizes = [2, 32], strides = [1, 1]} : vector<2x128xf32> to vector<2x32xf32>
    %234 = math.tanh %233 : vector<2x32xf32>
    %235 = arith.mulf %231, %219 : vector<2x32xf32>
    %236 = arith.mulf %230, %234 : vector<2x32xf32>
    %237 = arith.addf %235, %236 : vector<2x32xf32>
    %238 = math.tanh %237 : vector<2x32xf32>
    %239 = arith.mulf %232, %238 : vector<2x32xf32>
    %c0_76 = arith.constant 0 : index
    %c0_77 = arith.constant 0 : index
    %c0_78 = arith.constant 0 : index
    %240 = vector.load %arg17[%c0_76, %c0_77, %c0_78] : memref<2x8x32xf32, #tpu.memory_space<vmem>>, vector<2x1x32xf32>
    %241 = vector.shape_cast %240 : vector<2x1x32xf32> to vector<2x32xf32>
    %242 = vector.shape_cast %239 : vector<2x32xf32> to vector<2x1x32xf32>
    tpu.vector_store %arg17[%c0_76, %c0_77, %c0_78], %242 {strides = array<i32>} : memref<2x8x32xf32, #tpu.memory_space<vmem>>, vector<2x1x32xf32>,
    %243 = vector.extract_strided_slice %213 {offsets = [0, 1, 0], sizes = [2, 1, 128], strides = [1, 1, 1]} : vector<2x8x128xf32> to vector<2x1x128xf32>
    %244 = vector.shape_cast %243 : vector<2x1x128xf32> to vector<2x128xf32>
    %cst_79 = arith.constant dense<0.000000e+00> : vector<2x128xf32>
    %245 = tpu.matmul %239, %215, %cst_79 {dimension_numbers = #tpu.dot_dimension_numbers<[1], [0], [0], [1], [0, 0, 1, 1], [], []>} : vector<2x32xf32>, vector<32x128xf32>, vector<2x128xf32> -> vector<2x128xf32>
    %246 = arith.addf %244, %245 : vector<2x128xf32>
    %cst_80 = arith.constant 0.000000e+00 : f32
    %247 = vector.broadcast %cst_80 : f32 to vector<2x128xf32>
    %248 = arith.subf %247, %246 : vector<2x128xf32>
    %249 = math.exp %248 : vector<2x128xf32>
    %cst_81 = arith.constant 1.000000e+00 : f32
    %250 = vector.broadcast %cst_81 : f32 to vector<2x128xf32>
    %251 = arith.addf %250, %249 : vector<2x128xf32>
    %252 = tpu.reciprocal %251 {approx = true} : vector<2x128xf32> -> vector<2x128xf32>
    %253 = vector.extract_strided_slice %252 {offsets = [0, 0], sizes = [2, 32], strides = [1, 1]} : vector<2x128xf32> to vector<2x32xf32>
    %254 = vector.extract_strided_slice %252 {offsets = [0, 32], sizes = [2, 32], strides = [1, 1]} : vector<2x128xf32> to vector<2x32xf32>
    %255 = vector.extract_strided_slice %252 {offsets = [0, 96], sizes = [2, 32], strides = [1, 1]} : vector<2x128xf32> to vector<2x32xf32>
    %256 = vector.extract_strided_slice %246 {offsets = [0, 64], sizes = [2, 32], strides = [1, 1]} : vector<2x128xf32> to vector<2x32xf32>
    %257 = math.tanh %256 : vector<2x32xf32>
    %258 = arith.mulf %254, %237 : vector<2x32xf32>
    %259 = arith.mulf %253, %257 : vector<2x32xf32>
    %260 = arith.addf %258, %259 : vector<2x32xf32>
    %261 = math.tanh %260 : vector<2x32xf32>
    %262 = arith.mulf %255, %261 : vector<2x32xf32>
    %c0_82 = arith.constant 0 : index
    %c1_83 = arith.constant 1 : index
    %c0_84 = arith.constant 0 : index
    %263 = vector.load %arg17[%c0_82, %c1_83, %c0_84] : memref<2x8x32xf32, #tpu.memory_space<vmem>>, vector<2x1x32xf32>
    %264 = vector.shape_cast %263 : vector<2x1x32xf32> to vector<2x32xf32>
    %265 = vector.shape_cast %262 : vector<2x32xf32> to vector<2x1x32xf32>
    tpu.vector_store %arg17[%c0_82, %c1_83, %c0_84], %265 {strides = array<i32>} : memref<2x8x32xf32, #tpu.memory_space<vmem>>, vector<2x1x32xf32>,
    %266 = vector.extract_strided_slice %213 {offsets = [0, 2, 0], sizes = [2, 1, 128], strides = [1, 1, 1]} : vector<2x8x128xf32> to vector<2x1x128xf32>
    %267 = vector.shape_cast %266 : vector<2x1x128xf32> to vector<2x128xf32>
    %cst_85 = arith.constant dense<0.000000e+00> : vector<2x128xf32>
    %268 = tpu.matmul %262, %215, %cst_85 {dimension_numbers = #tpu.dot_dimension_numbers<[1], [0], [0], [1], [0, 0, 1, 1], [], []>} : vector<2x32xf32>, vector<32x128xf32>, vector<2x128xf32> -> vector<2x128xf32>
    %269 = arith.addf %267, %268 : vector<2x128xf32>
    %cst_86 = arith.constant 0.000000e+00 : f32
    %270 = vector.broadcast %cst_86 : f32 to vector<2x128xf32>
    %271 = arith.subf %270, %269 : vector<2x128xf32>
    %272 = math.exp %271 : vector<2x128xf32>
    %cst_87 = arith.constant 1.000000e+00 : f32
    %273 = vector.broadcast %cst_87 : f32 to vector<2x128xf32>
    %274 = arith.addf %273, %272 : vector<2x128xf32>
    %275 = tpu.reciprocal %274 {approx = true} : vector<2x128xf32> -> vector<2x128xf32>
    %276 = vector.extract_strided_slice %275 {offsets = [0, 0], sizes = [2, 32], strides = [1, 1]} : vector<2x128xf32> to vector<2x32xf32>
    %277 = vector.extract_strided_slice %275 {offsets = [0, 32], sizes = [2, 32], strides = [1, 1]} : vector<2x128xf32> to vector<2x32xf32>
    %278 = vector.extract_strided_slice %275 {offsets = [0, 96], sizes = [2, 32], strides = [1, 1]} : vector<2x128xf32> to vector<2x32xf32>
    %279 = vector.extract_strided_slice %269 {offsets = [0, 64], sizes = [2, 32], strides = [1, 1]} : vector<2x128xf32> to vector<2x32xf32>
    %280 = math.tanh %279 : vector<2x32xf32>
    %281 = arith.mulf %277, %260 : vector<2x32xf32>
    %282 = arith.mulf %276, %280 : vector<2x32xf32>
    %283 = arith.addf %281, %282 : vector<2x32xf32>
    %284 = math.tanh %283 : vector<2x32xf32>
    %285 = arith.mulf %278, %284 : vector<2x32xf32>
    %c0_88 = arith.constant 0 : index
    %c2_89 = arith.constant 2 : index
    %c0_90 = arith.constant 0 : index
    %286 = vector.load %arg17[%c0_88, %c2_89, %c0_90] : memref<2x8x32xf32, #tpu.memory_space<vmem>>, vector<2x1x32xf32>
    %287 = vector.shape_cast %286 : vector<2x1x32xf32> to vector<2x32xf32>
    %288 = vector.shape_cast %285 : vector<2x32xf32> to vector<2x1x32xf32>
    tpu.vector_store %arg17[%c0_88, %c2_89, %c0_90], %288 {strides = array<i32>} : memref<2x8x32xf32, #tpu.memory_space<vmem>>, vector<2x1x32xf32>,
    %289 = vector.extract_strided_slice %213 {offsets = [0, 3, 0], sizes = [2, 1, 128], strides = [1, 1, 1]} : vector<2x8x128xf32> to vector<2x1x128xf32>
    %290 = vector.shape_cast %289 : vector<2x1x128xf32> to vector<2x128xf32>
    %cst_91 = arith.constant dense<0.000000e+00> : vector<2x128xf32>
    %291 = tpu.matmul %285, %215, %cst_91 {dimension_numbers = #tpu.dot_dimension_numbers<[1], [0], [0], [1], [0, 0, 1, 1], [], []>} : vector<2x32xf32>, vector<32x128xf32>, vector<2x128xf32> -> vector<2x128xf32>
    %292 = arith.addf %290, %291 : vector<2x128xf32>
    %cst_92 = arith.constant 0.000000e+00 : f32
    %293 = vector.broadcast %cst_92 : f32 to vector<2x128xf32>
    %294 = arith.subf %293, %292 : vector<2x128xf32>
    %295 = math.exp %294 : vector<2x128xf32>
    %cst_93 = arith.constant 1.000000e+00 : f32
    %296 = vector.broadcast %cst_93 : f32 to vector<2x128xf32>
    %297 = arith.addf %296, %295 : vector<2x128xf32>
    %298 = tpu.reciprocal %297 {approx = true} : vector<2x128xf32> -> vector<2x128xf32>
    %299 = vector.extract_strided_slice %298 {offsets = [0, 0], sizes = [2, 32], strides = [1, 1]} : vector<2x128xf32> to vector<2x32xf32>
    %300 = vector.extract_strided_slice %298 {offsets = [0, 32], sizes = [2, 32], strides = [1, 1]} : vector<2x128xf32> to vector<2x32xf32>
    %301 = vector.extract_strided_slice %298 {offsets = [0, 96], sizes = [2, 32], strides = [1, 1]} : vector<2x128xf32> to vector<2x32xf32>
    %302 = vector.extract_strided_slice %292 {offsets = [0, 64], sizes = [2, 32], strides = [1, 1]} : vector<2x128xf32> to vector<2x32xf32>
    %303 = math.tanh %302 : vector<2x32xf32>
    %304 = arith.mulf %300, %283 : vector<2x32xf32>
    %305 = arith.mulf %299, %303 : vector<2x32xf32>
    %306 = arith.addf %304, %305 : vector<2x32xf32>
    %307 = math.tanh %306 : vector<2x32xf32>
    %308 = arith.mulf %301, %307 : vector<2x32xf32>
    %c0_94 = arith.constant 0 : index
    %c3_95 = arith.constant 3 : index
    %c0_96 = arith.constant 0 : index
    %309 = vector.load %arg17[%c0_94, %c3_95, %c0_96] : memref<2x8x32xf32, #tpu.memory_space<vmem>>, vector<2x1x32xf32>
    %310 = vector.shape_cast %309 : vector<2x1x32xf32> to vector<2x32xf32>
    %311 = vector.shape_cast %308 : vector<2x32xf32> to vector<2x1x32xf32>
    tpu.vector_store %arg17[%c0_94, %c3_95, %c0_96], %311 {strides = array<i32>} : memref<2x8x32xf32, #tpu.memory_space<vmem>>, vector<2x1x32xf32>,
    %312 = vector.extract_strided_slice %213 {offsets = [0, 4, 0], sizes = [2, 1, 128], strides = [1, 1, 1]} : vector<2x8x128xf32> to vector<2x1x128xf32>
    %313 = vector.shape_cast %312 : vector<2x1x128xf32> to vector<2x128xf32>
    %cst_97 = arith.constant dense<0.000000e+00> : vector<2x128xf32>
    %314 = tpu.matmul %308, %215, %cst_97 {dimension_numbers = #tpu.dot_dimension_numbers<[1], [0], [0], [1], [0, 0, 1, 1], [], []>} : vector<2x32xf32>, vector<32x128xf32>, vector<2x128xf32> -> vector<2x128xf32>
    %315 = arith.addf %313, %314 : vector<2x128xf32>
    %cst_98 = arith.constant 0.000000e+00 : f32
    %316 = vector.broadcast %cst_98 : f32 to vector<2x128xf32>
    %317 = arith.subf %316, %315 : vector<2x128xf32>
    %318 = math.exp %317 : vector<2x128xf32>
    %cst_99 = arith.constant 1.000000e+00 : f32
    %319 = vector.broadcast %cst_99 : f32 to vector<2x128xf32>
    %320 = arith.addf %319, %318 : vector<2x128xf32>
    %321 = tpu.reciprocal %320 {approx = true} : vector<2x128xf32> -> vector<2x128xf32>
    %322 = vector.extract_strided_slice %321 {offsets = [0, 0], sizes = [2, 32], strides = [1, 1]} : vector<2x128xf32> to vector<2x32xf32>
    %323 = vector.extract_strided_slice %321 {offsets = [0, 32], sizes = [2, 32], strides = [1, 1]} : vector<2x128xf32> to vector<2x32xf32>
    %324 = vector.extract_strided_slice %321 {offsets = [0, 96], sizes = [2, 32], strides = [1, 1]} : vector<2x128xf32> to vector<2x32xf32>
    %325 = vector.extract_strided_slice %315 {offsets = [0, 64], sizes = [2, 32], strides = [1, 1]} : vector<2x128xf32> to vector<2x32xf32>
    %326 = math.tanh %325 : vector<2x32xf32>
    %327 = arith.mulf %323, %306 : vector<2x32xf32>
    %328 = arith.mulf %322, %326 : vector<2x32xf32>
    %329 = arith.addf %327, %328 : vector<2x32xf32>
    %330 = math.tanh %329 : vector<2x32xf32>
    %331 = arith.mulf %324, %330 : vector<2x32xf32>
    %c0_100 = arith.constant 0 : index
    %c4_101 = arith.constant 4 : index
    %c0_102 = arith.constant 0 : index
    %332 = vector.load %arg17[%c0_100, %c4_101, %c0_102] : memref<2x8x32xf32, #tpu.memory_space<vmem>>, vector<2x1x32xf32>
    %333 = vector.shape_cast %332 : vector<2x1x32xf32> to vector<2x32xf32>
    %334 = vector.shape_cast %331 : vector<2x32xf32> to vector<2x1x32xf32>
    tpu.vector_store %arg17[%c0_100, %c4_101, %c0_102], %334 {strides = array<i32>} : memref<2x8x32xf32, #tpu.memory_space<vmem>>, vector<2x1x32xf32>,
    %335 = vector.extract_strided_slice %213 {offsets = [0, 5, 0], sizes = [2, 1, 128], strides = [1, 1, 1]} : vector<2x8x128xf32> to vector<2x1x128xf32>
    %336 = vector.shape_cast %335 : vector<2x1x128xf32> to vector<2x128xf32>
    %cst_103 = arith.constant dense<0.000000e+00> : vector<2x128xf32>
    %337 = tpu.matmul %331, %215, %cst_103 {dimension_numbers = #tpu.dot_dimension_numbers<[1], [0], [0], [1], [0, 0, 1, 1], [], []>} : vector<2x32xf32>, vector<32x128xf32>, vector<2x128xf32> -> vector<2x128xf32>
    %338 = arith.addf %336, %337 : vector<2x128xf32>
    %cst_104 = arith.constant 0.000000e+00 : f32
    %339 = vector.broadcast %cst_104 : f32 to vector<2x128xf32>
    %340 = arith.subf %339, %338 : vector<2x128xf32>
    %341 = math.exp %340 : vector<2x128xf32>
    %cst_105 = arith.constant 1.000000e+00 : f32
    %342 = vector.broadcast %cst_105 : f32 to vector<2x128xf32>
    %343 = arith.addf %342, %341 : vector<2x128xf32>
    %344 = tpu.reciprocal %343 {approx = true} : vector<2x128xf32> -> vector<2x128xf32>
    %345 = vector.extract_strided_slice %344 {offsets = [0, 0], sizes = [2, 32], strides = [1, 1]} : vector<2x128xf32> to vector<2x32xf32>
    %346 = vector.extract_strided_slice %344 {offsets = [0, 32], sizes = [2, 32], strides = [1, 1]} : vector<2x128xf32> to vector<2x32xf32>
    %347 = vector.extract_strided_slice %344 {offsets = [0, 96], sizes = [2, 32], strides = [1, 1]} : vector<2x128xf32> to vector<2x32xf32>
    %348 = vector.extract_strided_slice %338 {offsets = [0, 64], sizes = [2, 32], strides = [1, 1]} : vector<2x128xf32> to vector<2x32xf32>
    %349 = math.tanh %348 : vector<2x32xf32>
    %350 = arith.mulf %346, %329 : vector<2x32xf32>
    %351 = arith.mulf %345, %349 : vector<2x32xf32>
    %352 = arith.addf %350, %351 : vector<2x32xf32>
    %353 = math.tanh %352 : vector<2x32xf32>
    %354 = arith.mulf %347, %353 : vector<2x32xf32>
    %c0_106 = arith.constant 0 : index
    %c5_107 = arith.constant 5 : index
    %c0_108 = arith.constant 0 : index
    %355 = vector.load %arg17[%c0_106, %c5_107, %c0_108] : memref<2x8x32xf32, #tpu.memory_space<vmem>>, vector<2x1x32xf32>
    %356 = vector.shape_cast %355 : vector<2x1x32xf32> to vector<2x32xf32>
    %357 = vector.shape_cast %354 : vector<2x32xf32> to vector<2x1x32xf32>
    tpu.vector_store %arg17[%c0_106, %c5_107, %c0_108], %357 {strides = array<i32>} : memref<2x8x32xf32, #tpu.memory_space<vmem>>, vector<2x1x32xf32>,
    %358 = vector.extract_strided_slice %213 {offsets = [0, 6, 0], sizes = [2, 1, 128], strides = [1, 1, 1]} : vector<2x8x128xf32> to vector<2x1x128xf32>
    %359 = vector.shape_cast %358 : vector<2x1x128xf32> to vector<2x128xf32>
    %cst_109 = arith.constant dense<0.000000e+00> : vector<2x128xf32>
    %360 = tpu.matmul %354, %215, %cst_109 {dimension_numbers = #tpu.dot_dimension_numbers<[1], [0], [0], [1], [0, 0, 1, 1], [], []>} : vector<2x32xf32>, vector<32x128xf32>, vector<2x128xf32> -> vector<2x128xf32>
    %361 = arith.addf %359, %360 : vector<2x128xf32>
    %cst_110 = arith.constant 0.000000e+00 : f32
    %362 = vector.broadcast %cst_110 : f32 to vector<2x128xf32>
    %363 = arith.subf %362, %361 : vector<2x128xf32>
    %364 = math.exp %363 : vector<2x128xf32>
    %cst_111 = arith.constant 1.000000e+00 : f32
    %365 = vector.broadcast %cst_111 : f32 to vector<2x128xf32>
    %366 = arith.addf %365, %364 : vector<2x128xf32>
    %367 = tpu.reciprocal %366 {approx = true} : vector<2x128xf32> -> vector<2x128xf32>
    %368 = vector.extract_strided_slice %367 {offsets = [0, 0], sizes = [2, 32], strides = [1, 1]} : vector<2x128xf32> to vector<2x32xf32>
    %369 = vector.extract_strided_slice %367 {offsets = [0, 32], sizes = [2, 32], strides = [1, 1]} : vector<2x128xf32> to vector<2x32xf32>
    %370 = vector.extract_strided_slice %367 {offsets = [0, 96], sizes = [2, 32], strides = [1, 1]} : vector<2x128xf32> to vector<2x32xf32>
    %371 = vector.extract_strided_slice %361 {offsets = [0, 64], sizes = [2, 32], strides = [1, 1]} : vector<2x128xf32> to vector<2x32xf32>
    %372 = math.tanh %371 : vector<2x32xf32>
    %373 = arith.mulf %369, %352 : vector<2x32xf32>
    %374 = arith.mulf %368, %372 : vector<2x32xf32>
    %375 = arith.addf %373, %374 : vector<2x32xf32>
    %376 = math.tanh %375 : vector<2x32xf32>
    %377 = arith.mulf %370, %376 : vector<2x32xf32>
    %c0_112 = arith.constant 0 : index
    %c6_113 = arith.constant 6 : index
    %c0_114 = arith.constant 0 : index
    %378 = vector.load %arg17[%c0_112, %c6_113, %c0_114] : memref<2x8x32xf32, #tpu.memory_space<vmem>>, vector<2x1x32xf32>
    %379 = vector.shape_cast %378 : vector<2x1x32xf32> to vector<2x32xf32>
    %380 = vector.shape_cast %377 : vector<2x32xf32> to vector<2x1x32xf32>
    tpu.vector_store %arg17[%c0_112, %c6_113, %c0_114], %380 {strides = array<i32>} : memref<2x8x32xf32, #tpu.memory_space<vmem>>, vector<2x1x32xf32>,
    %381 = vector.extract_strided_slice %213 {offsets = [0, 7, 0], sizes = [2, 1, 128], strides = [1, 1, 1]} : vector<2x8x128xf32> to vector<2x1x128xf32>
    %382 = vector.shape_cast %381 : vector<2x1x128xf32> to vector<2x128xf32>
    %cst_115 = arith.constant dense<0.000000e+00> : vector<2x128xf32>
    %383 = tpu.matmul %377, %215, %cst_115 {dimension_numbers = #tpu.dot_dimension_numbers<[1], [0], [0], [1], [0, 0, 1, 1], [], []>} : vector<2x32xf32>, vector<32x128xf32>, vector<2x128xf32> -> vector<2x128xf32>
    %384 = arith.addf %382, %383 : vector<2x128xf32>
    %cst_116 = arith.constant 0.000000e+00 : f32
    %385 = vector.broadcast %cst_116 : f32 to vector<2x128xf32>
    %386 = arith.subf %385, %384 : vector<2x128xf32>
    %387 = math.exp %386 : vector<2x128xf32>
    %cst_117 = arith.constant 1.000000e+00 : f32
    %388 = vector.broadcast %cst_117 : f32 to vector<2x128xf32>
    %389 = arith.addf %388, %387 : vector<2x128xf32>
    %390 = tpu.reciprocal %389 {approx = true} : vector<2x128xf32> -> vector<2x128xf32>
    %391 = vector.extract_strided_slice %390 {offsets = [0, 0], sizes = [2, 32], strides = [1, 1]} : vector<2x128xf32> to vector<2x32xf32>
    %392 = vector.extract_strided_slice %390 {offsets = [0, 32], sizes = [2, 32], strides = [1, 1]} : vector<2x128xf32> to vector<2x32xf32>
    %393 = vector.extract_strided_slice %390 {offsets = [0, 96], sizes = [2, 32], strides = [1, 1]} : vector<2x128xf32> to vector<2x32xf32>
    %394 = vector.extract_strided_slice %384 {offsets = [0, 64], sizes = [2, 32], strides = [1, 1]} : vector<2x128xf32> to vector<2x32xf32>
    %395 = math.tanh %394 : vector<2x32xf32>
    %396 = arith.mulf %392, %375 : vector<2x32xf32>
    %397 = arith.mulf %391, %395 : vector<2x32xf32>
    %398 = arith.addf %396, %397 : vector<2x32xf32>
    %399 = math.tanh %398 : vector<2x32xf32>
    %400 = arith.mulf %393, %399 : vector<2x32xf32>
    %c0_118 = arith.constant 0 : index
    %c7_119 = arith.constant 7 : index
    %c0_120 = arith.constant 0 : index
    %401 = vector.load %arg17[%c0_118, %c7_119, %c0_120] : memref<2x8x32xf32, #tpu.memory_space<vmem>>, vector<2x1x32xf32>
    %402 = vector.shape_cast %401 : vector<2x1x32xf32> to vector<2x32xf32>
    %403 = vector.shape_cast %400 : vector<2x32xf32> to vector<2x1x32xf32>
    tpu.vector_store %arg17[%c0_118, %c7_119, %c0_120], %403 {strides = array<i32>} : memref<2x8x32xf32, #tpu.memory_space<vmem>>, vector<2x1x32xf32>,
    %c0_121 = arith.constant 0 : index
    %c1_122 = arith.constant 1 : index
    %c0_123 = arith.constant 0 : index
    %404 = vector.load %arg15[%c0_121, %c1_122, %c0_123] : memref<2x2x32xf32, #tpu.memory_space<vmem>>, vector<2x1x32xf32>
    %405 = vector.shape_cast %404 : vector<2x1x32xf32> to vector<2x32xf32>
    %406 = vector.shape_cast %400 : vector<2x32xf32> to vector<2x1x32xf32>
    tpu.vector_store %arg15[%c0_121, %c1_122, %c0_123], %406 {strides = array<i32>} : memref<2x2x32xf32, #tpu.memory_space<vmem>>, vector<2x1x32xf32>,
    %c0_124 = arith.constant 0 : index
    %c1_125 = arith.constant 1 : index
    %c0_126 = arith.constant 0 : index
    %407 = vector.load %arg16[%c0_124, %c1_125, %c0_126] : memref<2x2x32xf32, #tpu.memory_space<vmem>>, vector<2x1x32xf32>
    %408 = vector.shape_cast %407 : vector<2x1x32xf32> to vector<2x32xf32>
    %409 = vector.shape_cast %398 : vector<2x32xf32> to vector<2x1x32xf32>
    tpu.vector_store %arg16[%c0_124, %c1_125, %c0_126], %409 {strides = array<i32>} : memref<2x2x32xf32, #tpu.memory_space<vmem>>, vector<2x1x32xf32>,
    %c0_127 = arith.constant 0 : index
    %c0_128 = arith.constant 0 : index
    %c0_129 = arith.constant 0 : index
    %410 = vector.load %arg17[%c0_127, %c0_128, %c0_129] : memref<2x8x32xf32, #tpu.memory_space<vmem>>, vector<2x8x32xf32>
    %411 = vector.shape_cast %410 : vector<2x8x32xf32> to vector<16x32xf32>
    %c0_130 = arith.constant 0 : index
    %c0_131 = arith.constant 0 : index
    %c0_132 = arith.constant 0 : index
    %412 = vector.load %arg2[%c0_130, %c0_131, %c0_132] : memref<2x8x32xf32, #tpu.memory_space<vmem>>, vector<2x8x32xf32>
    "tpu.trace_start"() <{level = 10 : i32, message = "bth,bsh->bts"}> : () -> ()
    %cst_133 = arith.constant dense<0.000000e+00> : vector<2x8x8xf32>
    %413 = tpu.matmul %410, %412, %cst_133 {dimension_numbers = #tpu.dot_dimension_numbers<[2], [2], [1], [1], [0, 0, 0, 1, 1, 1], [0], [0]>} : vector<2x8x32xf32>, vector<2x8x32xf32>, vector<2x8x8xf32> -> vector<2x8x8xf32>
    "tpu.trace_stop"() : () -> ()
    %cst_134 = arith.constant dense<0xFF800000> : vector<2x8xf32>
    %414 = vector.multi_reduction <maximumf>, %413, %cst_134 [2] : vector<2x8x8xf32> to vector<2x8xf32>
    %415 = vector.shape_cast %414 : vector<2x8xf32> to vector<2x8x1xf32>
    %416 = vector.broadcast %415 : vector<2x8x1xf32> to vector<2x8x8xf32>
    %417 = arith.subf %413, %416 : vector<2x8x8xf32>
    %418 = math.exp %417 : vector<2x8x8xf32>
    %cst_135 = arith.constant dense<0.000000e+00> : vector<2x8xf32>
    %419 = vector.multi_reduction <add>, %418, %cst_135 [2] : vector<2x8x8xf32> to vector<2x8xf32>
    %420 = vector.shape_cast %419 : vector<2x8xf32> to vector<2x8x1xf32>
    %421 = tpu.reciprocal %420 {approx = true} : vector<2x8x1xf32> -> vector<2x8x1xf32>
    %422 = vector.broadcast %421 : vector<2x8x1xf32> to vector<2x8x8xf32>
    %423 = arith.mulf %418, %422 : vector<2x8x8xf32>
    "tpu.trace_start"() <{level = 10 : i32, message = "bts,bsh->bth"}> : () -> ()
    %cst_136 = arith.constant dense<0.000000e+00> : vector<2x8x32xf32>
    %424 = tpu.matmul %423, %412, %cst_136 {dimension_numbers = #tpu.dot_dimension_numbers<[2], [1], [1], [2], [0, 0, 0, 1, 1, 2], [0], [0]>} : vector<2x8x8xf32>, vector<2x8x32xf32>, vector<2x8x32xf32> -> vector<2x8x32xf32>
    "tpu.trace_stop"() : () -> ()
    %425 = vector.shape_cast %424 : vector<2x8x32xf32> to vector<16x32xf32>
    %c0_137 = arith.constant 0 : index
    %c0_138 = arith.constant 0 : index
    %426 = vector.load %arg9[%c0_137, %c0_138] : memref<32x32xf32, #tpu.memory_space<vmem>>, vector<32x32xf32>
    %cst_139 = arith.constant dense<0.000000e+00> : vector<16x32xf32>
    %427 = tpu.matmul %425, %426, %cst_139 {dimension_numbers = #tpu.dot_dimension_numbers<[1], [0], [0], [1], [0, 0, 1, 1], [], []>} : vector<16x32xf32>, vector<32x32xf32>, vector<16x32xf32> -> vector<16x32xf32>
    %c0_140 = arith.constant 0 : index
    %c0_141 = arith.constant 0 : index
    %428 = vector.load %arg10[%c0_140, %c0_141] : memref<32x32xf32, #tpu.memory_space<vmem>>, vector<32x32xf32>
    %cst_142 = arith.constant dense<0.000000e+00> : vector<16x32xf32>
    %429 = tpu.matmul %411, %428, %cst_142 {dimension_numbers = #tpu.dot_dimension_numbers<[1], [0], [0], [1], [0, 0, 1, 1], [], []>} : vector<16x32xf32>, vector<32x32xf32>, vector<16x32xf32> -> vector<16x32xf32>
    %430 = arith.addf %427, %429 : vector<16x32xf32>
    %c0_143 = arith.constant 0 : index
    %c0_144 = arith.constant 0 : index
    %431 = vector.load %arg11[%c0_143, %c0_144] : memref<1x32xf32, #tpu.memory_space<vmem>>, vector<1x32xf32>
    %432 = vector.broadcast %431 : vector<1x32xf32> to vector<16x32xf32>
    %433 = arith.addf %430, %432 : vector<16x32xf32>
    %434 = math.tanh %433 : vector<16x32xf32>
    %c0_145 = arith.constant 0 : index
    %c0_146 = arith.constant 0 : index
    %435 = vector.load %arg12[%c0_145, %c0_146] : memref<32x128xf32, #tpu.memory_space<vmem>>, vector<32x128xf32>
    %cst_147 = arith.constant dense<0.000000e+00> : vector<16x128xf32>
    %436 = tpu.matmul %434, %435, %cst_147 {dimension_numbers = #tpu.dot_dimension_numbers<[1], [0], [0], [1], [0, 0, 1, 1], [], []>} : vector<16x32xf32>, vector<32x128xf32>, vector<16x128xf32> -> vector<16x128xf32>
    %c0_148 = arith.constant 0 : index
    %c0_149 = arith.constant 0 : index
    %437 = vector.load %arg13[%c0_148, %c0_149] : memref<1x128xf32, #tpu.memory_space<vmem>>, vector<1x128xf32>
    %438 = vector.broadcast %437 : vector<1x128xf32> to vector<16x128xf32>
    %439 = arith.addf %436, %438 : vector<16x128xf32>
    %c0_150 = arith.constant 0 : index
    %c0_151 = arith.constant 0 : index
    %440 = vector.load %arg14[%c0_150, %c0_151] : memref<16x128xf32, #tpu.memory_space<vmem>>, vector<16x128xf32>
    tpu.vector_store %arg14[%c0_150, %c0_151], %439 {strides = array<i32>} : memref<16x128xf32, #tpu.memory_space<vmem>>, vector<16x128xf32>,
    return
  }
  func.func @transform_0(%arg0: i32) -> (i32, i32) {
    %c0_i32 = arith.constant 0 : i32
    %c0_i32_0 = arith.constant 0 : i32
    return %arg0, %c0_i32 : i32, i32
  }
  func.func @transform_1(%arg0: i32) -> (i32, i32, i32) {
    %c0_i32 = arith.constant 0 : i32
    %c0_i32_0 = arith.constant 0 : i32
    %c0_i32_1 = arith.constant 0 : i32
    return %arg0, %c0_i32, %c0_i32_0 : i32, i32, i32
  }
  func.func @transform_2(%arg0: i32) -> (i32, i32, i32) {
    %c0_i32 = arith.constant 0 : i32
    %c0_i32_0 = arith.constant 0 : i32
    %c0_i32_1 = arith.constant 0 : i32
    return %arg0, %c0_i32, %c0_i32_0 : i32, i32, i32
  }
  func.func @transform_3(%arg0: i32) -> (i32, i32, i32) {
    %c0_i32 = arith.constant 0 : i32
    %c0_i32_0 = arith.constant 0 : i32
    %c0_i32_1 = arith.constant 0 : i32
    return %arg0, %c0_i32, %c0_i32_0 : i32, i32, i32
  }
  func.func @transform_4(%arg0: i32) -> (i32, i32) {
    %c0_i32 = arith.constant 0 : i32
    %c0_i32_0 = arith.constant 0 : i32
    %c0_i32_1 = arith.constant 0 : i32
    return %c0_i32, %c0_i32_0 : i32, i32
  }
  func.func @transform_5(%arg0: i32) -> (i32, i32, i32) {
    %c0_i32 = arith.constant 0 : i32
    %c0_i32_0 = arith.constant 0 : i32
    %c0_i32_1 = arith.constant 0 : i32
    %c0_i32_2 = arith.constant 0 : i32
    return %c0_i32, %c0_i32_0, %c0_i32_1 : i32, i32, i32
  }
  func.func @transform_6(%arg0: i32) -> (i32, i32, i32) {
    %c0_i32 = arith.constant 0 : i32
    %c0_i32_0 = arith.constant 0 : i32
    %c0_i32_1 = arith.constant 0 : i32
    %c0_i32_2 = arith.constant 0 : i32
    return %c0_i32, %c0_i32_0, %c0_i32_1 : i32, i32, i32
  }
  func.func @transform_7(%arg0: i32) -> (i32, i32) {
    %c0_i32 = arith.constant 0 : i32
    %c0_i32_0 = arith.constant 0 : i32
    %c0_i32_1 = arith.constant 0 : i32
    return %c0_i32, %c0_i32_0 : i32, i32
  }
  func.func @transform_8(%arg0: i32) -> (i32, i32) {
    %c0_i32 = arith.constant 0 : i32
    %c0_i32_0 = arith.constant 0 : i32
    %c0_i32_1 = arith.constant 0 : i32
    return %c0_i32, %c0_i32_0 : i32, i32
  }
  func.func @transform_9(%arg0: i32) -> (i32, i32) {
    %c0_i32 = arith.constant 0 : i32
    %c0_i32_0 = arith.constant 0 : i32
    %c0_i32_1 = arith.constant 0 : i32
    return %c0_i32, %c0_i32_0 : i32, i32
  }
  func.func @transform_10(%arg0: i32) -> (i32, i32) {
    %c0_i32 = arith.constant 0 : i32
    %c0_i32_0 = arith.constant 0 : i32
    %c0_i32_1 = arith.constant 0 : i32
    return %c0_i32, %c0_i32_0 : i32, i32
  }
  func.func @transform_11(%arg0: i32) -> (i32, i32) {
    %c0_i32 = arith.constant 0 : i32
    %c0_i32_0 = arith.constant 0 : i32
    %c0_i32_1 = arith.constant 0 : i32
    return %c0_i32, %c0_i32_0 : i32, i32
  }
  func.func @transform_12(%arg0: i32) -> (i32, i32) {
    %c0_i32 = arith.constant 0 : i32
    %c0_i32_0 = arith.constant 0 : i32
    %c0_i32_1 = arith.constant 0 : i32
    return %c0_i32, %c0_i32_0 : i32, i32
  }
  func.func @transform_13(%arg0: i32) -> (i32, i32) {
    %c0_i32 = arith.constant 0 : i32
    %c0_i32_0 = arith.constant 0 : i32
    return %arg0, %c0_i32 : i32, i32
  }
  func.func @transform_14(%arg0: i32) -> (i32, i32, i32) {
    %c0_i32 = arith.constant 0 : i32
    %c0_i32_0 = arith.constant 0 : i32
    %c0_i32_1 = arith.constant 0 : i32
    return %arg0, %c0_i32, %c0_i32_0 : i32, i32, i32
  }
  func.func @transform_15(%arg0: i32) -> (i32, i32, i32) {
    %c0_i32 = arith.constant 0 : i32
    %c0_i32_0 = arith.constant 0 : i32
    %c0_i32_1 = arith.constant 0 : i32
    return %arg0, %c0_i32, %c0_i32_0 : i32, i32, i32
  }
}

</mosaic_0001>

<llo_original>
// kernel: _forward_impl.1
$region0: #{_forward_impl.1}
  #allocation0 [shape = 'u32[]', space=smem, size = 0x4, offset = 0x4, fixed_abs, tag = 'smem constant byte address 0x4 - core index']
  #allocation1 [shape = 'u32[144,128]{1,0:T(1,128)}', space=vmem, size = 0x12000, scoped, tag = 'internal scratch']
  #allocation2 [shape = 'f32[2,8,32]{2,1,0:T(8,128)}', space=vmem, size = 0x2000, scoped, tag = 'scratch operand']
  %s0 = inlined_call_operand.hbm [shape: f32[16,32], index: 0, kind: input, shape index: {}]
  %s1 = inlined_call_operand.hbm [shape: f32[2,8,32], index: 1, kind: input, shape index: {}]
  %s2 = inlined_call_operand.vmem [shape: f32[2,2,32], index: 2, kind: input, shape index: {}]
  %s3 = inlined_call_operand.vmem [shape: f32[2,2,32], index: 3, kind: input, shape index: {}]
  %s4 = inlined_call_operand.vmem [shape: f32[32,128], index: 4, kind: input, shape index: {}]
  %s5 = inlined_call_operand.hbm [shape: f32[1,32,128], index: 5, kind: input, shape index: {}]
  %s6 = inlined_call_operand.hbm [shape: f32[2,32,128], index: 6, kind: input, shape index: {}]
  %s7 = inlined_call_operand.hbm [shape: f32[2,128], index: 7, kind: input, shape index: {}]
  %s8 = inlined_call_operand.hbm [shape: f32[32,32], index: 8, kind: input, shape index: {}]
  %s9 = inlined_call_operand.hbm [shape: f32[32,32], index: 9, kind: input, shape index: {}]
  %s10 = inlined_call_operand.vmem [shape: f32[1,32], index: 10, kind: input, shape index: {}]
  %s11 = inlined_call_operand.vmem [shape: f32[32,128], index: 11, kind: input, shape index: {}]
  %s12 = inlined_call_operand.vmem [shape: f32[1,128], index: 12, kind: input, shape index: {}]
  %s13 = inlined_call_operand.hbm [shape: f32[16,128], index: 13, kind: output, shape index: {0}]
  %s14 = inlined_call_operand.vmem [shape: f32[2,2,32], index: 14, kind: output, shape index: {1}]
  %s15 = inlined_call_operand.vmem [shape: f32[2,2,32], index: 15, kind: output, shape index: {2}]
  %16 = xla_tuple %s13, %s14, %s15
  %s17 = sld [smem:[#allocation0]]
  $region106: #{_forward_impl.1} parent=0
    _
  %s19 = ssub.s32 1, %s17
  %s20 = scalar_select 0, %s19, %s17
  $region1: #{_forward_impl.1} parent=0
    #allocation3 [shape = 'u8[8192]{0}', space=vmem, size = 0x2000, scoped, tag = 'input window, operand 0, single buffered']
    #allocation4 [shape = 's32[1]{0}', space=sflag, size = 0x4, scoped, tag = 'scoped memory for _forward_impl.1']
    #allocation5 [shape = 's32[1]{0}', space=sflag, size = 0x4, scoped, tag = 'scoped memory for _forward_impl.1']
    #allocation6 [shape = 'u8[8192]{0}', space=vmem, size = 0x2000, scoped, tag = 'input window, operand 1, single buffered']
    #allocation7 [shape = 's32[1]{0}', space=sflag, size = 0x4, scoped, tag = 'scoped memory for _forward_impl.1']
    #allocation8 [shape = 'u8[16384]{0}', space=vmem, size = 0x4000, scoped, tag = 'input window, operand 5, single buffered']
    #allocation9 [shape = 'u8[32768]{0}', space=vmem, size = 0x8000, scoped, tag = 'input window, operand 6, single buffered']
    #allocation10 [shape = 's32[1]{0}', space=sflag, size = 0x4, scoped, tag = 'scoped memory for _forward_impl.1']
    #allocation11 [shape = 'u8[1024]{0}', space=vmem, size = 0x400, scoped, tag = 'input window, operand 7, single buffered']
    #allocation12 [shape = 'u8[16384]{0}', space=vmem, size = 0x4000, scoped, tag = 'input window, operand 8, single buffered']
    #allocation13 [shape = 's32[1]{0}', space=sflag, size = 0x4, scoped, tag = 'scoped memory for _forward_impl.1']
    #allocation14 [shape = 'u8[16384]{0}', space=vmem, size = 0x4000, scoped, tag = 'input window, operand 9, single buffered']
    #allocation15 [shape = 'u8[8192]{0}', space=vmem, size = 0x2000, scoped, tag = 'output window, operand 0, single buffered']
    %21 = vsyncpa [#allocation4], 0
    %22 = vsyncpa [#allocation7], 0
    %23 = vsyncpa [#allocation10], 0
    %24 = vsyncpa [#allocation13], 0
    %25 = vsyncpa [#allocation5], 0
    // Predicated region
    $region2: #{_forward_impl.1} parent=1 // pred_check
      _
    $region3: #{_forward_impl.1} parent=1 // pred_check_branch
      %27 = sbr.rel (0) target = $region5
    $region4: #{_forward_impl.1} parent=1 // pred_region
      %s29 = ssub.s32 256, 256
      %30 = vsyncadd [#allocation4], %s29
      %s31 = sshll.u32 [#allocation3], 4
      %s32 = int_to_ptr.vmem [resolvable:$true] %s31
      %37 = dma.hbm_to_vmem [thread:$0]  %s0, 256, %s32, [#allocation4], 128, 128, 8
    $region5: #{_forward_impl.1} parent=1 // pred_fallthru
      _
    // Predicated region
    $region6: #{_forward_impl.1} parent=1 // pred_check
      _
    $region7: #{_forward_impl.1} parent=1 // pred_check_branch
      %39 = sbr.rel (0) target = $region9
    $region8: #{_forward_impl.1} parent=1 // pred_region
      %s41 = ssub.s32 256, 256
      %42 = vsyncadd [#allocation7], %s41
      %s43 = sshll.u32 [#allocation6], 4
      %s44 = int_to_ptr.vmem [resolvable:$true] %s43
      %49 = dma.hbm_to_vmem [thread:$0]  %s1, 256, %s44, [#allocation7], 128, 128, 8
    $region9: #{_forward_impl.1} parent=1 // pred_fallthru
      _
    // Predicated region
    $region10: #{_forward_impl.1} parent=1 // pred_check
      _
    $region11: #{_forward_impl.1} parent=1 // pred_check_branch
      %51 = sbr.rel (0) target = $region13
    $region12: #{_forward_impl.1} parent=1 // pred_region
      _
    $region13: #{_forward_impl.1} parent=1 // pred_fallthru
      _
    // Predicated region
    $region14: #{_forward_impl.1} parent=1 // pred_check
      _
    $region15: #{_forward_impl.1} parent=1 // pred_check_branch
      %53 = sbr.rel (0) target = $region17
    $region16: #{_forward_impl.1} parent=1 // pred_region
      _
    $region17: #{_forward_impl.1} parent=1 // pred_fallthru
      _
    // Predicated region
    $region18: #{_forward_impl.1} parent=1 // pred_check
      _
    $region19: #{_forward_impl.1} parent=1 // pred_check_branch
      %55 = sbr.rel (0) target = $region21
    $region20: #{_forward_impl.1} parent=1 // pred_region
      _
    $region21: #{_forward_impl.1} parent=1 // pred_fallthru
      _
    // Predicated region
    $region22: #{_forward_impl.1} parent=1 // pred_check
      _
    $region23: #{_forward_impl.1} parent=1 // pred_check_branch
      %57 = sbr.rel (0) target = $region25
    $region24: #{_forward_impl.1} parent=1 // pred_region
      %s59 = ssub.s32 512, 512
      %60 = vsyncadd [#allocation7], %s59
      %s61 = sshll.u32 [#allocation8], 4
      %s62 = int_to_ptr.vmem [resolvable:$true] %s61
      %67 = dma.hbm_to_vmem [thread:$0]  %s5, 512, %s62, [#allocation7], 128, 128, 8
    $region25: #{_forward_impl.1} parent=1 // pred_fallthru
      _
    // Predicated region
    $region26: #{_forward_impl.1} parent=1 // pred_check
      _
    $region27: #{_forward_impl.1} parent=1 // pred_check_branch
      %69 = sbr.rel (0) target = $region29
    $region28: #{_forward_impl.1} parent=1 // pred_region
      %s71 = ssub.s32 1024, 1024
      %72 = vsyncadd [#allocation10], %s71
      %s73 = sshll.u32 [#allocation9], 4
      %s74 = int_to_ptr.vmem [resolvable:$true] %s73
      %79 = dma.hbm_to_vmem [thread:$0]  %s6, 1024, %s74, [#allocation10], 128, 128, 8
    $region29: #{_forward_impl.1} parent=1 // pred_fallthru
      _
    // Predicated region
    $region30: #{_forward_impl.1} parent=1 // pred_check
      _
    $region31: #{_forward_impl.1} parent=1 // pred_check_branch
      %81 = sbr.rel (0) target = $region33
    $region32: #{_forward_impl.1} parent=1 // pred_region
      %s83 = ssub.s32 32, 32
      %84 = vsyncadd [#allocation10], %s83
      %s86 = sshll.u32 [#allocation11], 4
      %s87 = int_to_ptr.vmem [resolvable:$true] %s86
      %89 = dma.hbm_to_vmem [thread:$0]  %s7, 32, %s87, [#allocation10]
    $region33: #{_forward_impl.1} parent=1 // pred_fallthru
      _
    // Predicated region
    $region34: #{_forward_impl.1} parent=1 // pred_check
      _
    $region35: #{_forward_impl.1} parent=1 // pred_check_branch
      %91 = sbr.rel (0) target = $region37
    $region36: #{_forward_impl.1} parent=1 // pred_region
      %s93 = ssub.s32 512, 512
      %94 = vsyncadd [#allocation13], %s93
      %s95 = sshll.u32 [#allocation12], 4
      %s96 = int_to_ptr.vmem [resolvable:$true] %s95
      %101 = dma.hbm_to_vmem [thread:$0]  %s8, 512, %s96, [#allocation13], 128, 128, 8
    $region37: #{_forward_impl.1} parent=1 // pred_fallthru
      _
    // Predicated region
    $region38: #{_forward_impl.1} parent=1 // pred_check
      _
    $region39: #{_forward_impl.1} parent=1 // pred_check_branch
      %103 = sbr.rel (0) target = $region41
    $region40: #{_forward_impl.1} parent=1 // pred_region
      %s105 = ssub.s32 512, 512
      %106 = vsyncadd [#allocation13], %s105
      %s107 = sshll.u32 [#allocation14], 4
      %s108 = int_to_ptr.vmem [resolvable:$true] %s107
      %113 = dma.hbm_to_vmem [thread:$0]  %s9, 512, %s108, [#allocation13], 128, 128, 8
    $region41: #{_forward_impl.1} parent=1 // pred_fallthru
      _
    // Predicated region
    $region42: #{_forward_impl.1} parent=1 // pred_check
      _
    $region43: #{_forward_impl.1} parent=1 // pred_check_branch
      %115 = sbr.rel (0) target = $region45
    $region44: #{_forward_impl.1} parent=1 // pred_region
      _
    $region45: #{_forward_impl.1} parent=1 // pred_fallthru
      _
    // Predicated region
    $region46: #{_forward_impl.1} parent=1 // pred_check
      _
    $region47: #{_forward_impl.1} parent=1 // pred_check_branch
      %117 = sbr.rel (0) target = $region49
    $region48: #{_forward_impl.1} parent=1 // pred_region
      _
    $region49: #{_forward_impl.1} parent=1 // pred_fallthru
      _
    // Predicated region
    $region50: #{_forward_impl.1} parent=1 // pred_check
      _
    $region51: #{_forward_impl.1} parent=1 // pred_check_branch
      %119 = sbr.rel (0) target = $region53
    $region52: #{_forward_impl.1} parent=1 // pred_region
      _
    $region53: #{_forward_impl.1} parent=1 // pred_fallthru
      _
    // Predicated region
    $region54: #{_forward_impl.1} parent=1 // pred_check
      _
    $region55: #{_forward_impl.1} parent=1 // pred_check_branch
      %121 = sbr.rel (0) target = $region57
    $region56: #{_forward_impl.1} parent=1 // pred_region
      %122 = dma.done [#allocation4], 256
    $region57: #{_forward_impl.1} parent=1 // pred_fallthru
      _
    // Predicated region
    $region58: #{_forward_impl.1} parent=1 // pred_check
      _
    $region59: #{_forward_impl.1} parent=1 // pred_check_branch
      %124 = sbr.rel (0) target = $region61
    $region60: #{_forward_impl.1} parent=1 // pred_region
      %125 = dma.done [#allocation7], 256
    $region61: #{_forward_impl.1} parent=1 // pred_fallthru
      _
    // Predicated region
    $region62: #{_forward_impl.1} parent=1 // pred_check
      _
    $region63: #{_forward_impl.1} parent=1 // pred_check_branch
      %127 = sbr.rel (0) target = $region65
    $region64: #{_forward_impl.1} parent=1 // pred_region
      %128 = dma.done [#allocation7], 512
    $region65: #{_forward_impl.1} parent=1 // pred_fallthru
      _
    // Predicated region
    $region66: #{_forward_impl.1} parent=1 // pred_check
      _
    $region67: #{_forward_impl.1} parent=1 // pred_check_branch
      %130 = sbr.rel (0) target = $region69
    $region68: #{_forward_impl.1} parent=1 // pred_region
      %131 = dma.done [#allocation10], 1024
    $region69: #{_forward_impl.1} parent=1 // pred_fallthru
      _
    // Predicated region
    $region70: #{_forward_impl.1} parent=1 // pred_check
      _
    $region71: #{_forward_impl.1} parent=1 // pred_check_branch
      %133 = sbr.rel (0) target = $region73
    $region72: #{_forward_impl.1} parent=1 // pred_region
      %134 = dma.done [#allocation10], 32
    $region73: #{_forward_impl.1} parent=1 // pred_fallthru
      _
    // Predicated region
    $region74: #{_forward_impl.1} parent=1 // pred_check
      _
    $region75: #{_forward_impl.1} parent=1 // pred_check_branch
      %136 = sbr.rel (0) target = $region77
    $region76: #{_forward_impl.1} parent=1 // pred_region
      %137 = dma.done [#allocation13], 512
    $region77: #{_forward_impl.1} parent=1 // pred_fallthru
      _
    // Predicated region
    $region78: #{_forward_impl.1} parent=1 // pred_check
      _
    $region79: #{_forward_impl.1} parent=1 // pred_check_branch
      %139 = sbr.rel (0) target = $region81
    $region80: #{_forward_impl.1} parent=1 // pred_region
      %140 = dma.done [#allocation13], 512
    $region81: #{_forward_impl.1} parent=1 // pred_fallthru
      _
    %v141 = vld [vmem:[%s2] sm:$0x3]
    %v142 = vld [vmem:[%s2 + $0x2] sm:$0x3]
    %v143 = vld [vmem:[%s3] sm:$0x3]
    %v144 = vld [vmem:[%s3 + $0x2] sm:$0x3]
    %v145 = vld [vmem:[#allocation3] sm:$0xff]
    %v146 = vld [vmem:[#allocation3 + $0x8] sm:$0xff]
    %v147 = vld [vmem:[%s4] sm:$0xff]
    %v148 = vld [vmem:[%s4 + $0x8] sm:$0xff]
    %v149 = vld [vmem:[%s4 + $0x10] sm:$0xff]
    %v150 = vld [vmem:[%s4 + $0x18] sm:$0xff]
    %v151 = vld [vmem:[#allocation11] sm:$0x1]
    %v152 = vlaneseq
    %v153 = vshrl.u32 %v152, 7
    %v154 = vsub.s32 0, %v153
    %v155 = vrot.slane %v151, %v154
    %vm156 = vcmask 261120
    %v158 = vsel %vm156, %v145, 0
    %v161 = vsel %vm156, %v146, 0
    %163 = vmatprep.subr.mxu0 0.0
    %164 = vmatpush1.msra.mxu0 %v147
    %165 = vmatprep.subr.mxu0 0.0
    %166 = vmatpush1.msra.mxu0 %v148
    %167 = vmatprep.subr.mxu0 0.0
    %168 = vmatpush1.msra.mxu0 %v149
    %169 = vmatprep.subr.mxu0 0.0
    %170 = vmatpush1.msra.mxu0 %v150
    %171 = vmatprep.subr.mxu0 0.0
    %172 = vmatpush1.msra.mxu0 0.0
    %173 = vmatprep.subr.mxu0 0.0
    %174 = vmatpush1.msra.mxu0 0.0
    %175 = vmatprep.subr.mxu0 0.0
    %176 = vmatpush1.msra.mxu0 0.0
    %177 = vmatprep.subr.mxu0 0.0
    %178 = vmatpush1.msra.mxu0 0.0
    %179 = vmatprep.subr.mxu0 0.0
    %180 = vmatpush1.msra.mxu0 0.0
    %181 = vmatprep.subr.mxu0 0.0
    %182 = vmatpush1.msra.mxu0 0.0
    %183 = vmatprep.subr.mxu0 0.0
    %184 = vmatpush1.msra.mxu0 0.0
    %185 = vmatprep.subr.mxu0 0.0
    %186 = vmatpush1.msra.mxu0 0.0
    %187 = vmatprep.subr.mxu0 0.0
    %188 = vmatpush1.msra.mxu0 0.0
    %189 = vmatprep.subr.mxu0 0.0
    %190 = vmatpush1.msra.mxu0 0.0
    %191 = vmatprep.subr.mxu0 0.0
    %192 = vmatpush1.msra.mxu0 0.0
    %193 = vmatprep.subr.mxu0 0.0
    %194 = vmatpush1.msra.mxu0 0.0
    %195 = vmatprep.subr.mxu0 0.0
    %196 = vmatpush1.msra.mxu0 0.0
    %197 = vmatprep.subr.mxu0 0.0
    %198 = vmatpush1.msra.mxu0 0.0
    %199 = vmatprep.subr.mxu0 0.0
    %200 = vmatpush1.msra.mxu0 0.0
    %201 = vmatprep.subr.mxu0 0.0
    %202 = vmatpush1.msra.mxu0 0.0
    %203 = vmatprep.subr.mxu0 0.0
    %204 = vmatpush1.msra.mxu0 0.0
    %205 = vmatprep.subr.mxu0 0.0
    %206 = vmatpush1.msra.mxu0 0.0
    %207 = vmatprep.subr.mxu0 0.0
    %208 = vmatpush1.msra.mxu0 0.0
    %209 = vmatprep.subr.mxu0 0.0
    %210 = vmatpush1.msra.mxu0 0.0
    %211 = vmatprep.subr.mxu0 0.0
    %212 = vmatpush1.msra.mxu0 0.0
    %213 = vmatprep.subr.mxu0 0.0
    %214 = vmatpush1.msra.mxu0 0.0
    %215 = vmatprep.subr.mxu0 0.0
    %216 = vmatpush1.msra.mxu0 0.0
    %217 = vmatprep.subr.mxu0 0.0
    %218 = vmatpush1.msra.mxu0 0.0
    %219 = vmatprep.subr.mxu0 0.0
    %220 = vmatpush1.msra.mxu0 0.0
    %221 = vmatprep.subr.mxu0 0.0
    %222 = vmatpush1.msra.mxu0 0.0
    %223 = vmatprep.subr.mxu0 0.0
    %224 = vmatpush1.msra.mxu0 0.0
    %225 = vmatprep.subr.mxu0 0.0
    %226 = vmatpush1.msra.mxu0 0.0
    %227 = vmatprep.mubr.f32.mxu0 0.0
    %228 = vmatmul.mubr.f32.gmra.mrb[0].mxu0 %v158
    %v229 = vpop.f32.mrb[0].mxu0
    %v230 = vadd.f32 %v155, %v229
    %v231 = vpop.f32.mrb[0].mxu0
    %232 = vmatprep.mubr.f32.mxu0 0.0
    %233 = vmatmul.mubr.f32.gmra.mrb[0].mxu0 %v161
    %v234 = vpop.f32.mrb[0].mxu0
    %v235 = vadd.f32 %v155, %v234
    %v236 = vpop.f32.mrb[0].mxu0
    %237 = vdwg.mxu0
    %v238 = vld [vmem:[#allocation9] sm:$0xff]
    %v239 = vld [vmem:[#allocation9 + $0x8] sm:$0xff]
    %v240 = vld [vmem:[#allocation9 + $0x10] sm:$0xff]
    %v241 = vld [vmem:[#allocation9 + $0x18] sm:$0xff]
    %v244 = vrot.slane %v142, 7
    %vm245 = vcmask 1041409
    %v246 = vsel %vm245, %v244, %v141
    %v247 = vsel %vm156, %v246, 0
    %249 = vmatprep.subr.mxu0 0.0
    %250 = vmatpush1.msra.mxu0 %v238
    %251 = vmatprep.subr.mxu0 0.0
    %252 = vmatpush1.msra.mxu0 %v239
    %253 = vmatprep.subr.mxu0 0.0
    %254 = vmatpush1.msra.mxu0 %v240
    %255 = vmatprep.subr.mxu0 0.0
    %256 = vmatpush1.msra.mxu0 %v241
    %257 = vmatprep.subr.mxu0 0.0
    %258 = vmatpush1.msra.mxu0 0.0
    %259 = vmatprep.subr.mxu0 0.0
    %260 = vmatpush1.msra.mxu0 0.0
    %261 = vmatprep.subr.mxu0 0.0
    %262 = vmatpush1.msra.mxu0 0.0
    %263 = vmatprep.subr.mxu0 0.0
    %264 = vmatpush1.msra.mxu0 0.0
    %265 = vmatprep.subr.mxu0 0.0
    %266 = vmatpush1.msra.mxu0 0.0
    %267 = vmatprep.subr.mxu0 0.0
    %268 = vmatpush1.msra.mxu0 0.0
    %269 = vmatprep.subr.mxu0 0.0
    %270 = vmatpush1.msra.mxu0 0.0
    %271 = vmatprep.subr.mxu0 0.0
    %272 = vmatpush1.msra.mxu0 0.0
    %273 = vmatprep.subr.mxu0 0.0
    %274 = vmatpush1.msra.mxu0 0.0
    %275 = vmatprep.subr.mxu0 0.0
    %276 = vmatpush1.msra.mxu0 0.0
    %277 = vmatprep.subr.mxu0 0.0
    %278 = vmatpush1.msra.mxu0 0.0
    %279 = vmatprep.subr.mxu0 0.0
    %280 = vmatpush1.msra.mxu0 0.0
    %281 = vmatprep.subr.mxu0 0.0
    %282 = vmatpush1.msra.mxu0 0.0
    %283 = vmatprep.subr.mxu0 0.0
    %284 = vmatpush1.msra.mxu0 0.0
    %285 = vmatprep.subr.mxu0 0.0
    %286 = vmatpush1.msra.mxu0 0.0
    %287 = vmatprep.subr.mxu0 0.0
    %288 = vmatpush1.msra.mxu0 0.0
    %289 = vmatprep.subr.mxu0 0.0
    %290 = vmatpush1.msra.mxu0 0.0
    %291 = vmatprep.subr.mxu0 0.0
    %292 = vmatpush1.msra.mxu0 0.0
    %293 = vmatprep.subr.mxu0 0.0
    %294 = vmatpush1.msra.mxu0 0.0
    %295 = vmatprep.subr.mxu0 0.0
    %296 = vmatpush1.msra.mxu0 0.0
    %297 = vmatprep.subr.mxu0 0.0
    %298 = vmatpush1.msra.mxu0 0.0
    %299 = vmatprep.subr.mxu0 0.0
    %300 = vmatpush1.msra.mxu0 0.0
    %301 = vmatprep.subr.mxu0 0.0
    %302 = vmatpush1.msra.mxu0 0.0
    %303 = vmatprep.subr.mxu0 0.0
    %304 = vmatpush1.msra.mxu0 0.0
    %305 = vmatprep.subr.mxu0 0.0
    %306 = vmatpush1.msra.mxu0 0.0
    %307 = vmatprep.subr.mxu0 0.0
    %308 = vmatpush1.msra.mxu0 0.0
    %309 = vmatprep.subr.mxu0 0.0
    %310 = vmatpush1.msra.mxu0 0.0
    %311 = vmatprep.subr.mxu0 0.0
    %312 = vmatpush1.msra.mxu0 0.0
    %313 = vmatprep.mubr.f32.mxu0 0.0
    %314 = vmatmul.mubr.f32.gmra.mrb[0].mxu0 %v247
    %v315 = vpop.f32.mrb[0].mxu0
    %v316 = vadd.f32 0.0, %v315
    %v317 = vpop.f32.mrb[0].mxu0
    %318 = vdwg.mxu0
    %v320 = vrot.slane %v316, 1
    %v323 = vadd.f32 %v230, %v316
    %v324 = vadd.f32 %v235, %v320
    %v325 = vsub.f32 0.0, %v323
    %v326 = vsub.f32 0.0, %v324
    %v327 = vmul.f32 %v325, 1.442695
    %v328 = vpow.pop %v327
    %v329 = vmul.f32 %v326, 1.442695
    %v330 = vpow.pop %v329
    %v331 = vadd.f32 %v328, 1.0
    %v332 = vadd.f32 %v330, 1.0
    %v333 = vrcp.pop %v331
    %v334 = vrcp.pop %v332
    %v335 = vtanh.pop %v323
    %v336 = vtanh.pop %v324
    %339 = vrot.lane.b32.xlu0 %v143, 32
    %v340 = vpop.permute.xlu0 %339
    %341 = vrot.lane.b32.xlu0 %v144, 32
    %v342 = vpop.permute.xlu0 %341
    %v345 = vmul.f32 %v333, %v340
    %v346 = vmul.f32 %v334, %v342
    %349 = vrot.lane.b32.xlu0 %v335, 64
    %v350 = vpop.permute.xlu0 %349
    %351 = vrot.lane.b32.xlu0 %v336, 64
    %v352 = vpop.permute.xlu0 %351
    %v355 = vmul.f32 %v333, %v350
    %v356 = vmul.f32 %v334, %v352
    %359 = vrot.lane.b32.xlu0 %v355, 32
    %v360 = vpop.permute.xlu0 %359
    %361 = vrot.lane.b32.xlu0 %v356, 32
    %v362 = vpop.permute.xlu0 %361
    %v365 = vadd.f32 %v345, %v360
    %v366 = vadd.f32 %v346, %v362
    %v367 = vtanh.pop %v365
    %v368 = vtanh.pop %v366
    %371 = vrot.lane.b32.xlu0 %v367, 64
    %v372 = vpop.permute.xlu0 %371
    %373 = vrot.lane.b32.xlu0 %v368, 64
    %v374 = vpop.permute.xlu0 %373
    %v377 = vmul.f32 %v333, %v372
    %v378 = vmul.f32 %v334, %v374
    %381 = vrot.lane.b32.xlu0 %v377, 32
    %v382 = vpop.permute.xlu0 %381
    %383 = vrot.lane.b32.xlu0 %v378, 32
    %v384 = vpop.permute.xlu0 %383
    %vm387 = vcmask 253952
    %388 = vst.msk [vmem:[#allocation2] sm:$0x1] %vm387, %v382
    %389 = vst.msk [vmem:[#allocation2 + $0x8] sm:$0x1] %vm387, %v384
    %v390 = vrot.slane %v378, 7
    %v391 = vsel %vm245, %v390, %v377
    %392 = vrot.lane.b32.xlu0 %v391, 32
    %v393 = vpop.permute.xlu0 %392
    %v394 = vsel %vm156, %v393, 0
    %396 = vmatprep.subr.mxu0 0.0
    %397 = vmatpush1.msra.mxu0 %v238
    %398 = vmatprep.subr.mxu0 0.0
    %399 = vmatpush1.msra.mxu0 %v239
    %400 = vmatprep.subr.mxu0 0.0
    %401 = vmatpush1.msra.mxu0 %v240
    %402 = vmatprep.subr.mxu0 0.0
    %403 = vmatpush1.msra.mxu0 %v241
    %404 = vmatprep.subr.mxu0 0.0
    %405 = vmatpush1.msra.mxu0 0.0
    %406 = vmatprep.subr.mxu0 0.0
    %407 = vmatpush1.msra.mxu0 0.0
    %408 = vmatprep.subr.mxu0 0.0
    %409 = vmatpush1.msra.mxu0 0.0
    %410 = vmatprep.subr.mxu0 0.0
    %411 = vmatpush1.msra.mxu0 0.0
    %412 = vmatprep.subr.mxu0 0.0
    %413 = vmatpush1.msra.mxu0 0.0
    %414 = vmatprep.subr.mxu0 0.0
    %415 = vmatpush1.msra.mxu0 0.0
    %416 = vmatprep.subr.mxu0 0.0
    %417 = vmatpush1.msra.mxu0 0.0
    %418 = vmatprep.subr.mxu0 0.0
    %419 = vmatpush1.msra.mxu0 0.0
    %420 = vmatprep.subr.mxu0 0.0
    %421 = vmatpush1.msra.mxu0 0.0
    %422 = vmatprep.subr.mxu0 0.0
    %423 = vmatpush1.msra.mxu0 0.0
    %424 = vmatprep.subr.mxu0 0.0
    %425 = vmatpush1.msra.mxu0 0.0
    %426 = vmatprep.subr.mxu0 0.0
    %427 = vmatpush1.msra.mxu0 0.0
    %428 = vmatprep.subr.mxu0 0.0
    %429 = vmatpush1.msra.mxu0 0.0
    %430 = vmatprep.subr.mxu0 0.0
    %431 = vmatpush1.msra.mxu0 0.0
    %432 = vmatprep.subr.mxu0 0.0
    %433 = vmatpush1.msra.mxu0 0.0
    %434 = vmatprep.subr.mxu0 0.0
    %435 = vmatpush1.msra.mxu0 0.0
    %436 = vmatprep.subr.mxu0 0.0
    %437 = vmatpush1.msra.mxu0 0.0
    %438 = vmatprep.subr.mxu0 0.0
    %439 = vmatpush1.msra.mxu0 0.0
    %440 = vmatprep.subr.mxu0 0.0
    %441 = vmatpush1.msra.mxu0 0.0
    %442 = vmatprep.subr.mxu0 0.0
    %443 = vmatpush1.msra.mxu0 0.0
    %444 = vmatprep.subr.mxu0 0.0
    %445 = vmatpush1.msra.mxu0 0.0
    %446 = vmatprep.subr.mxu0 0.0
    %447 = vmatpush1.msra.mxu0 0.0
    %448 = vmatprep.subr.mxu0 0.0
    %449 = vmatpush1.msra.mxu0 0.0
    %450 = vmatprep.subr.mxu0 0.0
    %451 = vmatpush1.msra.mxu0 0.0
    %452 = vmatprep.subr.mxu0 0.0
    %453 = vmatpush1.msra.mxu0 0.0
    %454 = vmatprep.subr.mxu0 0.0
    %455 = vmatpush1.msra.mxu0 0.0
    %456 = vmatprep.subr.mxu0 0.0
    %457 = vmatpush1.msra.mxu0 0.0
    %458 = vmatprep.subr.mxu0 0.0
    %459 = vmatpush1.msra.mxu0 0.0
    %460 = vmatprep.mubr.f32.mxu0 0.0
    %461 = vmatmul.mubr.f32.gmra.mrb[0].mxu0 %v394
    %v462 = vpop.f32.mrb[0].mxu0
    %v463 = vadd.f32 0.0, %v462
    %v464 = vpop.f32.mrb[0].mxu0
    %465 = vdwg.mxu0
    %v467 = vrot.slane %v463, 7
    %v470 = vadd.f32 %v230, %v467
    %v471 = vadd.f32 %v235, %v463
    %v472 = vsub.f32 0.0, %v470
    %v473 = vsub.f32 0.0, %v471
    %v474 = vmul.f32 %v472, 1.442695
    %v475 = vpow.pop %v474
    %v476 = vmul.f32 %v473, 1.442695
    %v477 = vpow.pop %v476
    %v478 = vadd.f32 %v475, 1.0
    %v479 = vadd.f32 %v477, 1.0
    %v480 = vrcp.pop %v478
    %v481 = vrcp.pop %v479
    %v482 = vtanh.pop %v470
    %v483 = vtanh.pop %v471
    %v486 = vrot.slane %v365, 7
    %v487 = vrot.slane %v366, 7
    %v490 = vmul.f32 %v480, %v486
    %v491 = vmul.f32 %v481, %v487
    %494 = vrot.lane.b32.xlu0 %v482, 64
    %v495 = vpop.permute.xlu0 %494
    %496 = vrot.lane.b32.xlu0 %v483, 64
    %v497 = vpop.permute.xlu0 %496
    %v500 = vmul.f32 %v480, %v495
    %v501 = vmul.f32 %v481, %v497
    %504 = vrot.lane.b32.xlu0 %v500, 32
    %v505 = vpop.permute.xlu0 %504
    %506 = vrot.lane.b32.xlu0 %v501, 32
    %v507 = vpop.permute.xlu0 %506
    %v510 = vadd.f32 %v490, %v505
    %v511 = vadd.f32 %v491, %v507
    %v512 = vtanh.pop %v510
    %v513 = vtanh.pop %v511
    %516 = vrot.lane.b32.xlu0 %v512, 64
    %v517 = vpop.permute.xlu0 %516
    %518 = vrot.lane.b32.xlu0 %v513, 64
    %v519 = vpop.permute.xlu0 %518
    %v522 = vmul.f32 %v480, %v517
    %v523 = vmul.f32 %v481, %v519
    %526 = vrot.lane.b32.xlu0 %v522, 32
    %v527 = vpop.permute.xlu0 %526
    %528 = vrot.lane.b32.xlu0 %v523, 32
    %v529 = vpop.permute.xlu0 %528
    %vm532 = vcmask 254977
    %533 = vst.msk [vmem:[#allocation2] sm:$0x2] %vm532, %v527
    %534 = vst.msk [vmem:[#allocation2 + $0x8] sm:$0x2] %vm532, %v529
    %v535 = vrot.slane %v522, 1
    %v536 = vsel %vm245, %v523, %v535
    %537 = vrot.lane.b32.xlu0 %v536, 32
    %v538 = vpop.permute.xlu0 %537
    %v539 = vsel %vm156, %v538, 0
    %541 = vmatprep.subr.mxu0 0.0
    %542 = vmatpush1.msra.mxu0 %v238
    %543 = vmatprep.subr.mxu0 0.0
    %544 = vmatpush1.msra.mxu0 %v239
    %545 = vmatprep.subr.mxu0 0.0
    %546 = vmatpush1.msra.mxu0 %v240
    %547 = vmatprep.subr.mxu0 0.0
    %548 = vmatpush1.msra.mxu0 %v241
    %549 = vmatprep.subr.mxu0 0.0
    %550 = vmatpush1.msra.mxu0 0.0
    %551 = vmatprep.subr.mxu0 0.0
    %552 = vmatpush1.msra.mxu0 0.0
    %553 = vmatprep.subr.mxu0 0.0
    %554 = vmatpush1.msra.mxu0 0.0
    %555 = vmatprep.subr.mxu0 0.0
    %556 = vmatpush1.msra.mxu0 0.0
    %557 = vmatprep.subr.mxu0 0.0
    %558 = vmatpush1.msra.mxu0 0.0
    %559 = vmatprep.subr.mxu0 0.0
    %560 = vmatpush1.msra.mxu0 0.0
    %561 = vmatprep.subr.mxu0 0.0
    %562 = vmatpush1.msra.mxu0 0.0
    %563 = vmatprep.subr.mxu0 0.0
    %564 = vmatpush1.msra.mxu0 0.0
    %565 = vmatprep.subr.mxu0 0.0
    %566 = vmatpush1.msra.mxu0 0.0
    %567 = vmatprep.subr.mxu0 0.0
    %568 = vmatpush1.msra.mxu0 0.0
    %569 = vmatprep.subr.mxu0 0.0
    %570 = vmatpush1.msra.mxu0 0.0
    %571 = vmatprep.subr.mxu0 0.0
    %572 = vmatpush1.msra.mxu0 0.0
    %573 = vmatprep.subr.mxu0 0.0
    %574 = vmatpush1.msra.mxu0 0.0
    %575 = vmatprep.subr.mxu0 0.0
    %576 = vmatpush1.msra.mxu0 0.0
    %577 = vmatprep.subr.mxu0 0.0
    %578 = vmatpush1.msra.mxu0 0.0
    %579 = vmatprep.subr.mxu0 0.0
    %580 = vmatpush1.msra.mxu0 0.0
    %581 = vmatprep.subr.mxu0 0.0
    %582 = vmatpush1.msra.mxu0 0.0
    %583 = vmatprep.subr.mxu0 0.0
    %584 = vmatpush1.msra.mxu0 0.0
    %585 = vmatprep.subr.mxu0 0.0
    %586 = vmatpush1.msra.mxu0 0.0
    %587 = vmatprep.subr.mxu0 0.0
    %588 = vmatpush1.msra.mxu0 0.0
    %589 = vmatprep.subr.mxu0 0.0
    %590 = vmatpush1.msra.mxu0 0.0
    %591 = vmatprep.subr.mxu0 0.0
    %592 = vmatpush1.msra.mxu0 0.0
    %593 = vmatprep.subr.mxu0 0.0
    %594 = vmatpush1.msra.mxu0 0.0
    %595 = vmatprep.subr.mxu0 0.0
    %596 = vmatpush1.msra.mxu0 0.0
    %597 = vmatprep.subr.mxu0 0.0
    %598 = vmatpush1.msra.mxu0 0.0
    %599 = vmatprep.subr.mxu0 0.0
    %600 = vmatpush1.msra.mxu0 0.0
    %601 = vmatprep.subr.mxu0 0.0
    %602 = vmatpush1.msra.mxu0 0.0
    %603 = vmatprep.subr.mxu0 0.0
    %604 = vmatpush1.msra.mxu0 0.0
    %605 = vmatprep.mubr.f32.mxu0 0.0
    %606 = vmatmul.mubr.f32.gmra.mrb[0].mxu0 %v539
    %v607 = vpop.f32.mrb[0].mxu0
    %v608 = vadd.f32 0.0, %v607
    %v609 = vpop.f32.mrb[0].mxu0
    %610 = vdwg.mxu0
    %v612 = vrot.slane %v608, 6
    %v613 = vrot.slane %v608, 7
    %v616 = vadd.f32 %v230, %v612
    %v617 = vadd.f32 %v235, %v613
    %v618 = vsub.f32 0.0, %v616
    %v619 = vsub.f32 0.0, %v617
    %v620 = vmul.f32 %v618, 1.442695
    %v621 = vpow.pop %v620
    %v622 = vmul.f32 %v619, 1.442695
    %v623 = vpow.pop %v622
    %v624 = vadd.f32 %v621, 1.0
    %v625 = vadd.f32 %v623, 1.0
    %v626 = vrcp.pop %v624
    %v627 = vrcp.pop %v625
    %v628 = vtanh.pop %v616
    %v629 = vtanh.pop %v617
    %v632 = vrot.slane %v510, 7
    %v633 = vrot.slane %v511, 7
    %v636 = vmul.f32 %v626, %v632
    %v637 = vmul.f32 %v627, %v633
    %640 = vrot.lane.b32.xlu0 %v628, 64
    %v641 = vpop.permute.xlu0 %640
    %642 = vrot.lane.b32.xlu0 %v629, 64
    %v643 = vpop.permute.xlu0 %642
    %v646 = vmul.f32 %v626, %v641
    %v647 = vmul.f32 %v627, %v643
    %650 = vrot.lane.b32.xlu0 %v646, 32
    %v651 = vpop.permute.xlu0 %650
    %652 = vrot.lane.b32.xlu0 %v647, 32
    %v653 = vpop.permute.xlu0 %652
    %v656 = vadd.f32 %v636, %v651
    %v657 = vadd.f32 %v637, %v653
    %v658 = vtanh.pop %v656
    %v659 = vtanh.pop %v657
    %662 = vrot.lane.b32.xlu0 %v658, 64
    %v663 = vpop.permute.xlu0 %662
    %664 = vrot.lane.b32.xlu0 %v659, 64
    %v665 = vpop.permute.xlu0 %664
    %v668 = vmul.f32 %v626, %v663
    %v669 = vmul.f32 %v627, %v665
    %672 = vrot.lane.b32.xlu0 %v668, 32
    %v673 = vpop.permute.xlu0 %672
    %674 = vrot.lane.b32.xlu0 %v669, 32
    %v675 = vpop.permute.xlu0 %674
    %vm678 = vcmask 256002
    %679 = vst.msk [vmem:[#allocation2] sm:$0x4] %vm678, %v673
    %680 = vst.msk [vmem:[#allocation2 + $0x8] sm:$0x4] %vm678, %v675
    %v681 = vrot.slane %v668, 2
    %v682 = vrot.slane %v669, 1
    %v683 = vsel %vm245, %v682, %v681
    %684 = vrot.lane.b32.xlu0 %v683, 32
    %v685 = vpop.permute.xlu0 %684
    %v686 = vsel %vm156, %v685, 0
    %688 = vmatprep.subr.mxu0 0.0
    %689 = vmatpush1.msra.mxu0 %v238
    %690 = vmatprep.subr.mxu0 0.0
    %691 = vmatpush1.msra.mxu0 %v239
    %692 = vmatprep.subr.mxu0 0.0
    %693 = vmatpush1.msra.mxu0 %v240
    %694 = vmatprep.subr.mxu0 0.0
    %695 = vmatpush1.msra.mxu0 %v241
    %696 = vmatprep.subr.mxu0 0.0
    %697 = vmatpush1.msra.mxu0 0.0
    %698 = vmatprep.subr.mxu0 0.0
    %699 = vmatpush1.msra.mxu0 0.0
    %700 = vmatprep.subr.mxu0 0.0
    %701 = vmatpush1.msra.mxu0 0.0
    %702 = vmatprep.subr.mxu0 0.0
    %703 = vmatpush1.msra.mxu0 0.0
    %704 = vmatprep.subr.mxu0 0.0
    %705 = vmatpush1.msra.mxu0 0.0
    %706 = vmatprep.subr.mxu0 0.0
    %707 = vmatpush1.msra.mxu0 0.0
    %708 = vmatprep.subr.mxu0 0.0
    %709 = vmatpush1.msra.mxu0 0.0
    %710 = vmatprep.subr.mxu0 0.0
    %711 = vmatpush1.msra.mxu0 0.0
    %712 = vmatprep.subr.mxu0 0.0
    %713 = vmatpush1.msra.mxu0 0.0
    %714 = vmatprep.subr.mxu0 0.0
    %715 = vmatpush1.msra.mxu0 0.0
    %716 = vmatprep.subr.mxu0 0.0
    %717 = vmatpush1.msra.mxu0 0.0
    %718 = vmatprep.subr.mxu0 0.0
    %719 = vmatpush1.msra.mxu0 0.0
    %720 = vmatprep.subr.mxu0 0.0
    %721 = vmatpush1.msra.mxu0 0.0
    %722 = vmatprep.subr.mxu0 0.0
    %723 = vmatpush1.msra.mxu0 0.0
    %724 = vmatprep.subr.mxu0 0.0
    %725 = vmatpush1.msra.mxu0 0.0
    %726 = vmatprep.subr.mxu0 0.0
    %727 = vmatpush1.msra.mxu0 0.0
    %728 = vmatprep.subr.mxu0 0.0
    %729 = vmatpush1.msra.mxu0 0.0
    %730 = vmatprep.subr.mxu0 0.0
    %731 = vmatpush1.msra.mxu0 0.0
    %732 = vmatprep.subr.mxu0 0.0
    %733 = vmatpush1.msra.mxu0 0.0
    %734 = vmatprep.subr.mxu0 0.0
    %735 = vmatpush1.msra.mxu0 0.0
    %736 = vmatprep.subr.mxu0 0.0
    %737 = vmatpush1.msra.mxu0 0.0
    %738 = vmatprep.subr.mxu0 0.0
    %739 = vmatpush1.msra.mxu0 0.0
    %740 = vmatprep.subr.mxu0 0.0
    %741 = vmatpush1.msra.mxu0 0.0
    %742 = vmatprep.subr.mxu0 0.0
    %743 = vmatpush1.msra.mxu0 0.0
    %744 = vmatprep.subr.mxu0 0.0
    %745 = vmatpush1.msra.mxu0 0.0
    %746 = vmatprep.subr.mxu0 0.0
    %747 = vmatpush1.msra.mxu0 0.0
    %748 = vmatprep.subr.mxu0 0.0
    %749 = vmatpush1.msra.mxu0 0.0
    %750 = vmatprep.subr.mxu0 0.0
    %751 = vmatpush1.msra.mxu0 0.0
    %752 = vmatprep.mubr.f32.mxu0 0.0
    %753 = vmatmul.mubr.f32.gmra.mrb[0].mxu0 %v686
    %v754 = vpop.f32.mrb[0].mxu0
    %v755 = vadd.f32 0.0, %v754
    %v756 = vpop.f32.mrb[0].mxu0
    %757 = vdwg.mxu0
    %v759 = vrot.slane %v755, 5
    %v760 = vrot.slane %v755, 6
    %v763 = vadd.f32 %v230, %v759
    %v764 = vadd.f32 %v235, %v760
    %v765 = vsub.f32 0.0, %v763
    %v766 = vsub.f32 0.0, %v764
    %v767 = vmul.f32 %v765, 1.442695
    %v768 = vpow.pop %v767
    %v769 = vmul.f32 %v766, 1.442695
    %v770 = vpow.pop %v769
    %v771 = vadd.f32 %v768, 1.0
    %v772 = vadd.f32 %v770, 1.0
    %v773 = vrcp.pop %v771
    %v774 = vrcp.pop %v772
    %v775 = vtanh.pop %v763
    %v776 = vtanh.pop %v764
    %v779 = vrot.slane %v656, 7
    %v780 = vrot.slane %v657, 7
    %v783 = vmul.f32 %v773, %v779
    %v784 = vmul.f32 %v774, %v780
    %787 = vrot.lane.b32.xlu0 %v775, 64
    %v788 = vpop.permute.xlu0 %787
    %789 = vrot.lane.b32.xlu0 %v776, 64
    %v790 = vpop.permute.xlu0 %789
    %v793 = vmul.f32 %v773, %v788
    %v794 = vmul.f32 %v774, %v790
    %797 = vrot.lane.b32.xlu0 %v793, 32
    %v798 = vpop.permute.xlu0 %797
    %799 = vrot.lane.b32.xlu0 %v794, 32
    %v800 = vpop.permute.xlu0 %799
    %v803 = vadd.f32 %v783, %v798
    %v804 = vadd.f32 %v784, %v800
    %v805 = vtanh.pop %v803
    %v806 = vtanh.pop %v804
    %809 = vrot.lane.b32.xlu0 %v805, 64
    %v810 = vpop.permute.xlu0 %809
    %811 = vrot.lane.b32.xlu0 %v806, 64
    %v812 = vpop.permute.xlu0 %811
    %v815 = vmul.f32 %v773, %v810
    %v816 = vmul.f32 %v774, %v812
    %819 = vrot.lane.b32.xlu0 %v815, 32
    %v820 = vpop.permute.xlu0 %819
    %821 = vrot.lane.b32.xlu0 %v816, 32
    %v822 = vpop.permute.xlu0 %821
    %vm825 = vcmask 257027
    %826 = vst.msk [vmem:[#allocation2] sm:$0x8] %vm825, %v820
    %827 = vst.msk [vmem:[#allocation2 + $0x8] sm:$0x8] %vm825, %v822
    %v828 = vrot.slane %v815, 3
    %v829 = vrot.slane %v816, 2
    %v830 = vsel %vm245, %v829, %v828
    %831 = vrot.lane.b32.xlu0 %v830, 32
    %v832 = vpop.permute.xlu0 %831
    %v833 = vsel %vm156, %v832, 0
    %835 = vmatprep.subr.mxu0 0.0
    %836 = vmatpush1.msra.mxu0 %v238
    %837 = vmatprep.subr.mxu0 0.0
    %838 = vmatpush1.msra.mxu0 %v239
    %839 = vmatprep.subr.mxu0 0.0
    %840 = vmatpush1.msra.mxu0 %v240
    %841 = vmatprep.subr.mxu0 0.0
    %842 = vmatpush1.msra.mxu0 %v241
    %843 = vmatprep.subr.mxu0 0.0
    %844 = vmatpush1.msra.mxu0 0.0
    %845 = vmatprep.subr.mxu0 0.0
    %846 = vmatpush1.msra.mxu0 0.0
    %847 = vmatprep.subr.mxu0 0.0
    %848 = vmatpush1.msra.mxu0 0.0
    %849 = vmatprep.subr.mxu0 0.0
    %850 = vmatpush1.msra.mxu0 0.0
    %851 = vmatprep.subr.mxu0 0.0
    %852 = vmatpush1.msra.mxu0 0.0
    %853 = vmatprep.subr.mxu0 0.0
    %854 = vmatpush1.msra.mxu0 0.0
    %855 = vmatprep.subr.mxu0 0.0
    %856 = vmatpush1.msra.mxu0 0.0
    %857 = vmatprep.subr.mxu0 0.0
    %858 = vmatpush1.msra.mxu0 0.0
    %859 = vmatprep.subr.mxu0 0.0
    %860 = vmatpush1.msra.mxu0 0.0
    %861 = vmatprep.subr.mxu0 0.0
    %862 = vmatpush1.msra.mxu0 0.0
    %863 = vmatprep.subr.mxu0 0.0
    %864 = vmatpush1.msra.mxu0 0.0
    %865 = vmatprep.subr.mxu0 0.0
    %866 = vmatpush1.msra.mxu0 0.0
    %867 = vmatprep.subr.mxu0 0.0
    %868 = vmatpush1.msra.mxu0 0.0
    %869 = vmatprep.subr.mxu0 0.0
    %870 = vmatpush1.msra.mxu0 0.0
    %871 = vmatprep.subr.mxu0 0.0
    %872 = vmatpush1.msra.mxu0 0.0
    %873 = vmatprep.subr.mxu0 0.0
    %874 = vmatpush1.msra.mxu0 0.0
    %875 = vmatprep.subr.mxu0 0.0
    %876 = vmatpush1.msra.mxu0 0.0
    %877 = vmatprep.subr.mxu0 0.0
    %878 = vmatpush1.msra.mxu0 0.0
    %879 = vmatprep.subr.mxu0 0.0
    %880 = vmatpush1.msra.mxu0 0.0
    %881 = vmatprep.subr.mxu0 0.0
    %882 = vmatpush1.msra.mxu0 0.0
    %883 = vmatprep.subr.mxu0 0.0
    %884 = vmatpush1.msra.mxu0 0.0
    %885 = vmatprep.subr.mxu0 0.0
    %886 = vmatpush1.msra.mxu0 0.0
    %887 = vmatprep.subr.mxu0 0.0
    %888 = vmatpush1.msra.mxu0 0.0
    %889 = vmatprep.subr.mxu0 0.0
    %890 = vmatpush1.msra.mxu0 0.0
    %891 = vmatprep.subr.mxu0 0.0
    %892 = vmatpush1.msra.mxu0 0.0
    %893 = vmatprep.subr.mxu0 0.0
    %894 = vmatpush1.msra.mxu0 0.0
    %895 = vmatprep.subr.mxu0 0.0
    %896 = vmatpush1.msra.mxu0 0.0
    %897 = vmatprep.subr.mxu0 0.0
    %898 = vmatpush1.msra.mxu0 0.0
    %899 = vmatprep.mubr.f32.mxu0 0.0
    %900 = vmatmul.mubr.f32.gmra.mrb[0].mxu0 %v833
    %v901 = vpop.f32.mrb[0].mxu0
    %v902 = vadd.f32 0.0, %v901
    %v903 = vpop.f32.mrb[0].mxu0
    %904 = vdwg.mxu0
    %v906 = vrot.slane %v902, 4
    %v907 = vrot.slane %v902, 5
    %v910 = vadd.f32 %v230, %v906
    %v911 = vadd.f32 %v235, %v907
    %v912 = vsub.f32 0.0, %v910
    %v913 = vsub.f32 0.0, %v911
    %v914 = vmul.f32 %v912, 1.442695
    %v915 = vpow.pop %v914
    %v916 = vmul.f32 %v913, 1.442695
    %v917 = vpow.pop %v916
    %v918 = vadd.f32 %v915, 1.0
    %v919 = vadd.f32 %v917, 1.0
    %v920 = vrcp.pop %v918
    %v921 = vrcp.pop %v919
    %v922 = vtanh.pop %v910
    %v923 = vtanh.pop %v911
    %v926 = vrot.slane %v803, 7
    %v927 = vrot.slane %v804, 7
    %v930 = vmul.f32 %v920, %v926
    %v931 = vmul.f32 %v921, %v927
    %934 = vrot.lane.b32.xlu0 %v922, 64
    %v935 = vpop.permute.xlu0 %934
    %936 = vrot.lane.b32.xlu0 %v923, 64
    %v937 = vpop.permute.xlu0 %936
    %v940 = vmul.f32 %v920, %v935
    %v941 = vmul.f32 %v921, %v937
    %944 = vrot.lane.b32.xlu0 %v940, 32
    %v945 = vpop.permute.xlu0 %944
    %946 = vrot.lane.b32.xlu0 %v941, 32
    %v947 = vpop.permute.xlu0 %946
    %v950 = vadd.f32 %v930, %v945
    %v951 = vadd.f32 %v931, %v947
    %v952 = vtanh.pop %v950
    %v953 = vtanh.pop %v951
    %956 = vrot.lane.b32.xlu0 %v952, 64
    %v957 = vpop.permute.xlu0 %956
    %958 = vrot.lane.b32.xlu0 %v953, 64
    %v959 = vpop.permute.xlu0 %958
    %v962 = vmul.f32 %v920, %v957
    %v963 = vmul.f32 %v921, %v959
    %966 = vrot.lane.b32.xlu0 %v962, 32
    %v967 = vpop.permute.xlu0 %966
    %968 = vrot.lane.b32.xlu0 %v963, 32
    %v969 = vpop.permute.xlu0 %968
    %vm972 = vcmask 258052
    %973 = vst.msk [vmem:[#allocation2] sm:$0x10] %vm972, %v967
    %974 = vst.msk [vmem:[#allocation2 + $0x8] sm:$0x10] %vm972, %v969
    %v975 = vrot.slane %v962, 4
    %v976 = vrot.slane %v963, 3
    %v977 = vsel %vm245, %v976, %v975
    %978 = vrot.lane.b32.xlu0 %v977, 32
    %v979 = vpop.permute.xlu0 %978
    %v980 = vsel %vm156, %v979, 0
    %982 = vmatprep.subr.mxu0 0.0
    %983 = vmatpush1.msra.mxu0 %v238
    %984 = vmatprep.subr.mxu0 0.0
    %985 = vmatpush1.msra.mxu0 %v239
    %986 = vmatprep.subr.mxu0 0.0
    %987 = vmatpush1.msra.mxu0 %v240
    %988 = vmatprep.subr.mxu0 0.0
    %989 = vmatpush1.msra.mxu0 %v241
    %990 = vmatprep.subr.mxu0 0.0
    %991 = vmatpush1.msra.mxu0 0.0
    %992 = vmatprep.subr.mxu0 0.0
    %993 = vmatpush1.msra.mxu0 0.0
    %994 = vmatprep.subr.mxu0 0.0
    %995 = vmatpush1.msra.mxu0 0.0
    %996 = vmatprep.subr.mxu0 0.0
    %997 = vmatpush1.msra.mxu0 0.0
    %998 = vmatprep.subr.mxu0 0.0
    %999 = vmatpush1.msra.mxu0 0.0
    %1000 = vmatprep.subr.mxu0 0.0
    %1001 = vmatpush1.msra.mxu0 0.0
    %1002 = vmatprep.subr.mxu0 0.0
    %1003 = vmatpush1.msra.mxu0 0.0
    %1004 = vmatprep.subr.mxu0 0.0
    %1005 = vmatpush1.msra.mxu0 0.0
    %1006 = vmatprep.subr.mxu0 0.0
    %1007 = vmatpush1.msra.mxu0 0.0
    %1008 = vmatprep.subr.mxu0 0.0
    %1009 = vmatpush1.msra.mxu0 0.0
    %1010 = vmatprep.subr.mxu0 0.0
    %1011 = vmatpush1.msra.mxu0 0.0
    %1012 = vmatprep.subr.mxu0 0.0
    %1013 = vmatpush1.msra.mxu0 0.0
    %1014 = vmatprep.subr.mxu0 0.0
    %1015 = vmatpush1.msra.mxu0 0.0
    %1016 = vmatprep.subr.mxu0 0.0
    %1017 = vmatpush1.msra.mxu0 0.0
    %1018 = vmatprep.subr.mxu0 0.0
    %1019 = vmatpush1.msra.mxu0 0.0
    %1020 = vmatprep.subr.mxu0 0.0
    %1021 = vmatpush1.msra.mxu0 0.0
    %1022 = vmatprep.subr.mxu0 0.0
    %1023 = vmatpush1.msra.mxu0 0.0
    %1024 = vmatprep.subr.mxu0 0.0
    %1025 = vmatpush1.msra.mxu0 0.0
    %1026 = vmatprep.subr.mxu0 0.0
    %1027 = vmatpush1.msra.mxu0 0.0
    %1028 = vmatprep.subr.mxu0 0.0
    %1029 = vmatpush1.msra.mxu0 0.0
    %1030 = vmatprep.subr.mxu0 0.0
    %1031 = vmatpush1.msra.mxu0 0.0
    %1032 = vmatprep.subr.mxu0 0.0
    %1033 = vmatpush1.msra.mxu0 0.0
    %1034 = vmatprep.subr.mxu0 0.0
    %1035 = vmatpush1.msra.mxu0 0.0
    %1036 = vmatprep.subr.mxu0 0.0
    %1037 = vmatpush1.msra.mxu0 0.0
    %1038 = vmatprep.subr.mxu0 0.0
    %1039 = vmatpush1.msra.mxu0 0.0
    %1040 = vmatprep.subr.mxu0 0.0
    %1041 = vmatpush1.msra.mxu0 0.0
    %1042 = vmatprep.subr.mxu0 0.0
    %1043 = vmatpush1.msra.mxu0 0.0
    %1044 = vmatprep.subr.mxu0 0.0
    %1045 = vmatpush1.msra.mxu0 0.0
    %1046 = vmatprep.mubr.f32.mxu0 0.0
    %1047 = vmatmul.mubr.f32.gmra.mrb[0].mxu0 %v980
    %v1048 = vpop.f32.mrb[0].mxu0
    %v1049 = vadd.f32 0.0, %v1048
    %v1050 = vpop.f32.mrb[0].mxu0
    %1051 = vdwg.mxu0
    %v1053 = vrot.slane %v1049, 3
    %v1054 = vrot.slane %v1049, 4
    %v1057 = vadd.f32 %v230, %v1053
    %v1058 = vadd.f32 %v235, %v1054
    %v1059 = vsub.f32 0.0, %v1057
    %v1060 = vsub.f32 0.0, %v1058
    %v1061 = vmul.f32 %v1059, 1.442695
    %v1062 = vpow.pop %v1061
    %v1063 = vmul.f32 %v1060, 1.442695
    %v1064 = vpow.pop %v1063
    %v1065 = vadd.f32 %v1062, 1.0
    %v1066 = vadd.f32 %v1064, 1.0
    %v1067 = vrcp.pop %v1065
    %v1068 = vrcp.pop %v1066
    %v1069 = vtanh.pop %v1057
    %v1070 = vtanh.pop %v1058
    %v1073 = vrot.slane %v950, 7
    %v1074 = vrot.slane %v951, 7
    %v1077 = vmul.f32 %v1067, %v1073
    %v1078 = vmul.f32 %v1068, %v1074
    %1081 = vrot.lane.b32.xlu0 %v1069, 64
    %v1082 = vpop.permute.xlu0 %1081
    %1083 = vrot.lane.b32.xlu0 %v1070, 64
    %v1084 = vpop.permute.xlu0 %1083
    %v1087 = vmul.f32 %v1067, %v1082
    %v1088 = vmul.f32 %v1068, %v1084
    %1091 = vrot.lane.b32.xlu0 %v1087, 32
    %v1092 = vpop.permute.xlu0 %1091
    %1093 = vrot.lane.b32.xlu0 %v1088, 32
    %v1094 = vpop.permute.xlu0 %1093
    %v1097 = vadd.f32 %v1077, %v1092
    %v1098 = vadd.f32 %v1078, %v1094
    %v1099 = vtanh.pop %v1097
    %v1100 = vtanh.pop %v1098
    %1103 = vrot.lane.b32.xlu0 %v1099, 64
    %v1104 = vpop.permute.xlu0 %1103
    %1105 = vrot.lane.b32.xlu0 %v1100, 64
    %v1106 = vpop.permute.xlu0 %1105
    %v1109 = vmul.f32 %v1067, %v1104
    %v1110 = vmul.f32 %v1068, %v1106
    %1113 = vrot.lane.b32.xlu0 %v1109, 32
    %v1114 = vpop.permute.xlu0 %1113
    %1115 = vrot.lane.b32.xlu0 %v1110, 32
    %v1116 = vpop.permute.xlu0 %1115
    %vm1119 = vcmask 259077
    %1120 = vst.msk [vmem:[#allocation2] sm:$0x20] %vm1119, %v1114
    %1121 = vst.msk [vmem:[#allocation2 + $0x8] sm:$0x20] %vm1119, %v1116
    %v1122 = vrot.slane %v1109, 5
    %v1123 = vrot.slane %v1110, 4
    %v1124 = vsel %vm245, %v1123, %v1122
    %1125 = vrot.lane.b32.xlu0 %v1124, 32
    %v1126 = vpop.permute.xlu0 %1125
    %v1127 = vsel %vm156, %v1126, 0
    %1129 = vmatprep.subr.mxu0 0.0
    %1130 = vmatpush1.msra.mxu0 %v238
    %1131 = vmatprep.subr.mxu0 0.0
    %1132 = vmatpush1.msra.mxu0 %v239
    %1133 = vmatprep.subr.mxu0 0.0
    %1134 = vmatpush1.msra.mxu0 %v240
    %1135 = vmatprep.subr.mxu0 0.0
    %1136 = vmatpush1.msra.mxu0 %v241
    %1137 = vmatprep.subr.mxu0 0.0
    %1138 = vmatpush1.msra.mxu0 0.0
    %1139 = vmatprep.subr.mxu0 0.0
    %1140 = vmatpush1.msra.mxu0 0.0
    %1141 = vmatprep.subr.mxu0 0.0
    %1142 = vmatpush1.msra.mxu0 0.0
    %1143 = vmatprep.subr.mxu0 0.0
    %1144 = vmatpush1.msra.mxu0 0.0
    %1145 = vmatprep.subr.mxu0 0.0
    %1146 = vmatpush1.msra.mxu0 0.0
    %1147 = vmatprep.subr.mxu0 0.0
    %1148 = vmatpush1.msra.mxu0 0.0
    %1149 = vmatprep.subr.mxu0 0.0
    %1150 = vmatpush1.msra.mxu0 0.0
    %1151 = vmatprep.subr.mxu0 0.0
    %1152 = vmatpush1.msra.mxu0 0.0
    %1153 = vmatprep.subr.mxu0 0.0
    %1154 = vmatpush1.msra.mxu0 0.0
    %1155 = vmatprep.subr.mxu0 0.0
    %1156 = vmatpush1.msra.mxu0 0.0
    %1157 = vmatprep.subr.mxu0 0.0
    %1158 = vmatpush1.msra.mxu0 0.0
    %1159 = vmatprep.subr.mxu0 0.0
    %1160 = vmatpush1.msra.mxu0 0.0
    %1161 = vmatprep.subr.mxu0 0.0
    %1162 = vmatpush1.msra.mxu0 0.0
    %1163 = vmatprep.subr.mxu0 0.0
    %1164 = vmatpush1.msra.mxu0 0.0
    %1165 = vmatprep.subr.mxu0 0.0
    %1166 = vmatpush1.msra.mxu0 0.0
    %1167 = vmatprep.subr.mxu0 0.0
    %1168 = vmatpush1.msra.mxu0 0.0
    %1169 = vmatprep.subr.mxu0 0.0
    %1170 = vmatpush1.msra.mxu0 0.0
    %1171 = vmatprep.subr.mxu0 0.0
    %1172 = vmatpush1.msra.mxu0 0.0
    %1173 = vmatprep.subr.mxu0 0.0
    %1174 = vmatpush1.msra.mxu0 0.0
    %1175 = vmatprep.subr.mxu0 0.0
    %1176 = vmatpush1.msra.mxu0 0.0
    %1177 = vmatprep.subr.mxu0 0.0
    %1178 = vmatpush1.msra.mxu0 0.0
    %1179 = vmatprep.subr.mxu0 0.0
    %1180 = vmatpush1.msra.mxu0 0.0
    %1181 = vmatprep.subr.mxu0 0.0
    %1182 = vmatpush1.msra.mxu0 0.0
    %1183 = vmatprep.subr.mxu0 0.0
    %1184 = vmatpush1.msra.mxu0 0.0
    %1185 = vmatprep.subr.mxu0 0.0
    %1186 = vmatpush1.msra.mxu0 0.0
    %1187 = vmatprep.subr.mxu0 0.0
    %1188 = vmatpush1.msra.mxu0 0.0
    %1189 = vmatprep.subr.mxu0 0.0
    %1190 = vmatpush1.msra.mxu0 0.0
    %1191 = vmatprep.subr.mxu0 0.0
    %1192 = vmatpush1.msra.mxu0 0.0
    %1193 = vmatprep.mubr.f32.mxu0 0.0
    %1194 = vmatmul.mubr.f32.gmra.mrb[0].mxu0 %v1127
    %v1195 = vpop.f32.mrb[0].mxu0
    %v1196 = vadd.f32 0.0, %v1195
    %v1197 = vpop.f32.mrb[0].mxu0
    %1198 = vdwg.mxu0
    %v1200 = vrot.slane %v1196, 2
    %v1201 = vrot.slane %v1196, 3
    %v1204 = vadd.f32 %v230, %v1200
    %v1205 = vadd.f32 %v235, %v1201
    %v1206 = vsub.f32 0.0, %v1204
    %v1207 = vsub.f32 0.0, %v1205
    %v1208 = vmul.f32 %v1206, 1.442695
    %v1209 = vpow.pop %v1208
    %v1210 = vmul.f32 %v1207, 1.442695
    %v1211 = vpow.pop %v1210
    %v1212 = vadd.f32 %v1209, 1.0
    %v1213 = vadd.f32 %v1211, 1.0
    %v1214 = vrcp.pop %v1212
    %v1215 = vrcp.pop %v1213
    %v1216 = vtanh.pop %v1204
    %v1217 = vtanh.pop %v1205
    %v1220 = vrot.slane %v1097, 7
    %v1221 = vrot.slane %v1098, 7
    %v1224 = vmul.f32 %v1214, %v1220
    %v1225 = vmul.f32 %v1215, %v1221
    %1228 = vrot.lane.b32.xlu0 %v1216, 64
    %v1229 = vpop.permute.xlu0 %1228
    %1230 = vrot.lane.b32.xlu0 %v1217, 64
    %v1231 = vpop.permute.xlu0 %1230
    %v1234 = vmul.f32 %v1214, %v1229
    %v1235 = vmul.f32 %v1215, %v1231
    %1238 = vrot.lane.b32.xlu0 %v1234, 32
    %v1239 = vpop.permute.xlu0 %1238
    %1240 = vrot.lane.b32.xlu0 %v1235, 32
    %v1241 = vpop.permute.xlu0 %1240
    %v1244 = vadd.f32 %v1224, %v1239
    %v1245 = vadd.f32 %v1225, %v1241
    %v1246 = vtanh.pop %v1244
    %v1247 = vtanh.pop %v1245
    %1250 = vrot.lane.b32.xlu0 %v1246, 64
    %v1251 = vpop.permute.xlu0 %1250
    %1252 = vrot.lane.b32.xlu0 %v1247, 64
    %v1253 = vpop.permute.xlu0 %1252
    %v1256 = vmul.f32 %v1214, %v1251
    %v1257 = vmul.f32 %v1215, %v1253
    %1260 = vrot.lane.b32.xlu0 %v1256, 32
    %v1261 = vpop.permute.xlu0 %1260
    %1262 = vrot.lane.b32.xlu0 %v1257, 32
    %v1263 = vpop.permute.xlu0 %1262
    %vm1266 = vcmask 260102
    %1267 = vst.msk [vmem:[#allocation2] sm:$0x40] %vm1266, %v1261
    %1268 = vst.msk [vmem:[#allocation2 + $0x8] sm:$0x40] %vm1266, %v1263
    %v1269 = vrot.slane %v1256, 6
    %v1270 = vrot.slane %v1257, 5
    %v1271 = vsel %vm245, %v1270, %v1269
    %1272 = vrot.lane.b32.xlu0 %v1271, 32
    %v1273 = vpop.permute.xlu0 %1272
    %v1274 = vsel %vm156, %v1273, 0
    %1276 = vmatprep.subr.mxu0 0.0
    %1277 = vmatpush1.msra.mxu0 %v238
    %1278 = vmatprep.subr.mxu0 0.0
    %1279 = vmatpush1.msra.mxu0 %v239
    %1280 = vmatprep.subr.mxu0 0.0
    %1281 = vmatpush1.msra.mxu0 %v240
    %1282 = vmatprep.subr.mxu0 0.0
    %1283 = vmatpush1.msra.mxu0 %v241
    %1284 = vmatprep.subr.mxu0 0.0
    %1285 = vmatpush1.msra.mxu0 0.0
    %1286 = vmatprep.subr.mxu0 0.0
    %1287 = vmatpush1.msra.mxu0 0.0
    %1288 = vmatprep.subr.mxu0 0.0
    %1289 = vmatpush1.msra.mxu0 0.0
    %1290 = vmatprep.subr.mxu0 0.0
    %1291 = vmatpush1.msra.mxu0 0.0
    %1292 = vmatprep.subr.mxu0 0.0
    %1293 = vmatpush1.msra.mxu0 0.0
    %1294 = vmatprep.subr.mxu0 0.0
    %1295 = vmatpush1.msra.mxu0 0.0
    %1296 = vmatprep.subr.mxu0 0.0
    %1297 = vmatpush1.msra.mxu0 0.0
    %1298 = vmatprep.subr.mxu0 0.0
    %1299 = vmatpush1.msra.mxu0 0.0
    %1300 = vmatprep.subr.mxu0 0.0
    %1301 = vmatpush1.msra.mxu0 0.0
    %1302 = vmatprep.subr.mxu0 0.0
    %1303 = vmatpush1.msra.mxu0 0.0
    %1304 = vmatprep.subr.mxu0 0.0
    %1305 = vmatpush1.msra.mxu0 0.0
    %1306 = vmatprep.subr.mxu0 0.0
    %1307 = vmatpush1.msra.mxu0 0.0
    %1308 = vmatprep.subr.mxu0 0.0
    %1309 = vmatpush1.msra.mxu0 0.0
    %1310 = vmatprep.subr.mxu0 0.0
    %1311 = vmatpush1.msra.mxu0 0.0
    %1312 = vmatprep.subr.mxu0 0.0
    %1313 = vmatpush1.msra.mxu0 0.0
    %1314 = vmatprep.subr.mxu0 0.0
    %1315 = vmatpush1.msra.mxu0 0.0
    %1316 = vmatprep.subr.mxu0 0.0
    %1317 = vmatpush1.msra.mxu0 0.0
    %1318 = vmatprep.subr.mxu0 0.0
    %1319 = vmatpush1.msra.mxu0 0.0
    %1320 = vmatprep.subr.mxu0 0.0
    %1321 = vmatpush1.msra.mxu0 0.0
    %1322 = vmatprep.subr.mxu0 0.0
    %1323 = vmatpush1.msra.mxu0 0.0
    %1324 = vmatprep.subr.mxu0 0.0
    %1325 = vmatpush1.msra.mxu0 0.0
    %1326 = vmatprep.subr.mxu0 0.0
    %1327 = vmatpush1.msra.mxu0 0.0
    %1328 = vmatprep.subr.mxu0 0.0
    %1329 = vmatpush1.msra.mxu0 0.0
    %1330 = vmatprep.subr.mxu0 0.0
    %1331 = vmatpush1.msra.mxu0 0.0
    %1332 = vmatprep.subr.mxu0 0.0
    %1333 = vmatpush1.msra.mxu0 0.0
    %1334 = vmatprep.subr.mxu0 0.0
    %1335 = vmatpush1.msra.mxu0 0.0
    %1336 = vmatprep.subr.mxu0 0.0
    %1337 = vmatpush1.msra.mxu0 0.0
    %1338 = vmatprep.subr.mxu0 0.0
    %1339 = vmatpush1.msra.mxu0 0.0
    %1340 = vmatprep.mubr.f32.mxu0 0.0
    %1341 = vmatmul.mubr.f32.gmra.mrb[0].mxu0 %v1274
    %v1342 = vpop.f32.mrb[0].mxu0
    %v1343 = vadd.f32 0.0, %v1342
    %v1344 = vpop.f32.mrb[0].mxu0
    %1345 = vdwg.mxu0
    %v1347 = vrot.slane %v1343, 1
    %v1348 = vrot.slane %v1343, 2
    %v1351 = vadd.f32 %v230, %v1347
    %v1352 = vadd.f32 %v235, %v1348
    %v1353 = vsub.f32 0.0, %v1351
    %v1354 = vsub.f32 0.0, %v1352
    %v1355 = vmul.f32 %v1353, 1.442695
    %v1356 = vpow.pop %v1355
    %v1357 = vmul.f32 %v1354, 1.442695
    %v1358 = vpow.pop %v1357
    %v1359 = vadd.f32 %v1356, 1.0
    %v1360 = vadd.f32 %v1358, 1.0
    %v1361 = vrcp.pop %v1359
    %v1362 = vrcp.pop %v1360
    %v1363 = vtanh.pop %v1351
    %v1364 = vtanh.pop %v1352
    %v1367 = vrot.slane %v1244, 7
    %v1368 = vrot.slane %v1245, 7
    %v1371 = vmul.f32 %v1361, %v1367
    %v1372 = vmul.f32 %v1362, %v1368
    %1375 = vrot.lane.b32.xlu0 %v1363, 64
    %v1376 = vpop.permute.xlu0 %1375
    %1377 = vrot.lane.b32.xlu0 %v1364, 64
    %v1378 = vpop.permute.xlu0 %1377
    %v1381 = vmul.f32 %v1361, %v1376
    %v1382 = vmul.f32 %v1362, %v1378
    %1385 = vrot.lane.b32.xlu0 %v1381, 32
    %v1386 = vpop.permute.xlu0 %1385
    %1387 = vrot.lane.b32.xlu0 %v1382, 32
    %v1388 = vpop.permute.xlu0 %1387
    %v1391 = vadd.f32 %v1371, %v1386
    %v1392 = vadd.f32 %v1372, %v1388
    %v1393 = vtanh.pop %v1391
    %v1394 = vtanh.pop %v1392
    %1397 = vrot.lane.b32.xlu0 %v1393, 64
    %v1398 = vpop.permute.xlu0 %1397
    %1399 = vrot.lane.b32.xlu0 %v1394, 64
    %v1400 = vpop.permute.xlu0 %1399
    %v1403 = vmul.f32 %v1361, %v1398
    %v1404 = vmul.f32 %v1362, %v1400
    %1407 = vrot.lane.b32.xlu0 %v1403, 32
    %v1408 = vpop.permute.xlu0 %1407
    %1409 = vrot.lane.b32.xlu0 %v1404, 32
    %v1410 = vpop.permute.xlu0 %1409
    %vm1413 = vcmask 261127
    %1414 = vst.msk [vmem:[#allocation2] sm:$0x80] %vm1413, %v1408
    %1415 = vst.msk [vmem:[#allocation2 + $0x8] sm:$0x80] %vm1413, %v1410
    %1416 = vst.msk [vmem:[%s14 - $0x7] sm:$0x80] %vm1413, %v1408
    %1417 = vst.msk [vmem:[%s14 - $0x5] sm:$0x80] %vm1413, %v1410
    %1420 = vrot.lane.b32.xlu0 %v1391, 96
    %v1421 = vpop.permute.xlu0 %1420
    %1422 = vrot.lane.b32.xlu0 %v1392, 96
    %v1423 = vpop.permute.xlu0 %1422
    %1426 = vst.msk [vmem:[%s15 - $0x7] sm:$0x80] %vm1413, %v1421
    %1427 = vst.msk [vmem:[%s15 - $0x5] sm:$0x80] %vm1413, %v1423
    %v1428 = vld [vmem:[#allocation2] sm:$0xff]
    %v1429 = vld [vmem:[#allocation2 + $0x8] sm:$0xff]
    %v1430 = vld [vmem:[#allocation8] sm:$0xff]
    %v1431 = vld [vmem:[#allocation8 + $0x8] sm:$0xff]
    %v1432 = vld [vmem:[#allocation8 + $0x10] sm:$0xff]
    %v1433 = vld [vmem:[#allocation8 + $0x18] sm:$0xff]
    %v1434 = vld [vmem:[#allocation11 + $0x1] sm:$0x1]
    %v1435 = vlaneseq
    %v1436 = vshrl.u32 %v1435, 7
    %v1437 = vsub.s32 0, %v1436
    %v1438 = vrot.slane %v1434, %v1437
    %v1440 = vsel %vm156, %v1428, 0
    %v1443 = vsel %vm156, %v1429, 0
    %1445 = vmatprep.subr.mxu0 0.0
    %1446 = vmatpush1.msra.mxu0 %v1430
    %1447 = vmatprep.subr.mxu0 0.0
    %1448 = vmatpush1.msra.mxu0 %v1431
    %1449 = vmatprep.subr.mxu0 0.0
    %1450 = vmatpush1.msra.mxu0 %v1432
    %1451 = vmatprep.subr.mxu0 0.0
    %1452 = vmatpush1.msra.mxu0 %v1433
    %1453 = vmatprep.subr.mxu0 0.0
    %1454 = vmatpush1.msra.mxu0 0.0
    %1455 = vmatprep.subr.mxu0 0.0
    %1456 = vmatpush1.msra.mxu0 0.0
    %1457 = vmatprep.subr.mxu0 0.0
    %1458 = vmatpush1.msra.mxu0 0.0
    %1459 = vmatprep.subr.mxu0 0.0
    %1460 = vmatpush1.msra.mxu0 0.0
    %1461 = vmatprep.subr.mxu0 0.0
    %1462 = vmatpush1.msra.mxu0 0.0
    %1463 = vmatprep.subr.mxu0 0.0
    %1464 = vmatpush1.msra.mxu0 0.0
    %1465 = vmatprep.subr.mxu0 0.0
    %1466 = vmatpush1.msra.mxu0 0.0
    %1467 = vmatprep.subr.mxu0 0.0
    %1468 = vmatpush1.msra.mxu0 0.0
    %1469 = vmatprep.subr.mxu0 0.0
    %1470 = vmatpush1.msra.mxu0 0.0
    %1471 = vmatprep.subr.mxu0 0.0
    %1472 = vmatpush1.msra.mxu0 0.0
    %1473 = vmatprep.subr.mxu0 0.0
    %1474 = vmatpush1.msra.mxu0 0.0
    %1475 = vmatprep.subr.mxu0 0.0
    %1476 = vmatpush1.msra.mxu0 0.0
    %1477 = vmatprep.subr.mxu0 0.0
    %1478 = vmatpush1.msra.mxu0 0.0
    %1479 = vmatprep.subr.mxu0 0.0
    %1480 = vmatpush1.msra.mxu0 0.0
    %1481 = vmatprep.subr.mxu0 0.0
    %1482 = vmatpush1.msra.mxu0 0.0
    %1483 = vmatprep.subr.mxu0 0.0
    %1484 = vmatpush1.msra.mxu0 0.0
    %1485 = vmatprep.subr.mxu0 0.0
    %1486 = vmatpush1.msra.mxu0 0.0
    %1487 = vmatprep.subr.mxu0 0.0
    %1488 = vmatpush1.msra.mxu0 0.0
    %1489 = vmatprep.subr.mxu0 0.0
    %1490 = vmatpush1.msra.mxu0 0.0
    %1491 = vmatprep.subr.mxu0 0.0
    %1492 = vmatpush1.msra.mxu0 0.0
    %1493 = vmatprep.subr.mxu0 0.0
    %1494 = vmatpush1.msra.mxu0 0.0
    %1495 = vmatprep.subr.mxu0 0.0
    %1496 = vmatpush1.msra.mxu0 0.0
    %1497 = vmatprep.subr.mxu0 0.0
    %1498 = vmatpush1.msra.mxu0 0.0
    %1499 = vmatprep.subr.mxu0 0.0
    %1500 = vmatpush1.msra.mxu0 0.0
    %1501 = vmatprep.subr.mxu0 0.0
    %1502 = vmatpush1.msra.mxu0 0.0
    %1503 = vmatprep.subr.mxu0 0.0
    %1504 = vmatpush1.msra.mxu0 0.0
    %1505 = vmatprep.subr.mxu0 0.0
    %1506 = vmatpush1.msra.mxu0 0.0
    %1507 = vmatprep.subr.mxu0 0.0
    %1508 = vmatpush1.msra.mxu0 0.0
    %1509 = vmatprep.mubr.f32.mxu0 0.0
    %1510 = vmatmul.mubr.f32.gmra.mrb[0].mxu0 %v1440
    %v1511 = vpop.f32.mrb[0].mxu0
    %v1512 = vadd.f32 %v1438, %v1511
    %v1513 = vpop.f32.mrb[0].mxu0
    %1514 = vmatprep.mubr.f32.mxu0 0.0
    %1515 = vmatmul.mubr.f32.gmra.mrb[0].mxu0 %v1443
    %v1516 = vpop.f32.mrb[0].mxu0
    %v1517 = vadd.f32 %v1438, %v1516
    %v1518 = vpop.f32.mrb[0].mxu0
    %1519 = vdwg.mxu0
    %s1520 = scalar_lea.vmem [#allocation9], 32
    %v1521 = vld [vmem:[%s1520] sm:$0xff]
    %v1522 = vld [vmem:[%s1520 + $0x8] sm:$0xff]
    %v1523 = vld [vmem:[%s1520 + $0x10] sm:$0xff]
    %v1524 = vld [vmem:[%s1520 + $0x18] sm:$0xff]
    %v1525 = vrot.slane %v141, 1
    %v1526 = vsel %vm245, %v142, %v1525
    %v1527 = vsel %vm156, %v1526, 0
    %1529 = vmatprep.subr.mxu0 0.0
    %1530 = vmatpush1.msra.mxu0 %v1521
    %1531 = vmatprep.subr.mxu0 0.0
    %1532 = vmatpush1.msra.mxu0 %v1522
    %1533 = vmatprep.subr.mxu0 0.0
    %1534 = vmatpush1.msra.mxu0 %v1523
    %1535 = vmatprep.subr.mxu0 0.0
    %1536 = vmatpush1.msra.mxu0 %v1524
    %1537 = vmatprep.subr.mxu0 0.0
    %1538 = vmatpush1.msra.mxu0 0.0
    %1539 = vmatprep.subr.mxu0 0.0
    %1540 = vmatpush1.msra.mxu0 0.0
    %1541 = vmatprep.subr.mxu0 0.0
    %1542 = vmatpush1.msra.mxu0 0.0
    %1543 = vmatprep.subr.mxu0 0.0
    %1544 = vmatpush1.msra.mxu0 0.0
    %1545 = vmatprep.subr.mxu0 0.0
    %1546 = vmatpush1.msra.mxu0 0.0
    %1547 = vmatprep.subr.mxu0 0.0
    %1548 = vmatpush1.msra.mxu0 0.0
    %1549 = vmatprep.subr.mxu0 0.0
    %1550 = vmatpush1.msra.mxu0 0.0
    %1551 = vmatprep.subr.mxu0 0.0
    %1552 = vmatpush1.msra.mxu0 0.0
    %1553 = vmatprep.subr.mxu0 0.0
    %1554 = vmatpush1.msra.mxu0 0.0
    %1555 = vmatprep.subr.mxu0 0.0
    %1556 = vmatpush1.msra.mxu0 0.0
    %1557 = vmatprep.subr.mxu0 0.0
    %1558 = vmatpush1.msra.mxu0 0.0
    %1559 = vmatprep.subr.mxu0 0.0
    %1560 = vmatpush1.msra.mxu0 0.0
    %1561 = vmatprep.subr.mxu0 0.0
    %1562 = vmatpush1.msra.mxu0 0.0
    %1563 = vmatprep.subr.mxu0 0.0
    %1564 = vmatpush1.msra.mxu0 0.0
    %1565 = vmatprep.subr.mxu0 0.0
    %1566 = vmatpush1.msra.mxu0 0.0
    %1567 = vmatprep.subr.mxu0 0.0
    %1568 = vmatpush1.msra.mxu0 0.0
    %1569 = vmatprep.subr.mxu0 0.0
    %1570 = vmatpush1.msra.mxu0 0.0
    %1571 = vmatprep.subr.mxu0 0.0
    %1572 = vmatpush1.msra.mxu0 0.0
    %1573 = vmatprep.subr.mxu0 0.0
    %1574 = vmatpush1.msra.mxu0 0.0
    %1575 = vmatprep.subr.mxu0 0.0
    %1576 = vmatpush1.msra.mxu0 0.0
    %1577 = vmatprep.subr.mxu0 0.0
    %1578 = vmatpush1.msra.mxu0 0.0
    %1579 = vmatprep.subr.mxu0 0.0
    %1580 = vmatpush1.msra.mxu0 0.0
    %1581 = vmatprep.subr.mxu0 0.0
    %1582 = vmatpush1.msra.mxu0 0.0
    %1583 = vmatprep.subr.mxu0 0.0
    %1584 = vmatpush1.msra.mxu0 0.0
    %1585 = vmatprep.subr.mxu0 0.0
    %1586 = vmatpush1.msra.mxu0 0.0
    %1587 = vmatprep.subr.mxu0 0.0
    %1588 = vmatpush1.msra.mxu0 0.0
    %1589 = vmatprep.subr.mxu0 0.0
    %1590 = vmatpush1.msra.mxu0 0.0
    %1591 = vmatprep.subr.mxu0 0.0
    %1592 = vmatpush1.msra.mxu0 0.0
    %1593 = vmatprep.mubr.f32.mxu0 0.0
    %1594 = vmatmul.mubr.f32.gmra.mrb[0].mxu0 %v1527
    %v1595 = vpop.f32.mrb[0].mxu0
    %v1596 = vadd.f32 0.0, %v1595
    %v1597 = vpop.f32.mrb[0].mxu0
    %1598 = vdwg.mxu0
    %v1600 = vrot.slane %v1596, 1
    %v1603 = vadd.f32 %v1512, %v1596
    %v1604 = vadd.f32 %v1517, %v1600
    %v1605 = vsub.f32 0.0, %v1603
    %v1606 = vsub.f32 0.0, %v1604
    %v1607 = vmul.f32 %v1605, 1.442695
    %v1608 = vpow.pop %v1607
    %v1609 = vmul.f32 %v1606, 1.442695
    %v1610 = vpow.pop %v1609
    %v1611 = vadd.f32 %v1608, 1.0
    %v1612 = vadd.f32 %v1610, 1.0
    %v1613 = vrcp.pop %v1611
    %v1614 = vrcp.pop %v1612
    %v1615 = vtanh.pop %v1603
    %v1616 = vtanh.pop %v1604
    %v1617 = vrot.slane %v143, 1
    %v1618 = vrot.slane %v144, 1
    %1619 = vrot.lane.b32.xlu0 %v1617, 32
    %v1620 = vpop.permute.xlu0 %1619
    %1621 = vrot.lane.b32.xlu0 %v1618, 32
    %v1622 = vpop.permute.xlu0 %1621
    %v1625 = vmul.f32 %v1613, %v1620
    %v1626 = vmul.f32 %v1614, %v1622
    %1629 = vrot.lane.b32.xlu0 %v1615, 64
    %v1630 = vpop.permute.xlu0 %1629
    %1631 = vrot.lane.b32.xlu0 %v1616, 64
    %v1632 = vpop.permute.xlu0 %1631
    %v1635 = vmul.f32 %v1613, %v1630
    %v1636 = vmul.f32 %v1614, %v1632
    %1639 = vrot.lane.b32.xlu0 %v1635, 32
    %v1640 = vpop.permute.xlu0 %1639
    %1641 = vrot.lane.b32.xlu0 %v1636, 32
    %v1642 = vpop.permute.xlu0 %1641
    %v1645 = vadd.f32 %v1625, %v1640
    %v1646 = vadd.f32 %v1626, %v1642
    %v1647 = vtanh.pop %v1645
    %v1648 = vtanh.pop %v1646
    %1651 = vrot.lane.b32.xlu0 %v1647, 64
    %v1652 = vpop.permute.xlu0 %1651
    %1653 = vrot.lane.b32.xlu0 %v1648, 64
    %v1654 = vpop.permute.xlu0 %1653
    %v1657 = vmul.f32 %v1613, %v1652
    %v1658 = vmul.f32 %v1614, %v1654
    %1661 = vrot.lane.b32.xlu0 %v1657, 32
    %v1662 = vpop.permute.xlu0 %1661
    %1663 = vrot.lane.b32.xlu0 %v1658, 32
    %v1664 = vpop.permute.xlu0 %1663
    %1667 = vst.msk [vmem:[#allocation2] sm:$0x1] %vm387, %v1662
    %1668 = vst.msk [vmem:[#allocation2 + $0x8] sm:$0x1] %vm387, %v1664
    %v1669 = vrot.slane %v1658, 7
    %v1670 = vsel %vm245, %v1669, %v1657
    %1671 = vrot.lane.b32.xlu0 %v1670, 32
    %v1672 = vpop.permute.xlu0 %1671
    %v1673 = vsel %vm156, %v1672, 0
    %1675 = vmatprep.subr.mxu0 0.0
    %1676 = vmatpush1.msra.mxu0 %v1521
    %1677 = vmatprep.subr.mxu0 0.0
    %1678 = vmatpush1.msra.mxu0 %v1522
    %1679 = vmatprep.subr.mxu0 0.0
    %1680 = vmatpush1.msra.mxu0 %v1523
    %1681 = vmatprep.subr.mxu0 0.0
    %1682 = vmatpush1.msra.mxu0 %v1524
    %1683 = vmatprep.subr.mxu0 0.0
    %1684 = vmatpush1.msra.mxu0 0.0
    %1685 = vmatprep.subr.mxu0 0.0
    %1686 = vmatpush1.msra.mxu0 0.0
    %1687 = vmatprep.subr.mxu0 0.0
    %1688 = vmatpush1.msra.mxu0 0.0
    %1689 = vmatprep.subr.mxu0 0.0
    %1690 = vmatpush1.msra.mxu0 0.0
    %1691 = vmatprep.subr.mxu0 0.0
    %1692 = vmatpush1.msra.mxu0 0.0
    %1693 = vmatprep.subr.mxu0 0.0
    %1694 = vmatpush1.msra.mxu0 0.0
    %1695 = vmatprep.subr.mxu0 0.0
    %1696 = vmatpush1.msra.mxu0 0.0
    %1697 = vmatprep.subr.mxu0 0.0
    %1698 = vmatpush1.msra.mxu0 0.0
    %1699 = vmatprep.subr.mxu0 0.0
    %1700 = vmatpush1.msra.mxu0 0.0
    %1701 = vmatprep.subr.mxu0 0.0
    %1702 = vmatpush1.msra.mxu0 0.0
    %1703 = vmatprep.subr.mxu0 0.0
    %1704 = vmatpush1.msra.mxu0 0.0
    %1705 = vmatprep.subr.mxu0 0.0
    %1706 = vmatpush1.msra.mxu0 0.0
    %1707 = vmatprep.subr.mxu0 0.0
    %1708 = vmatpush1.msra.mxu0 0.0
    %1709 = vmatprep.subr.mxu0 0.0
    %1710 = vmatpush1.msra.mxu0 0.0
    %1711 = vmatprep.subr.mxu0 0.0
    %1712 = vmatpush1.msra.mxu0 0.0
    %1713 = vmatprep.subr.mxu0 0.0
    %1714 = vmatpush1.msra.mxu0 0.0
    %1715 = vmatprep.subr.mxu0 0.0
    %1716 = vmatpush1.msra.mxu0 0.0
    %1717 = vmatprep.subr.mxu0 0.0
    %1718 = vmatpush1.msra.mxu0 0.0
    %1719 = vmatprep.subr.mxu0 0.0
    %1720 = vmatpush1.msra.mxu0 0.0
    %1721 = vmatprep.subr.mxu0 0.0
    %1722 = vmatpush1.msra.mxu0 0.0
    %1723 = vmatprep.subr.mxu0 0.0
    %1724 = vmatpush1.msra.mxu0 0.0
    %1725 = vmatprep.subr.mxu0 0.0
    %1726 = vmatpush1.msra.mxu0 0.0
    %1727 = vmatprep.subr.mxu0 0.0
    %1728 = vmatpush1.msra.mxu0 0.0
    %1729 = vmatprep.subr.mxu0 0.0
    %1730 = vmatpush1.msra.mxu0 0.0
    %1731 = vmatprep.subr.mxu0 0.0
    %1732 = vmatpush1.msra.mxu0 0.0
    %1733 = vmatprep.subr.mxu0 0.0
    %1734 = vmatpush1.msra.mxu0 0.0
    %1735 = vmatprep.subr.mxu0 0.0
    %1736 = vmatpush1.msra.mxu0 0.0
    %1737 = vmatprep.subr.mxu0 0.0
    %1738 = vmatpush1.msra.mxu0 0.0
    %1739 = vmatprep.mubr.f32.mxu0 0.0
    %1740 = vmatmul.mubr.f32.gmra.mrb[0].mxu0 %v1673
    %v1741 = vpop.f32.mrb[0].mxu0
    %v1742 = vadd.f32 0.0, %v1741
    %v1743 = vpop.f32.mrb[0].mxu0
    %1744 = vdwg.mxu0
    %v1746 = vrot.slane %v1742, 7
    %v1749 = vadd.f32 %v1512, %v1746
    %v1750 = vadd.f32 %v1517, %v1742
    %v1751 = vsub.f32 0.0, %v1749
    %v1752 = vsub.f32 0.0, %v1750
    %v1753 = vmul.f32 %v1751, 1.442695
    %v1754 = vpow.pop %v1753
    %v1755 = vmul.f32 %v1752, 1.442695
    %v1756 = vpow.pop %v1755
    %v1757 = vadd.f32 %v1754, 1.0
    %v1758 = vadd.f32 %v1756, 1.0
    %v1759 = vrcp.pop %v1757
    %v1760 = vrcp.pop %v1758
    %v1761 = vtanh.pop %v1749
    %v1762 = vtanh.pop %v1750
    %v1765 = vrot.slane %v1645, 7
    %v1766 = vrot.slane %v1646, 7
    %v1769 = vmul.f32 %v1759, %v1765
    %v1770 = vmul.f32 %v1760, %v1766
    %1773 = vrot.lane.b32.xlu0 %v1761, 64
    %v1774 = vpop.permute.xlu0 %1773
    %1775 = vrot.lane.b32.xlu0 %v1762, 64
    %v1776 = vpop.permute.xlu0 %1775
    %v1779 = vmul.f32 %v1759, %v1774
    %v1780 = vmul.f32 %v1760, %v1776
    %1783 = vrot.lane.b32.xlu0 %v1779, 32
    %v1784 = vpop.permute.xlu0 %1783
    %1785 = vrot.lane.b32.xlu0 %v1780, 32
    %v1786 = vpop.permute.xlu0 %1785
    %v1789 = vadd.f32 %v1769, %v1784
    %v1790 = vadd.f32 %v1770, %v1786
    %v1791 = vtanh.pop %v1789
    %v1792 = vtanh.pop %v1790
    %1795 = vrot.lane.b32.xlu0 %v1791, 64
    %v1796 = vpop.permute.xlu0 %1795
    %1797 = vrot.lane.b32.xlu0 %v1792, 64
    %v1798 = vpop.permute.xlu0 %1797
    %v1801 = vmul.f32 %v1759, %v1796
    %v1802 = vmul.f32 %v1760, %v1798
    %1805 = vrot.lane.b32.xlu0 %v1801, 32
    %v1806 = vpop.permute.xlu0 %1805
    %1807 = vrot.lane.b32.xlu0 %v1802, 32
    %v1808 = vpop.permute.xlu0 %1807
    %1811 = vst.msk [vmem:[#allocation2] sm:$0x2] %vm532, %v1806
    %1812 = vst.msk [vmem:[#allocation2 + $0x8] sm:$0x2] %vm532, %v1808
    %v1813 = vrot.slane %v1801, 1
    %v1814 = vsel %vm245, %v1802, %v1813
    %1815 = vrot.lane.b32.xlu0 %v1814, 32
    %v1816 = vpop.permute.xlu0 %1815
    %v1817 = vsel %vm156, %v1816, 0
    %1819 = vmatprep.subr.mxu0 0.0
    %1820 = vmatpush1.msra.mxu0 %v1521
    %1821 = vmatprep.subr.mxu0 0.0
    %1822 = vmatpush1.msra.mxu0 %v1522
    %1823 = vmatprep.subr.mxu0 0.0
    %1824 = vmatpush1.msra.mxu0 %v1523
    %1825 = vmatprep.subr.mxu0 0.0
    %1826 = vmatpush1.msra.mxu0 %v1524
    %1827 = vmatprep.subr.mxu0 0.0
    %1828 = vmatpush1.msra.mxu0 0.0
    %1829 = vmatprep.subr.mxu0 0.0
    %1830 = vmatpush1.msra.mxu0 0.0
    %1831 = vmatprep.subr.mxu0 0.0
    %1832 = vmatpush1.msra.mxu0 0.0
    %1833 = vmatprep.subr.mxu0 0.0
    %1834 = vmatpush1.msra.mxu0 0.0
    %1835 = vmatprep.subr.mxu0 0.0
    %1836 = vmatpush1.msra.mxu0 0.0
    %1837 = vmatprep.subr.mxu0 0.0
    %1838 = vmatpush1.msra.mxu0 0.0
    %1839 = vmatprep.subr.mxu0 0.0
    %1840 = vmatpush1.msra.mxu0 0.0
    %1841 = vmatprep.subr.mxu0 0.0
    %1842 = vmatpush1.msra.mxu0 0.0
    %1843 = vmatprep.subr.mxu0 0.0
    %1844 = vmatpush1.msra.mxu0 0.0
    %1845 = vmatprep.subr.mxu0 0.0
    %1846 = vmatpush1.msra.mxu0 0.0
    %1847 = vmatprep.subr.mxu0 0.0
    %1848 = vmatpush1.msra.mxu0 0.0
    %1849 = vmatprep.subr.mxu0 0.0
    %1850 = vmatpush1.msra.mxu0 0.0
    %1851 = vmatprep.subr.mxu0 0.0
    %1852 = vmatpush1.msra.mxu0 0.0
    %1853 = vmatprep.subr.mxu0 0.0
    %1854 = vmatpush1.msra.mxu0 0.0
    %1855 = vmatprep.subr.mxu0 0.0
    %1856 = vmatpush1.msra.mxu0 0.0
    %1857 = vmatprep.subr.mxu0 0.0
    %1858 = vmatpush1.msra.mxu0 0.0
    %1859 = vmatprep.subr.mxu0 0.0
    %1860 = vmatpush1.msra.mxu0 0.0
    %1861 = vmatprep.subr.mxu0 0.0
    %1862 = vmatpush1.msra.mxu0 0.0
    %1863 = vmatprep.subr.mxu0 0.0
    %1864 = vmatpush1.msra.mxu0 0.0
    %1865 = vmatprep.subr.mxu0 0.0
    %1866 = vmatpush1.msra.mxu0 0.0
    %1867 = vmatprep.subr.mxu0 0.0
    %1868 = vmatpush1.msra.mxu0 0.0
    %1869 = vmatprep.subr.mxu0 0.0
    %1870 = vmatpush1.msra.mxu0 0.0
    %1871 = vmatprep.subr.mxu0 0.0
    %1872 = vmatpush1.msra.mxu0 0.0
    %1873 = vmatprep.subr.mxu0 0.0
    %1874 = vmatpush1.msra.mxu0 0.0
    %1875 = vmatprep.subr.mxu0 0.0
    %1876 = vmatpush1.msra.mxu0 0.0
    %1877 = vmatprep.subr.mxu0 0.0
    %1878 = vmatpush1.msra.mxu0 0.0
    %1879 = vmatprep.subr.mxu0 0.0
    %1880 = vmatpush1.msra.mxu0 0.0
    %1881 = vmatprep.subr.mxu0 0.0
    %1882 = vmatpush1.msra.mxu0 0.0
    %1883 = vmatprep.mubr.f32.mxu0 0.0
    %1884 = vmatmul.mubr.f32.gmra.mrb[0].mxu0 %v1817
    %v1885 = vpop.f32.mrb[0].mxu0
    %v1886 = vadd.f32 0.0, %v1885
    %v1887 = vpop.f32.mrb[0].mxu0
    %1888 = vdwg.mxu0
    %v1890 = vrot.slane %v1886, 6
    %v1891 = vrot.slane %v1886, 7
    %v1894 = vadd.f32 %v1512, %v1890
    %v1895 = vadd.f32 %v1517, %v1891
    %v1896 = vsub.f32 0.0, %v1894
    %v1897 = vsub.f32 0.0, %v1895
    %v1898 = vmul.f32 %v1896, 1.442695
    %v1899 = vpow.pop %v1898
    %v1900 = vmul.f32 %v1897, 1.442695
    %v1901 = vpow.pop %v1900
    %v1902 = vadd.f32 %v1899, 1.0
    %v1903 = vadd.f32 %v1901, 1.0
    %v1904 = vrcp.pop %v1902
    %v1905 = vrcp.pop %v1903
    %v1906 = vtanh.pop %v1894
    %v1907 = vtanh.pop %v1895
    %v1910 = vrot.slane %v1789, 7
    %v1911 = vrot.slane %v1790, 7
    %v1914 = vmul.f32 %v1904, %v1910
    %v1915 = vmul.f32 %v1905, %v1911
    %1918 = vrot.lane.b32.xlu0 %v1906, 64
    %v1919 = vpop.permute.xlu0 %1918
    %1920 = vrot.lane.b32.xlu0 %v1907, 64
    %v1921 = vpop.permute.xlu0 %1920
    %v1924 = vmul.f32 %v1904, %v1919
    %v1925 = vmul.f32 %v1905, %v1921
    %1928 = vrot.lane.b32.xlu0 %v1924, 32
    %v1929 = vpop.permute.xlu0 %1928
    %1930 = vrot.lane.b32.xlu0 %v1925, 32
    %v1931 = vpop.permute.xlu0 %1930
    %v1934 = vadd.f32 %v1914, %v1929
    %v1935 = vadd.f32 %v1915, %v1931
    %v1936 = vtanh.pop %v1934
    %v1937 = vtanh.pop %v1935
    %1940 = vrot.lane.b32.xlu0 %v1936, 64
    %v1941 = vpop.permute.xlu0 %1940
    %1942 = vrot.lane.b32.xlu0 %v1937, 64
    %v1943 = vpop.permute.xlu0 %1942
    %v1946 = vmul.f32 %v1904, %v1941
    %v1947 = vmul.f32 %v1905, %v1943
    %1950 = vrot.lane.b32.xlu0 %v1946, 32
    %v1951 = vpop.permute.xlu0 %1950
    %1952 = vrot.lane.b32.xlu0 %v1947, 32
    %v1953 = vpop.permute.xlu0 %1952
    %1956 = vst.msk [vmem:[#allocation2] sm:$0x4] %vm678, %v1951
    %1957 = vst.msk [vmem:[#allocation2 + $0x8] sm:$0x4] %vm678, %v1953
    %v1958 = vrot.slane %v1946, 2
    %v1959 = vrot.slane %v1947, 1
    %v1960 = vsel %vm245, %v1959, %v1958
    %1961 = vrot.lane.b32.xlu0 %v1960, 32
    %v1962 = vpop.permute.xlu0 %1961
    %v1963 = vsel %vm156, %v1962, 0
    %1965 = vmatprep.subr.mxu0 0.0
    %1966 = vmatpush1.msra.mxu0 %v1521
    %1967 = vmatprep.subr.mxu0 0.0
    %1968 = vmatpush1.msra.mxu0 %v1522
    %1969 = vmatprep.subr.mxu0 0.0
    %1970 = vmatpush1.msra.mxu0 %v1523
    %1971 = vmatprep.subr.mxu0 0.0
    %1972 = vmatpush1.msra.mxu0 %v1524
    %1973 = vmatprep.subr.mxu0 0.0
    %1974 = vmatpush1.msra.mxu0 0.0
    %1975 = vmatprep.subr.mxu0 0.0
    %1976 = vmatpush1.msra.mxu0 0.0
    %1977 = vmatprep.subr.mxu0 0.0
    %1978 = vmatpush1.msra.mxu0 0.0
    %1979 = vmatprep.subr.mxu0 0.0
    %1980 = vmatpush1.msra.mxu0 0.0
    %1981 = vmatprep.subr.mxu0 0.0
    %1982 = vmatpush1.msra.mxu0 0.0
    %1983 = vmatprep.subr.mxu0 0.0
    %1984 = vmatpush1.msra.mxu0 0.0
    %1985 = vmatprep.subr.mxu0 0.0
    %1986 = vmatpush1.msra.mxu0 0.0
    %1987 = vmatprep.subr.mxu0 0.0
    %1988 = vmatpush1.msra.mxu0 0.0
    %1989 = vmatprep.subr.mxu0 0.0
    %1990 = vmatpush1.msra.mxu0 0.0
    %1991 = vmatprep.subr.mxu0 0.0
    %1992 = vmatpush1.msra.mxu0 0.0
    %1993 = vmatprep.subr.mxu0 0.0
    %1994 = vmatpush1.msra.mxu0 0.0
    %1995 = vmatprep.subr.mxu0 0.0
    %1996 = vmatpush1.msra.mxu0 0.0
    %1997 = vmatprep.subr.mxu0 0.0
    %1998 = vmatpush1.msra.mxu0 0.0
    %1999 = vmatprep.subr.mxu0 0.0
    %2000 = vmatpush1.msra.mxu0 0.0
    %2001 = vmatprep.subr.mxu0 0.0
    %2002 = vmatpush1.msra.mxu0 0.0
    %2003 = vmatprep.subr.mxu0 0.0
    %2004 = vmatpush1.msra.mxu0 0.0
    %2005 = vmatprep.subr.mxu0 0.0
    %2006 = vmatpush1.msra.mxu0 0.0
    %2007 = vmatprep.subr.mxu0 0.0
    %2008 = vmatpush1.msra.mxu0 0.0
    %2009 = vmatprep.subr.mxu0 0.0
    %2010 = vmatpush1.msra.mxu0 0.0
    %2011 = vmatprep.subr.mxu0 0.0
    %2012 = vmatpush1.msra.mxu0 0.0
    %2013 = vmatprep.subr.mxu0 0.0
    %2014 = vmatpush1.msra.mxu0 0.0
    %2015 = vmatprep.subr.mxu0 0.0
    %2016 = vmatpush1.msra.mxu0 0.0
    %2017 = vmatprep.subr.mxu0 0.0
    %2018 = vmatpush1.msra.mxu0 0.0
    %2019 = vmatprep.subr.mxu0 0.0
    %2020 = vmatpush1.msra.mxu0 0.0
    %2021 = vmatprep.subr.mxu0 0.0
    %2022 = vmatpush1.msra.mxu0 0.0
    %2023 = vmatprep.subr.mxu0 0.0
    %2024 = vmatpush1.msra.mxu0 0.0
    %2025 = vmatprep.subr.mxu0 0.0
    %2026 = vmatpush1.msra.mxu0 0.0
    %2027 = vmatprep.subr.mxu0 0.0
    %2028 = vmatpush1.msra.mxu0 0.0
    %2029 = vmatprep.mubr.f32.mxu0 0.0
    %2030 = vmatmul.mubr.f32.gmra.mrb[0].mxu0 %v1963
    %v2031 = vpop.f32.mrb[0].mxu0
    %v2032 = vadd.f32 0.0, %v2031
    %v2033 = vpop.f32.mrb[0].mxu0
    %2034 = vdwg.mxu0
    %v2036 = vrot.slane %v2032, 5
    %v2037 = vrot.slane %v2032, 6
    %v2040 = vadd.f32 %v1512, %v2036
    %v2041 = vadd.f32 %v1517, %v2037
    %v2042 = vsub.f32 0.0, %v2040
    %v2043 = vsub.f32 0.0, %v2041
    %v2044 = vmul.f32 %v2042, 1.442695
    %v2045 = vpow.pop %v2044
    %v2046 = vmul.f32 %v2043, 1.442695
    %v2047 = vpow.pop %v2046
    %v2048 = vadd.f32 %v2045, 1.0
    %v2049 = vadd.f32 %v2047, 1.0
    %v2050 = vrcp.pop %v2048
    %v2051 = vrcp.pop %v2049
    %v2052 = vtanh.pop %v2040
    %v2053 = vtanh.pop %v2041
    %v2056 = vrot.slane %v1934, 7
    %v2057 = vrot.slane %v1935, 7
    %v2060 = vmul.f32 %v2050, %v2056
    %v2061 = vmul.f32 %v2051, %v2057
    %2064 = vrot.lane.b32.xlu0 %v2052, 64
    %v2065 = vpop.permute.xlu0 %2064
    %2066 = vrot.lane.b32.xlu0 %v2053, 64
    %v2067 = vpop.permute.xlu0 %2066
    %v2070 = vmul.f32 %v2050, %v2065
    %v2071 = vmul.f32 %v2051, %v2067
    %2074 = vrot.lane.b32.xlu0 %v2070, 32
    %v2075 = vpop.permute.xlu0 %2074
    %2076 = vrot.lane.b32.xlu0 %v2071, 32
    %v2077 = vpop.permute.xlu0 %2076
    %v2080 = vadd.f32 %v2060, %v2075
    %v2081 = vadd.f32 %v2061, %v2077
    %v2082 = vtanh.pop %v2080
    %v2083 = vtanh.pop %v2081
    %2086 = vrot.lane.b32.xlu0 %v2082, 64
    %v2087 = vpop.permute.xlu0 %2086
    %2088 = vrot.lane.b32.xlu0 %v2083, 64
    %v2089 = vpop.permute.xlu0 %2088
    %v2092 = vmul.f32 %v2050, %v2087
    %v2093 = vmul.f32 %v2051, %v2089
    %2096 = vrot.lane.b32.xlu0 %v2092, 32
    %v2097 = vpop.permute.xlu0 %2096
    %2098 = vrot.lane.b32.xlu0 %v2093, 32
    %v2099 = vpop.permute.xlu0 %2098
    %2102 = vst.msk [vmem:[#allocation2] sm:$0x8] %vm825, %v2097
    %2103 = vst.msk [vmem:[#allocation2 + $0x8] sm:$0x8] %vm825, %v2099
    %v2104 = vrot.slane %v2092, 3
    %v2105 = vrot.slane %v2093, 2
    %v2106 = vsel %vm245, %v2105, %v2104
    %2107 = vrot.lane.b32.xlu0 %v2106, 32
    %v2108 = vpop.permute.xlu0 %2107
    %v2109 = vsel %vm156, %v2108, 0
    %2111 = vmatprep.subr.mxu0 0.0
    %2112 = vmatpush1.msra.mxu0 %v1521
    %2113 = vmatprep.subr.mxu0 0.0
    %2114 = vmatpush1.msra.mxu0 %v1522
    %2115 = vmatprep.subr.mxu0 0.0
    %2116 = vmatpush1.msra.mxu0 %v1523
    %2117 = vmatprep.subr.mxu0 0.0
    %2118 = vmatpush1.msra.mxu0 %v1524
    %2119 = vmatprep.subr.mxu0 0.0
    %2120 = vmatpush1.msra.mxu0 0.0
    %2121 = vmatprep.subr.mxu0 0.0
    %2122 = vmatpush1.msra.mxu0 0.0
    %2123 = vmatprep.subr.mxu0 0.0
    %2124 = vmatpush1.msra.mxu0 0.0
    %2125 = vmatprep.subr.mxu0 0.0
    %2126 = vmatpush1.msra.mxu0 0.0
    %2127 = vmatprep.subr.mxu0 0.0
    %2128 = vmatpush1.msra.mxu0 0.0
    %2129 = vmatprep.subr.mxu0 0.0
    %2130 = vmatpush1.msra.mxu0 0.0
    %2131 = vmatprep.subr.mxu0 0.0
    %2132 = vmatpush1.msra.mxu0 0.0
    %2133 = vmatprep.subr.mxu0 0.0
    %2134 = vmatpush1.msra.mxu0 0.0
    %2135 = vmatprep.subr.mxu0 0.0
    %2136 = vmatpush1.msra.mxu0 0.0
    %2137 = vmatprep.subr.mxu0 0.0
    %2138 = vmatpush1.msra.mxu0 0.0
    %2139 = vmatprep.subr.mxu0 0.0
    %2140 = vmatpush1.msra.mxu0 0.0
    %2141 = vmatprep.subr.mxu0 0.0
    %2142 = vmatpush1.msra.mxu0 0.0
    %2143 = vmatprep.subr.mxu0 0.0
    %2144 = vmatpush1.msra.mxu0 0.0
    %2145 = vmatprep.subr.mxu0 0.0
    %2146 = vmatpush1.msra.mxu0 0.0
    %2147 = vmatprep.subr.mxu0 0.0
    %2148 = vmatpush1.msra.mxu0 0.0
    %2149 = vmatprep.subr.mxu0 0.0
    %2150 = vmatpush1.msra.mxu0 0.0
    %2151 = vmatprep.subr.mxu0 0.0
    %2152 = vmatpush1.msra.mxu0 0.0
    %2153 = vmatprep.subr.mxu0 0.0
    %2154 = vmatpush1.msra.mxu0 0.0
    %2155 = vmatprep.subr.mxu0 0.0
    %2156 = vmatpush1.msra.mxu0 0.0
    %2157 = vmatprep.subr.mxu0 0.0
    %2158 = vmatpush1.msra.mxu0 0.0
    %2159 = vmatprep.subr.mxu0 0.0
    %2160 = vmatpush1.msra.mxu0 0.0
    %2161 = vmatprep.subr.mxu0 0.0
    %2162 = vmatpush1.msra.mxu0 0.0
    %2163 = vmatprep.subr.mxu0 0.0
    %2164 = vmatpush1.msra.mxu0 0.0
    %2165 = vmatprep.subr.mxu0 0.0
    %2166 = vmatpush1.msra.mxu0 0.0
    %2167 = vmatprep.subr.mxu0 0.0
    %2168 = vmatpush1.msra.mxu0 0.0
    %2169 = vmatprep.subr.mxu0 0.0
    %2170 = vmatpush1.msra.mxu0 0.0
    %2171 = vmatprep.subr.mxu0 0.0
    %2172 = vmatpush1.msra.mxu0 0.0
    %2173 = vmatprep.subr.mxu0 0.0
    %2174 = vmatpush1.msra.mxu0 0.0
    %2175 = vmatprep.mubr.f32.mxu0 0.0
    %2176 = vmatmul.mubr.f32.gmra.mrb[0].mxu0 %v2109
    %v2177 = vpop.f32.mrb[0].mxu0
    %v2178 = vadd.f32 0.0, %v2177
    %v2179 = vpop.f32.mrb[0].mxu0
    %2180 = vdwg.mxu0
    %v2182 = vrot.slane %v2178, 4
    %v2183 = vrot.slane %v2178, 5
    %v2186 = vadd.f32 %v1512, %v2182
    %v2187 = vadd.f32 %v1517, %v2183
    %v2188 = vsub.f32 0.0, %v2186
    %v2189 = vsub.f32 0.0, %v2187
    %v2190 = vmul.f32 %v2188, 1.442695
    %v2191 = vpow.pop %v2190
    %v2192 = vmul.f32 %v2189, 1.442695
    %v2193 = vpow.pop %v2192
    %v2194 = vadd.f32 %v2191, 1.0
    %v2195 = vadd.f32 %v2193, 1.0
    %v2196 = vrcp.pop %v2194
    %v2197 = vrcp.pop %v2195
    %v2198 = vtanh.pop %v2186
    %v2199 = vtanh.pop %v2187
    %v2202 = vrot.slane %v2080, 7
    %v2203 = vrot.slane %v2081, 7
    %v2206 = vmul.f32 %v2196, %v2202
    %v2207 = vmul.f32 %v2197, %v2203
    %2210 = vrot.lane.b32.xlu0 %v2198, 64
    %v2211 = vpop.permute.xlu0 %2210
    %2212 = vrot.lane.b32.xlu0 %v2199, 64
    %v2213 = vpop.permute.xlu0 %2212
    %v2216 = vmul.f32 %v2196, %v2211
    %v2217 = vmul.f32 %v2197, %v2213
    %2220 = vrot.lane.b32.xlu0 %v2216, 32
    %v2221 = vpop.permute.xlu0 %2220
    %2222 = vrot.lane.b32.xlu0 %v2217, 32
    %v2223 = vpop.permute.xlu0 %2222
    %v2226 = vadd.f32 %v2206, %v2221
    %v2227 = vadd.f32 %v2207, %v2223
    %v2228 = vtanh.pop %v2226
    %v2229 = vtanh.pop %v2227
    %2232 = vrot.lane.b32.xlu0 %v2228, 64
    %v2233 = vpop.permute.xlu0 %2232
    %2234 = vrot.lane.b32.xlu0 %v2229, 64
    %v2235 = vpop.permute.xlu0 %2234
    %v2238 = vmul.f32 %v2196, %v2233
    %v2239 = vmul.f32 %v2197, %v2235
    %2242 = vrot.lane.b32.xlu0 %v2238, 32
    %v2243 = vpop.permute.xlu0 %2242
    %2244 = vrot.lane.b32.xlu0 %v2239, 32
    %v2245 = vpop.permute.xlu0 %2244
    %2248 = vst.msk [vmem:[#allocation2] sm:$0x10] %vm972, %v2243
    %2249 = vst.msk [vmem:[#allocation2 + $0x8] sm:$0x10] %vm972, %v2245
    %v2250 = vrot.slane %v2238, 4
    %v2251 = vrot.slane %v2239, 3
    %v2252 = vsel %vm245, %v2251, %v2250
    %2253 = vrot.lane.b32.xlu0 %v2252, 32
    %v2254 = vpop.permute.xlu0 %2253
    %v2255 = vsel %vm156, %v2254, 0
    %2257 = vmatprep.subr.mxu0 0.0
    %2258 = vmatpush1.msra.mxu0 %v1521
    %2259 = vmatprep.subr.mxu0 0.0
    %2260 = vmatpush1.msra.mxu0 %v1522
    %2261 = vmatprep.subr.mxu0 0.0
    %2262 = vmatpush1.msra.mxu0 %v1523
    %2263 = vmatprep.subr.mxu0 0.0
    %2264 = vmatpush1.msra.mxu0 %v1524
    %2265 = vmatprep.subr.mxu0 0.0
    %2266 = vmatpush1.msra.mxu0 0.0
    %2267 = vmatprep.subr.mxu0 0.0
    %2268 = vmatpush1.msra.mxu0 0.0
    %2269 = vmatprep.subr.mxu0 0.0
    %2270 = vmatpush1.msra.mxu0 0.0
    %2271 = vmatprep.subr.mxu0 0.0
    %2272 = vmatpush1.msra.mxu0 0.0
    %2273 = vmatprep.subr.mxu0 0.0
    %2274 = vmatpush1.msra.mxu0 0.0
    %2275 = vmatprep.subr.mxu0 0.0
    %2276 = vmatpush1.msra.mxu0 0.0
    %2277 = vmatprep.subr.mxu0 0.0
    %2278 = vmatpush1.msra.mxu0 0.0
    %2279 = vmatprep.subr.mxu0 0.0
    %2280 = vmatpush1.msra.mxu0 0.0
    %2281 = vmatprep.subr.mxu0 0.0
    %2282 = vmatpush1.msra.mxu0 0.0
    %2283 = vmatprep.subr.mxu0 0.0
    %2284 = vmatpush1.msra.mxu0 0.0
    %2285 = vmatprep.subr.mxu0 0.0
    %2286 = vmatpush1.msra.mxu0 0.0
    %2287 = vmatprep.subr.mxu0 0.0
    %2288 = vmatpush1.msra.mxu0 0.0
    %2289 = vmatprep.subr.mxu0 0.0
    %2290 = vmatpush1.msra.mxu0 0.0
    %2291 = vmatprep.subr.mxu0 0.0
    %2292 = vmatpush1.msra.mxu0 0.0
    %2293 = vmatprep.subr.mxu0 0.0
    %2294 = vmatpush1.msra.mxu0 0.0
    %2295 = vmatprep.subr.mxu0 0.0
    %2296 = vmatpush1.msra.mxu0 0.0
    %2297 = vmatprep.subr.mxu0 0.0
    %2298 = vmatpush1.msra.mxu0 0.0
    %2299 = vmatprep.subr.mxu0 0.0
    %2300 = vmatpush1.msra.mxu0 0.0
    %2301 = vmatprep.subr.mxu0 0.0
    %2302 = vmatpush1.msra.mxu0 0.0
    %2303 = vmatprep.subr.mxu0 0.0
    %2304 = vmatpush1.msra.mxu0 0.0
    %2305 = vmatprep.subr.mxu0 0.0
    %2306 = vmatpush1.msra.mxu0 0.0
    %2307 = vmatprep.subr.mxu0 0.0
    %2308 = vmatpush1.msra.mxu0 0.0
    %2309 = vmatprep.subr.mxu0 0.0
    %2310 = vmatpush1.msra.mxu0 0.0
    %2311 = vmatprep.subr.mxu0 0.0
    %2312 = vmatpush1.msra.mxu0 0.0
    %2313 = vmatprep.subr.mxu0 0.0
    %2314 = vmatpush1.msra.mxu0 0.0
    %2315 = vmatprep.subr.mxu0 0.0
    %2316 = vmatpush1.msra.mxu0 0.0
    %2317 = vmatprep.subr.mxu0 0.0
    %2318 = vmatpush1.msra.mxu0 0.0
    %2319 = vmatprep.subr.mxu0 0.0
    %2320 = vmatpush1.msra.mxu0 0.0
    %2321 = vmatprep.mubr.f32.mxu0 0.0
    %2322 = vmatmul.mubr.f32.gmra.mrb[0].mxu0 %v2255
    %v2323 = vpop.f32.mrb[0].mxu0
    %v2324 = vadd.f32 0.0, %v2323
    %v2325 = vpop.f32.mrb[0].mxu0
    %2326 = vdwg.mxu0
    %v2328 = vrot.slane %v2324, 3
    %v2329 = vrot.slane %v2324, 4
    %v2332 = vadd.f32 %v1512, %v2328
    %v2333 = vadd.f32 %v1517, %v2329
    %v2334 = vsub.f32 0.0, %v2332
    %v2335 = vsub.f32 0.0, %v2333
    %v2336 = vmul.f32 %v2334, 1.442695
    %v2337 = vpow.pop %v2336
    %v2338 = vmul.f32 %v2335, 1.442695
    %v2339 = vpow.pop %v2338
    %v2340 = vadd.f32 %v2337, 1.0
    %v2341 = vadd.f32 %v2339, 1.0
    %v2342 = vrcp.pop %v2340
    %v2343 = vrcp.pop %v2341
    %v2344 = vtanh.pop %v2332
    %v2345 = vtanh.pop %v2333
    %v2348 = vrot.slane %v2226, 7
    %v2349 = vrot.slane %v2227, 7
    %v2352 = vmul.f32 %v2342, %v2348
    %v2353 = vmul.f32 %v2343, %v2349
    %2356 = vrot.lane.b32.xlu0 %v2344, 64
    %v2357 = vpop.permute.xlu0 %2356
    %2358 = vrot.lane.b32.xlu0 %v2345, 64
    %v2359 = vpop.permute.xlu0 %2358
    %v2362 = vmul.f32 %v2342, %v2357
    %v2363 = vmul.f32 %v2343, %v2359
    %2366 = vrot.lane.b32.xlu0 %v2362, 32
    %v2367 = vpop.permute.xlu0 %2366
    %2368 = vrot.lane.b32.xlu0 %v2363, 32
    %v2369 = vpop.permute.xlu0 %2368
    %v2372 = vadd.f32 %v2352, %v2367
    %v2373 = vadd.f32 %v2353, %v2369
    %v2374 = vtanh.pop %v2372
    %v2375 = vtanh.pop %v2373
    %2378 = vrot.lane.b32.xlu0 %v2374, 64
    %v2379 = vpop.permute.xlu0 %2378
    %2380 = vrot.lane.b32.xlu0 %v2375, 64
    %v2381 = vpop.permute.xlu0 %2380
    %v2384 = vmul.f32 %v2342, %v2379
    %v2385 = vmul.f32 %v2343, %v2381
    %2388 = vrot.lane.b32.xlu0 %v2384, 32
    %v2389 = vpop.permute.xlu0 %2388
    %2390 = vrot.lane.b32.xlu0 %v2385, 32
    %v2391 = vpop.permute.xlu0 %2390
    %2394 = vst.msk [vmem:[#allocation2] sm:$0x20] %vm1119, %v2389
    %2395 = vst.msk [vmem:[#allocation2 + $0x8] sm:$0x20] %vm1119, %v2391
    %v2396 = vrot.slane %v2384, 5
    %v2397 = vrot.slane %v2385, 4
    %v2398 = vsel %vm245, %v2397, %v2396
    %2399 = vrot.lane.b32.xlu0 %v2398, 32
    %v2400 = vpop.permute.xlu0 %2399
    %v2401 = vsel %vm156, %v2400, 0
    %2403 = vmatprep.subr.mxu0 0.0
    %2404 = vmatpush1.msra.mxu0 %v1521
    %2405 = vmatprep.subr.mxu0 0.0
    %2406 = vmatpush1.msra.mxu0 %v1522
    %2407 = vmatprep.subr.mxu0 0.0
    %2408 = vmatpush1.msra.mxu0 %v1523
    %2409 = vmatprep.subr.mxu0 0.0
    %2410 = vmatpush1.msra.mxu0 %v1524
    %2411 = vmatprep.subr.mxu0 0.0
    %2412 = vmatpush1.msra.mxu0 0.0
    %2413 = vmatprep.subr.mxu0 0.0
    %2414 = vmatpush1.msra.mxu0 0.0
    %2415 = vmatprep.subr.mxu0 0.0
    %2416 = vmatpush1.msra.mxu0 0.0
    %2417 = vmatprep.subr.mxu0 0.0
    %2418 = vmatpush1.msra.mxu0 0.0
    %2419 = vmatprep.subr.mxu0 0.0
    %2420 = vmatpush1.msra.mxu0 0.0
    %2421 = vmatprep.subr.mxu0 0.0
    %2422 = vmatpush1.msra.mxu0 0.0
    %2423 = vmatprep.subr.mxu0 0.0
    %2424 = vmatpush1.msra.mxu0 0.0
    %2425 = vmatprep.subr.mxu0 0.0
    %2426 = vmatpush1.msra.mxu0 0.0
    %2427 = vmatprep.subr.mxu0 0.0
    %2428 = vmatpush1.msra.mxu0 0.0
    %2429 = vmatprep.subr.mxu0 0.0
    %2430 = vmatpush1.msra.mxu0 0.0
    %2431 = vmatprep.subr.mxu0 0.0
    %2432 = vmatpush1.msra.mxu0 0.0
    %2433 = vmatprep.subr.mxu0 0.0
    %2434 = vmatpush1.msra.mxu0 0.0
    %2435 = vmatprep.subr.mxu0 0.0
    %2436 = vmatpush1.msra.mxu0 0.0
    %2437 = vmatprep.subr.mxu0 0.0
    %2438 = vmatpush1.msra.mxu0 0.0
    %2439 = vmatprep.subr.mxu0 0.0
    %2440 = vmatpush1.msra.mxu0 0.0
    %2441 = vmatprep.subr.mxu0 0.0
    %2442 = vmatpush1.msra.mxu0 0.0
    %2443 = vmatprep.subr.mxu0 0.0
    %2444 = vmatpush1.msra.mxu0 0.0
    %2445 = vmatprep.subr.mxu0 0.0
    %2446 = vmatpush1.msra.mxu0 0.0
    %2447 = vmatprep.subr.mxu0 0.0
    %2448 = vmatpush1.msra.mxu0 0.0
    %2449 = vmatprep.subr.mxu0 0.0
    %2450 = vmatpush1.msra.mxu0 0.0
    %2451 = vmatprep.subr.mxu0 0.0
    %2452 = vmatpush1.msra.mxu0 0.0
    %2453 = vmatprep.subr.mxu0 0.0
    %2454 = vmatpush1.msra.mxu0 0.0
    %2455 = vmatprep.subr.mxu0 0.0
    %2456 = vmatpush1.msra.mxu0 0.0
    %2457 = vmatprep.subr.mxu0 0.0
    %2458 = vmatpush1.msra.mxu0 0.0
    %2459 = vmatprep.subr.mxu0 0.0
    %2460 = vmatpush1.msra.mxu0 0.0
    %2461 = vmatprep.subr.mxu0 0.0
    %2462 = vmatpush1.msra.mxu0 0.0
    %2463 = vmatprep.subr.mxu0 0.0
    %2464 = vmatpush1.msra.mxu0 0.0
    %2465 = vmatprep.subr.mxu0 0.0
    %2466 = vmatpush1.msra.mxu0 0.0
    %2467 = vmatprep.mubr.f32.mxu0 0.0
    %2468 = vmatmul.mubr.f32.gmra.mrb[0].mxu0 %v2401
    %v2469 = vpop.f32.mrb[0].mxu0
    %v2470 = vadd.f32 0.0, %v2469
    %v2471 = vpop.f32.mrb[0].mxu0
    %2472 = vdwg.mxu0
    %v2474 = vrot.slane %v2470, 2
    %v2475 = vrot.slane %v2470, 3
    %v2478 = vadd.f32 %v1512, %v2474
    %v2479 = vadd.f32 %v1517, %v2475
    %v2480 = vsub.f32 0.0, %v2478
    %v2481 = vsub.f32 0.0, %v2479
    %v2482 = vmul.f32 %v2480, 1.442695
    %v2483 = vpow.pop %v2482
    %v2484 = vmul.f32 %v2481, 1.442695
    %v2485 = vpow.pop %v2484
    %v2486 = vadd.f32 %v2483, 1.0
    %v2487 = vadd.f32 %v2485, 1.0
    %v2488 = vrcp.pop %v2486
    %v2489 = vrcp.pop %v2487
    %v2490 = vtanh.pop %v2478
    %v2491 = vtanh.pop %v2479
    %v2494 = vrot.slane %v2372, 7
    %v2495 = vrot.slane %v2373, 7
    %v2498 = vmul.f32 %v2488, %v2494
    %v2499 = vmul.f32 %v2489, %v2495
    %2502 = vrot.lane.b32.xlu0 %v2490, 64
    %v2503 = vpop.permute.xlu0 %2502
    %2504 = vrot.lane.b32.xlu0 %v2491, 64
    %v2505 = vpop.permute.xlu0 %2504
    %v2508 = vmul.f32 %v2488, %v2503
    %v2509 = vmul.f32 %v2489, %v2505
    %2512 = vrot.lane.b32.xlu0 %v2508, 32
    %v2513 = vpop.permute.xlu0 %2512
    %2514 = vrot.lane.b32.xlu0 %v2509, 32
    %v2515 = vpop.permute.xlu0 %2514
    %v2518 = vadd.f32 %v2498, %v2513
    %v2519 = vadd.f32 %v2499, %v2515
    %v2520 = vtanh.pop %v2518
    %v2521 = vtanh.pop %v2519
    %2524 = vrot.lane.b32.xlu0 %v2520, 64
    %v2525 = vpop.permute.xlu0 %2524
    %2526 = vrot.lane.b32.xlu0 %v2521, 64
    %v2527 = vpop.permute.xlu0 %2526
    %v2530 = vmul.f32 %v2488, %v2525
    %v2531 = vmul.f32 %v2489, %v2527
    %2534 = vrot.lane.b32.xlu0 %v2530, 32
    %v2535 = vpop.permute.xlu0 %2534
    %2536 = vrot.lane.b32.xlu0 %v2531, 32
    %v2537 = vpop.permute.xlu0 %2536
    %2540 = vst.msk [vmem:[#allocation2] sm:$0x40] %vm1266, %v2535
    %2541 = vst.msk [vmem:[#allocation2 + $0x8] sm:$0x40] %vm1266, %v2537
    %v2542 = vrot.slane %v2530, 6
    %v2543 = vrot.slane %v2531, 5
    %v2544 = vsel %vm245, %v2543, %v2542
    %2545 = vrot.lane.b32.xlu0 %v2544, 32
    %v2546 = vpop.permute.xlu0 %2545
    %v2547 = vsel %vm156, %v2546, 0
    %2549 = vmatprep.subr.mxu0 0.0
    %2550 = vmatpush1.msra.mxu0 %v1521
    %2551 = vmatprep.subr.mxu0 0.0
    %2552 = vmatpush1.msra.mxu0 %v1522
    %2553 = vmatprep.subr.mxu0 0.0
    %2554 = vmatpush1.msra.mxu0 %v1523
    %2555 = vmatprep.subr.mxu0 0.0
    %2556 = vmatpush1.msra.mxu0 %v1524
    %2557 = vmatprep.subr.mxu0 0.0
    %2558 = vmatpush1.msra.mxu0 0.0
    %2559 = vmatprep.subr.mxu0 0.0
    %2560 = vmatpush1.msra.mxu0 0.0
    %2561 = vmatprep.subr.mxu0 0.0
    %2562 = vmatpush1.msra.mxu0 0.0
    %2563 = vmatprep.subr.mxu0 0.0
    %2564 = vmatpush1.msra.mxu0 0.0
    %2565 = vmatprep.subr.mxu0 0.0
    %2566 = vmatpush1.msra.mxu0 0.0
    %2567 = vmatprep.subr.mxu0 0.0
    %2568 = vmatpush1.msra.mxu0 0.0
    %2569 = vmatprep.subr.mxu0 0.0
    %2570 = vmatpush1.msra.mxu0 0.0
    %2571 = vmatprep.subr.mxu0 0.0
    %2572 = vmatpush1.msra.mxu0 0.0
    %2573 = vmatprep.subr.mxu0 0.0
    %2574 = vmatpush1.msra.mxu0 0.0
    %2575 = vmatprep.subr.mxu0 0.0
    %2576 = vmatpush1.msra.mxu0 0.0
    %2577 = vmatprep.subr.mxu0 0.0
    %2578 = vmatpush1.msra.mxu0 0.0
    %2579 = vmatprep.subr.mxu0 0.0
    %2580 = vmatpush1.msra.mxu0 0.0
    %2581 = vmatprep.subr.mxu0 0.0
    %2582 = vmatpush1.msra.mxu0 0.0
    %2583 = vmatprep.subr.mxu0 0.0
    %2584 = vmatpush1.msra.mxu0 0.0
    %2585 = vmatprep.subr.mxu0 0.0
    %2586 = vmatpush1.msra.mxu0 0.0
    %2587 = vmatprep.subr.mxu0 0.0
    %2588 = vmatpush1.msra.mxu0 0.0
    %2589 = vmatprep.subr.mxu0 0.0
    %2590 = vmatpush1.msra.mxu0 0.0
    %2591 = vmatprep.subr.mxu0 0.0
    %2592 = vmatpush1.msra.mxu0 0.0
    %2593 = vmatprep.subr.mxu0 0.0
    %2594 = vmatpush1.msra.mxu0 0.0
    %2595 = vmatprep.subr.mxu0 0.0
    %2596 = vmatpush1.msra.mxu0 0.0
    %2597 = vmatprep.subr.mxu0 0.0
    %2598 = vmatpush1.msra.mxu0 0.0
    %2599 = vmatprep.subr.mxu0 0.0
    %2600 = vmatpush1.msra.mxu0 0.0
    %2601 = vmatprep.subr.mxu0 0.0
    %2602 = vmatpush1.msra.mxu0 0.0
    %2603 = vmatprep.subr.mxu0 0.0
    %2604 = vmatpush1.msra.mxu0 0.0
    %2605 = vmatprep.subr.mxu0 0.0
    %2606 = vmatpush1.msra.mxu0 0.0
    %2607 = vmatprep.subr.mxu0 0.0
    %2608 = vmatpush1.msra.mxu0 0.0
    %2609 = vmatprep.subr.mxu0 0.0
    %2610 = vmatpush1.msra.mxu0 0.0
    %2611 = vmatprep.subr.mxu0 0.0
    %2612 = vmatpush1.msra.mxu0 0.0
    %2613 = vmatprep.mubr.f32.mxu0 0.0
    %2614 = vmatmul.mubr.f32.gmra.mrb[0].mxu0 %v2547
    %v2615 = vpop.f32.mrb[0].mxu0
    %v2616 = vadd.f32 0.0, %v2615
    %v2617 = vpop.f32.mrb[0].mxu0
    %2618 = vdwg.mxu0
    %v2620 = vrot.slane %v2616, 1
    %v2621 = vrot.slane %v2616, 2
    %v2624 = vadd.f32 %v1512, %v2620
    %v2625 = vadd.f32 %v1517, %v2621
    %v2626 = vsub.f32 0.0, %v2624
    %v2627 = vsub.f32 0.0, %v2625
    %v2628 = vmul.f32 %v2626, 1.442695
    %v2629 = vpow.pop %v2628
    %v2630 = vmul.f32 %v2627, 1.442695
    %v2631 = vpow.pop %v2630
    %v2632 = vadd.f32 %v2629, 1.0
    %v2633 = vadd.f32 %v2631, 1.0
    %v2634 = vrcp.pop %v2632
    %v2635 = vrcp.pop %v2633
    %v2636 = vtanh.pop %v2624
    %v2637 = vtanh.pop %v2625
    %v2640 = vrot.slane %v2518, 7
    %v2641 = vrot.slane %v2519, 7
    %v2644 = vmul.f32 %v2634, %v2640
    %v2645 = vmul.f32 %v2635, %v2641
    %2648 = vrot.lane.b32.xlu0 %v2636, 64
    %v2649 = vpop.permute.xlu0 %2648
    %2650 = vrot.lane.b32.xlu0 %v2637, 64
    %v2651 = vpop.permute.xlu0 %2650
    %v2654 = vmul.f32 %v2634, %v2649
    %v2655 = vmul.f32 %v2635, %v2651
    %2658 = vrot.lane.b32.xlu0 %v2654, 32
    %v2659 = vpop.permute.xlu0 %2658
    %2660 = vrot.lane.b32.xlu0 %v2655, 32
    %v2661 = vpop.permute.xlu0 %2660
    %v2664 = vadd.f32 %v2644, %v2659
    %v2665 = vadd.f32 %v2645, %v2661
    %v2666 = vtanh.pop %v2664
    %v2667 = vtanh.pop %v2665
    %2670 = vrot.lane.b32.xlu0 %v2666, 64
    %v2671 = vpop.permute.xlu0 %2670
    %2672 = vrot.lane.b32.xlu0 %v2667, 64
    %v2673 = vpop.permute.xlu0 %2672
    %v2676 = vmul.f32 %v2634, %v2671
    %v2677 = vmul.f32 %v2635, %v2673
    %2680 = vrot.lane.b32.xlu0 %v2676, 32
    %v2681 = vpop.permute.xlu0 %2680
    %2682 = vrot.lane.b32.xlu0 %v2677, 32
    %v2683 = vpop.permute.xlu0 %2682
    %2686 = vst.msk [vmem:[#allocation2] sm:$0x80] %vm1413, %v2681
    %2687 = vst.msk [vmem:[#allocation2 + $0x8] sm:$0x80] %vm1413, %v2683
    %2688 = vst.msk [vmem:[%s14 - $0x6] sm:$0x80] %vm1413, %v2681
    %2689 = vst.msk [vmem:[%s14 - $0x4] sm:$0x80] %vm1413, %v2683
    %2692 = vrot.lane.b32.xlu0 %v2664, 96
    %v2693 = vpop.permute.xlu0 %2692
    %2694 = vrot.lane.b32.xlu0 %v2665, 96
    %v2695 = vpop.permute.xlu0 %2694
    %2698 = vst.msk [vmem:[%s15 - $0x6] sm:$0x80] %vm1413, %v2693
    %2699 = vst.msk [vmem:[%s15 - $0x4] sm:$0x80] %vm1413, %v2695
    %v2700 = vld [vmem:[#allocation2] sm:$0xff]
    %v2701 = vld [vmem:[#allocation2 + $0x8] sm:$0xff]
    %v2702 = vld [vmem:[#allocation6] sm:$0xff]
    %v2703 = vld [vmem:[#allocation6 + $0x8] sm:$0xff]
    %v2705 = vsel %vm156, %v2700, 0
    %v2708 = vsel %vm156, %v2702, 0
    %2710 = vmatprep.subr.mxu0 0.0
    %2711 = vmatpush1.xpose.msra.mxu0 %v2708
    %2712 = vmatprep.subr.mxu0 0.0
    %2713 = vmatpush1.xpose.msra.mxu0 0.0
    %2714 = vmatprep.subr.mxu0 0.0
    %2715 = vmatpush1.xpose.msra.mxu0 0.0
    %2716 = vmatprep.subr.mxu0 0.0
    %2717 = vmatpush1.xpose.msra.mxu0 0.0
    %2718 = vmatprep.subr.mxu0 0.0
    %2719 = vmatpush1.xpose.msra.mxu0 0.0
    %2720 = vmatprep.subr.mxu0 0.0
    %2721 = vmatpush1.xpose.msra.mxu0 0.0
    %2722 = vmatprep.subr.mxu0 0.0
    %2723 = vmatpush1.xpose.msra.mxu0 0.0
    %2724 = vmatprep.subr.mxu0 0.0
    %2725 = vmatpush1.xpose.msra.mxu0 0.0
    %2726 = vmatprep.subr.mxu0 0.0
    %2727 = vmatpush1.xpose.msra.mxu0 0.0
    %2728 = vmatprep.subr.mxu0 0.0
    %2729 = vmatpush1.xpose.msra.mxu0 0.0
    %2730 = vmatprep.subr.mxu0 0.0
    %2731 = vmatpush1.xpose.msra.mxu0 0.0
    %2732 = vmatprep.subr.mxu0 0.0
    %2733 = vmatpush1.xpose.msra.mxu0 0.0
    %2734 = vmatprep.subr.mxu0 0.0
    %2735 = vmatpush1.xpose.msra.mxu0 0.0
    %2736 = vmatprep.subr.mxu0 0.0
    %2737 = vmatpush1.xpose.msra.mxu0 0.0
    %2738 = vmatprep.subr.mxu0 0.0
    %2739 = vmatpush1.xpose.msra.mxu0 0.0
    %2740 = vmatprep.subr.mxu0 0.0
    %2741 = vmatpush1.xpose.msra.mxu0 0.0
    %2742 = vmatprep.subr.mxu0 0.0
    %2743 = vmatpush1.xpose.msra.mxu0 0.0
    %2744 = vmatprep.subr.mxu0 0.0
    %2745 = vmatpush1.xpose.msra.mxu0 0.0
    %2746 = vmatprep.subr.mxu0 0.0
    %2747 = vmatpush1.xpose.msra.mxu0 0.0
    %2748 = vmatprep.subr.mxu0 0.0
    %2749 = vmatpush1.xpose.msra.mxu0 0.0
    %2750 = vmatprep.subr.mxu0 0.0
    %2751 = vmatpush1.xpose.msra.mxu0 0.0
    %2752 = vmatprep.subr.mxu0 0.0
    %2753 = vmatpush1.xpose.msra.mxu0 0.0
    %2754 = vmatprep.subr.mxu0 0.0
    %2755 = vmatpush1.xpose.msra.mxu0 0.0
    %2756 = vmatprep.subr.mxu0 0.0
    %2757 = vmatpush1.xpose.msra.mxu0 0.0
    %2758 = vmatprep.subr.mxu0 0.0
    %2759 = vmatpush1.xpose.msra.mxu0 0.0
    %2760 = vmatprep.subr.mxu0 0.0
    %2761 = vmatpush1.xpose.msra.mxu0 0.0
    %2762 = vmatprep.subr.mxu0 0.0
    %2763 = vmatpush1.xpose.msra.mxu0 0.0
    %2764 = vmatprep.subr.mxu0 0.0
    %2765 = vmatpush1.xpose.msra.mxu0 0.0
    %2766 = vmatprep.subr.mxu0 0.0
    %2767 = vmatpush1.xpose.msra.mxu0 0.0
    %2768 = vmatprep.subr.mxu0 0.0
    %2769 = vmatpush1.xpose.msra.mxu0 0.0
    %2770 = vmatprep.subr.mxu0 0.0
    %2771 = vmatpush1.xpose.msra.mxu0 0.0
    %2772 = vmatprep.subr.mxu0 0.0
    %2773 = vmatpush1.xpose.msra.mxu0 0.0
    %2774 = vmatprep.mubr.f32.mxu0 0.0
    %2775 = vmatmul.mubr.f32.gmra.mrb[0].mxu0 %v2705
    %v2776 = vpop.f32.mrb[0].mxu0
    %v2777 = vadd.f32 0.0, %v2776
    %v2778 = vpop.f32.mrb[0].mxu0
    %2779 = vdwg.mxu0
    %v2781 = vsel %vm156, %v2701, 0
    %v2784 = vsel %vm156, %v2703, 0
    %2786 = vmatprep.subr.mxu0 0.0
    %2787 = vmatpush1.xpose.msra.mxu0 %v2784
    %2788 = vmatprep.subr.mxu0 0.0
    %2789 = vmatpush1.xpose.msra.mxu0 0.0
    %2790 = vmatprep.subr.mxu0 0.0
    %2791 = vmatpush1.xpose.msra.mxu0 0.0
    %2792 = vmatprep.subr.mxu0 0.0
    %2793 = vmatpush1.xpose.msra.mxu0 0.0
    %2794 = vmatprep.subr.mxu0 0.0
    %2795 = vmatpush1.xpose.msra.mxu0 0.0
    %2796 = vmatprep.subr.mxu0 0.0
    %2797 = vmatpush1.xpose.msra.mxu0 0.0
    %2798 = vmatprep.subr.mxu0 0.0
    %2799 = vmatpush1.xpose.msra.mxu0 0.0
    %2800 = vmatprep.subr.mxu0 0.0
    %2801 = vmatpush1.xpose.msra.mxu0 0.0
    %2802 = vmatprep.subr.mxu0 0.0
    %2803 = vmatpush1.xpose.msra.mxu0 0.0
    %2804 = vmatprep.subr.mxu0 0.0
    %2805 = vmatpush1.xpose.msra.mxu0 0.0
    %2806 = vmatprep.subr.mxu0 0.0
    %2807 = vmatpush1.xpose.msra.mxu0 0.0
    %2808 = vmatprep.subr.mxu0 0.0
    %2809 = vmatpush1.xpose.msra.mxu0 0.0
    %2810 = vmatprep.subr.mxu0 0.0
    %2811 = vmatpush1.xpose.msra.mxu0 0.0
    %2812 = vmatprep.subr.mxu0 0.0
    %2813 = vmatpush1.xpose.msra.mxu0 0.0
    %2814 = vmatprep.subr.mxu0 0.0
    %2815 = vmatpush1.xpose.msra.mxu0 0.0
    %2816 = vmatprep.subr.mxu0 0.0
    %2817 = vmatpush1.xpose.msra.mxu0 0.0
    %2818 = vmatprep.subr.mxu0 0.0
    %2819 = vmatpush1.xpose.msra.mxu0 0.0
    %2820 = vmatprep.subr.mxu0 0.0
    %2821 = vmatpush1.xpose.msra.mxu0 0.0
    %2822 = vmatprep.subr.mxu0 0.0
    %2823 = vmatpush1.xpose.msra.mxu0 0.0
    %2824 = vmatprep.subr.mxu0 0.0
    %2825 = vmatpush1.xpose.msra.mxu0 0.0
    %2826 = vmatprep.subr.mxu0 0.0
    %2827 = vmatpush1.xpose.msra.mxu0 0.0
    %2828 = vmatprep.subr.mxu0 0.0
    %2829 = vmatpush1.xpose.msra.mxu0 0.0
    %2830 = vmatprep.subr.mxu0 0.0
    %2831 = vmatpush1.xpose.msra.mxu0 0.0
    %2832 = vmatprep.subr.mxu0 0.0
    %2833 = vmatpush1.xpose.msra.mxu0 0.0
    %2834 = vmatprep.subr.mxu0 0.0
    %2835 = vmatpush1.xpose.msra.mxu0 0.0
    %2836 = vmatprep.subr.mxu0 0.0
    %2837 = vmatpush1.xpose.msra.mxu0 0.0
    %2838 = vmatprep.subr.mxu0 0.0
    %2839 = vmatpush1.xpose.msra.mxu0 0.0
    %2840 = vmatprep.subr.mxu0 0.0
    %2841 = vmatpush1.xpose.msra.mxu0 0.0
    %2842 = vmatprep.subr.mxu0 0.0
    %2843 = vmatpush1.xpose.msra.mxu0 0.0
    %2844 = vmatprep.subr.mxu0 0.0
    %2845 = vmatpush1.xpose.msra.mxu0 0.0
    %2846 = vmatprep.subr.mxu0 0.0
    %2847 = vmatpush1.xpose.msra.mxu0 0.0
    %2848 = vmatprep.subr.mxu0 0.0
    %2849 = vmatpush1.xpose.msra.mxu0 0.0
    %2850 = vmatprep.mubr.f32.mxu0 0.0
    %2851 = vmatmul.mubr.f32.gmra.mrb[0].mxu0 %v2781
    %v2852 = vpop.f32.mrb[0].mxu0
    %v2853 = vadd.f32 0.0, %v2852
    %v2854 = vpop.f32.mrb[0].mxu0
    %2855 = vdwg.mxu0
    %vm2856 = vcmask 64512
    %v2857 = vsel %vm2856, %v2777, -inf
    %2858 = vmax.xlane.f32.xlu0 %v2857
    %v2859 = vpop.xlane.xlu0 %2858
    %v2860 = vsel %vm2856, %v2853, -inf
    %2861 = vmax.xlane.f32.xlu0 %v2860
    %v2862 = vpop.xlane.xlu0 %2861
    %v2863 = vsub.f32 %v2777, %v2859
    %v2864 = vsub.f32 %v2853, %v2862
    %v2865 = vmul.f32 %v2863, 1.442695
    %v2866 = vpow.pop %v2865
    %v2867 = vmul.f32 %v2864, 1.442695
    %v2868 = vpow.pop %v2867
    %v2869 = vsel %vm2856, %v2866, 0.0
    %2870 = vadd.xlane.f32.xlu0 %v2869
    %v2871 = vpop.xlane.xlu0 %2870
    %v2872 = vsel %vm2856, %v2868, 0.0
    %2873 = vadd.xlane.f32.xlu0 %v2872
    %v2874 = vpop.xlane.xlu0 %2873
    %v2875 = vrcp.pop %v2871
    %v2876 = vrcp.pop %v2874
    %v2877 = vmul.f32 %v2866, %v2875
    %v2878 = vmul.f32 %v2868, %v2876
    %v2880 = vsel %vm2856, %v2877, 0
    %2882 = vmatprep.subr.mxu0 0.0
    %2883 = vmatpush1.msra.mxu0 %v2702
    %2884 = vmatprep.subr.mxu0 0.0
    %2885 = vmatpush1.msra.mxu0 0.0
    %2886 = vmatprep.subr.mxu0 0.0
    %2887 = vmatpush1.msra.mxu0 0.0
    %2888 = vmatprep.subr.mxu0 0.0
    %2889 = vmatpush1.msra.mxu0 0.0
    %2890 = vmatprep.subr.mxu0 0.0
    %2891 = vmatpush1.msra.mxu0 0.0
    %2892 = vmatprep.subr.mxu0 0.0
    %2893 = vmatpush1.msra.mxu0 0.0
    %2894 = vmatprep.subr.mxu0 0.0
    %2895 = vmatpush1.msra.mxu0 0.0
    %2896 = vmatprep.subr.mxu0 0.0
    %2897 = vmatpush1.msra.mxu0 0.0
    %2898 = vmatprep.subr.mxu0 0.0
    %2899 = vmatpush1.msra.mxu0 0.0
    %2900 = vmatprep.subr.mxu0 0.0
    %2901 = vmatpush1.msra.mxu0 0.0
    %2902 = vmatprep.subr.mxu0 0.0
    %2903 = vmatpush1.msra.mxu0 0.0
    %2904 = vmatprep.subr.mxu0 0.0
    %2905 = vmatpush1.msra.mxu0 0.0
    %2906 = vmatprep.subr.mxu0 0.0
    %2907 = vmatpush1.msra.mxu0 0.0
    %2908 = vmatprep.subr.mxu0 0.0
    %2909 = vmatpush1.msra.mxu0 0.0
    %2910 = vmatprep.subr.mxu0 0.0
    %2911 = vmatpush1.msra.mxu0 0.0
    %2912 = vmatprep.subr.mxu0 0.0
    %2913 = vmatpush1.msra.mxu0 0.0
    %2914 = vmatprep.subr.mxu0 0.0
    %2915 = vmatpush1.msra.mxu0 0.0
    %2916 = vmatprep.subr.mxu0 0.0
    %2917 = vmatpush1.msra.mxu0 0.0
    %2918 = vmatprep.subr.mxu0 0.0
    %2919 = vmatpush1.msra.mxu0 0.0
    %2920 = vmatprep.subr.mxu0 0.0
    %2921 = vmatpush1.msra.mxu0 0.0
    %2922 = vmatprep.subr.mxu0 0.0
    %2923 = vmatpush1.msra.mxu0 0.0
    %2924 = vmatprep.subr.mxu0 0.0
    %2925 = vmatpush1.msra.mxu0 0.0
    %2926 = vmatprep.subr.mxu0 0.0
    %2927 = vmatpush1.msra.mxu0 0.0
    %2928 = vmatprep.subr.mxu0 0.0
    %2929 = vmatpush1.msra.mxu0 0.0
    %2930 = vmatprep.subr.mxu0 0.0
    %2931 = vmatpush1.msra.mxu0 0.0
    %2932 = vmatprep.subr.mxu0 0.0
    %2933 = vmatpush1.msra.mxu0 0.0
    %2934 = vmatprep.subr.mxu0 0.0
    %2935 = vmatpush1.msra.mxu0 0.0
    %2936 = vmatprep.subr.mxu0 0.0
    %2937 = vmatpush1.msra.mxu0 0.0
    %2938 = vmatprep.subr.mxu0 0.0
    %2939 = vmatpush1.msra.mxu0 0.0
    %2940 = vmatprep.subr.mxu0 0.0
    %2941 = vmatpush1.msra.mxu0 0.0
    %2942 = vmatprep.subr.mxu0 0.0
    %2943 = vmatpush1.msra.mxu0 0.0
    %2944 = vmatprep.subr.mxu0 0.0
    %2945 = vmatpush1.msra.mxu0 0.0
    %2946 = vmatprep.mubr.f32.mxu0 0.0
    %2947 = vmatmul.mubr.f32.gmra.mrb[0].mxu0 %v2880
    %v2948 = vpop.f32.mrb[0].mxu0
    %v2949 = vadd.f32 0.0, %v2948
    %v2950 = vpop.f32.mrb[0].mxu0
    %2951 = vdwg.mxu0
    %v2953 = vsel %vm2856, %v2878, 0
    %2955 = vmatprep.subr.mxu0 0.0
    %2956 = vmatpush1.msra.mxu0 %v2703
    %2957 = vmatprep.subr.mxu0 0.0
    %2958 = vmatpush1.msra.mxu0 0.0
    %2959 = vmatprep.subr.mxu0 0.0
    %2960 = vmatpush1.msra.mxu0 0.0
    %2961 = vmatprep.subr.mxu0 0.0
    %2962 = vmatpush1.msra.mxu0 0.0
    %2963 = vmatprep.subr.mxu0 0.0
    %2964 = vmatpush1.msra.mxu0 0.0
    %2965 = vmatprep.subr.mxu0 0.0
    %2966 = vmatpush1.msra.mxu0 0.0
    %2967 = vmatprep.subr.mxu0 0.0
    %2968 = vmatpush1.msra.mxu0 0.0
    %2969 = vmatprep.subr.mxu0 0.0
    %2970 = vmatpush1.msra.mxu0 0.0
    %2971 = vmatprep.subr.mxu0 0.0
    %2972 = vmatpush1.msra.mxu0 0.0
    %2973 = vmatprep.subr.mxu0 0.0
    %2974 = vmatpush1.msra.mxu0 0.0
    %2975 = vmatprep.subr.mxu0 0.0
    %2976 = vmatpush1.msra.mxu0 0.0
    %2977 = vmatprep.subr.mxu0 0.0
    %2978 = vmatpush1.msra.mxu0 0.0
    %2979 = vmatprep.subr.mxu0 0.0
    %2980 = vmatpush1.msra.mxu0 0.0
    %2981 = vmatprep.subr.mxu0 0.0
    %2982 = vmatpush1.msra.mxu0 0.0
    %2983 = vmatprep.subr.mxu0 0.0
    %2984 = vmatpush1.msra.mxu0 0.0
    %2985 = vmatprep.subr.mxu0 0.0
    %2986 = vmatpush1.msra.mxu0 0.0
    %2987 = vmatprep.subr.mxu0 0.0
    %2988 = vmatpush1.msra.mxu0 0.0
    %2989 = vmatprep.subr.mxu0 0.0
    %2990 = vmatpush1.msra.mxu0 0.0
    %2991 = vmatprep.subr.mxu0 0.0
    %2992 = vmatpush1.msra.mxu0 0.0
    %2993 = vmatprep.subr.mxu0 0.0
    %2994 = vmatpush1.msra.mxu0 0.0
    %2995 = vmatprep.subr.mxu0 0.0
    %2996 = vmatpush1.msra.mxu0 0.0
    %2997 = vmatprep.subr.mxu0 0.0
    %2998 = vmatpush1.msra.mxu0 0.0
    %2999 = vmatprep.subr.mxu0 0.0
    %3000 = vmatpush1.msra.mxu0 0.0
    %3001 = vmatprep.subr.mxu0 0.0
    %3002 = vmatpush1.msra.mxu0 0.0
    %3003 = vmatprep.subr.mxu0 0.0
    %3004 = vmatpush1.msra.mxu0 0.0
    %3005 = vmatprep.subr.mxu0 0.0
    %3006 = vmatpush1.msra.mxu0 0.0
    %3007 = vmatprep.subr.mxu0 0.0
    %3008 = vmatpush1.msra.mxu0 0.0
    %3009 = vmatprep.subr.mxu0 0.0
    %3010 = vmatpush1.msra.mxu0 0.0
    %3011 = vmatprep.subr.mxu0 0.0
    %3012 = vmatpush1.msra.mxu0 0.0
    %3013 = vmatprep.subr.mxu0 0.0
    %3014 = vmatpush1.msra.mxu0 0.0
    %3015 = vmatprep.subr.mxu0 0.0
    %3016 = vmatpush1.msra.mxu0 0.0
    %3017 = vmatprep.subr.mxu0 0.0
    %3018 = vmatpush1.msra.mxu0 0.0
    %3019 = vmatprep.mubr.f32.mxu0 0.0
    %3020 = vmatmul.mubr.f32.gmra.mrb[0].mxu0 %v2953
    %v3021 = vpop.f32.mrb[0].mxu0
    %v3022 = vadd.f32 0.0, %v3021
    %v3023 = vpop.f32.mrb[0].mxu0
    %3024 = vdwg.mxu0
    %v3025 = vld [vmem:[#allocation12] sm:$0xff]
    %v3026 = vld [vmem:[#allocation12 + $0x8] sm:$0xff]
    %v3027 = vld [vmem:[#allocation12 + $0x10] sm:$0xff]
    %v3028 = vld [vmem:[#allocation12 + $0x18] sm:$0xff]
    %v3029 = vld [vmem:[#allocation14] sm:$0xff]
    %v3030 = vld [vmem:[#allocation14 + $0x8] sm:$0xff]
    %v3031 = vld [vmem:[#allocation14 + $0x10] sm:$0xff]
    %v3032 = vld [vmem:[#allocation14 + $0x18] sm:$0xff]
    %3033 = vmatprep.subr.mxu0 0.0
    %3034 = vmatpush1.msra.mxu0 %v3029
    %3035 = vmatprep.subr.mxu0 0.0
    %3036 = vmatpush1.msra.mxu0 %v3030
    %3037 = vmatprep.subr.mxu0 0.0
    %3038 = vmatpush1.msra.mxu0 %v3031
    %3039 = vmatprep.subr.mxu0 0.0
    %3040 = vmatpush1.msra.mxu0 %v3032
    %3041 = vmatprep.subr.mxu0 0.0
    %3042 = vmatpush1.msra.mxu0 0.0
    %3043 = vmatprep.subr.mxu0 0.0
    %3044 = vmatpush1.msra.mxu0 0.0
    %3045 = vmatprep.subr.mxu0 0.0
    %3046 = vmatpush1.msra.mxu0 0.0
    %3047 = vmatprep.subr.mxu0 0.0
    %3048 = vmatpush1.msra.mxu0 0.0
    %3049 = vmatprep.subr.mxu0 0.0
    %3050 = vmatpush1.msra.mxu0 0.0
    %3051 = vmatprep.subr.mxu0 0.0
    %3052 = vmatpush1.msra.mxu0 0.0
    %3053 = vmatprep.subr.mxu0 0.0
    %3054 = vmatpush1.msra.mxu0 0.0
    %3055 = vmatprep.subr.mxu0 0.0
    %3056 = vmatpush1.msra.mxu0 0.0
    %3057 = vmatprep.subr.mxu0 0.0
    %3058 = vmatpush1.msra.mxu0 0.0
    %3059 = vmatprep.subr.mxu0 0.0
    %3060 = vmatpush1.msra.mxu0 0.0
    %3061 = vmatprep.subr.mxu0 0.0
    %3062 = vmatpush1.msra.mxu0 0.0
    %3063 = vmatprep.subr.mxu0 0.0
    %3064 = vmatpush1.msra.mxu0 0.0
    %3065 = vmatprep.subr.mxu0 0.0
    %3066 = vmatpush1.msra.mxu0 0.0
    %3067 = vmatprep.subr.mxu0 0.0
    %3068 = vmatpush1.msra.mxu0 0.0
    %3069 = vmatprep.subr.mxu0 0.0
    %3070 = vmatpush1.msra.mxu0 0.0
    %3071 = vmatprep.subr.mxu0 0.0
    %3072 = vmatpush1.msra.mxu0 0.0
    %3073 = vmatprep.subr.mxu0 0.0
    %3074 = vmatpush1.msra.mxu0 0.0
    %3075 = vmatprep.subr.mxu0 0.0
    %3076 = vmatpush1.msra.mxu0 0.0
    %3077 = vmatprep.subr.mxu0 0.0
    %3078 = vmatpush1.msra.mxu0 0.0
    %3079 = vmatprep.subr.mxu0 0.0
    %3080 = vmatpush1.msra.mxu0 0.0
    %3081 = vmatprep.subr.mxu0 0.0
    %3082 = vmatpush1.msra.mxu0 0.0
    %3083 = vmatprep.subr.mxu0 0.0
    %3084 = vmatpush1.msra.mxu0 0.0
    %3085 = vmatprep.subr.mxu0 0.0
    %3086 = vmatpush1.msra.mxu0 0.0
    %3087 = vmatprep.subr.mxu0 0.0
    %3088 = vmatpush1.msra.mxu0 0.0
    %3089 = vmatprep.subr.mxu0 0.0
    %3090 = vmatpush1.msra.mxu0 0.0
    %3091 = vmatprep.subr.mxu0 0.0
    %3092 = vmatpush1.msra.mxu0 0.0
    %3093 = vmatprep.subr.mxu0 0.0
    %3094 = vmatpush1.msra.mxu0 0.0
    %3095 = vmatprep.subr.mxu0 0.0
    %3096 = vmatpush1.msra.mxu0 0.0
    %3097 = vmatprep.mubr.f32.mxu0 0.0
    %3098 = vmatmul.mubr.f32.gmra.mrb[0].mxu0 %v2705
    %v3099 = vpop.f32.mrb[0].mxu0
    %v3100 = vadd.f32 0.0, %v3099
    %v3101 = vpop.f32.mrb[0].mxu0
    %3102 = vmatprep.mubr.f32.mxu0 0.0
    %3103 = vmatmul.mubr.f32.gmra.mrb[0].mxu0 %v2781
    %v3104 = vpop.f32.mrb[0].mxu0
    %v3105 = vadd.f32 0.0, %v3104
    %v3106 = vpop.f32.mrb[0].mxu0
    %3107 = vdwg.mxu0
    %v3109 = vsel %vm156, %v2949, 0
    %v3112 = vsel %vm156, %v3022, 0
    %3114 = vmatprep.subr.mxu0 0.0
    %3115 = vmatpush1.msra.mxu0 %v3025
    %3116 = vmatprep.subr.mxu0 0.0
    %3117 = vmatpush1.msra.mxu0 %v3026
    %3118 = vmatprep.subr.mxu0 0.0
    %3119 = vmatpush1.msra.mxu0 %v3027
    %3120 = vmatprep.subr.mxu0 0.0
    %3121 = vmatpush1.msra.mxu0 %v3028
    %3122 = vmatprep.subr.mxu0 0.0
    %3123 = vmatpush1.msra.mxu0 0.0
    %3124 = vmatprep.subr.mxu0 0.0
    %3125 = vmatpush1.msra.mxu0 0.0
    %3126 = vmatprep.subr.mxu0 0.0
    %3127 = vmatpush1.msra.mxu0 0.0
    %3128 = vmatprep.subr.mxu0 0.0
    %3129 = vmatpush1.msra.mxu0 0.0
    %3130 = vmatprep.subr.mxu0 0.0
    %3131 = vmatpush1.msra.mxu0 0.0
    %3132 = vmatprep.subr.mxu0 0.0
    %3133 = vmatpush1.msra.mxu0 0.0
    %3134 = vmatprep.subr.mxu0 0.0
    %3135 = vmatpush1.msra.mxu0 0.0
    %3136 = vmatprep.subr.mxu0 0.0
    %3137 = vmatpush1.msra.mxu0 0.0
    %3138 = vmatprep.subr.mxu0 0.0
    %3139 = vmatpush1.msra.mxu0 0.0
    %3140 = vmatprep.subr.mxu0 0.0
    %3141 = vmatpush1.msra.mxu0 0.0
    %3142 = vmatprep.subr.mxu0 0.0
    %3143 = vmatpush1.msra.mxu0 0.0
    %3144 = vmatprep.subr.mxu0 0.0
    %3145 = vmatpush1.msra.mxu0 0.0
    %3146 = vmatprep.subr.mxu0 0.0
    %3147 = vmatpush1.msra.mxu0 0.0
    %3148 = vmatprep.subr.mxu0 0.0
    %3149 = vmatpush1.msra.mxu0 0.0
    %3150 = vmatprep.subr.mxu0 0.0
    %3151 = vmatpush1.msra.mxu0 0.0
    %3152 = vmatprep.subr.mxu0 0.0
    %3153 = vmatpush1.msra.mxu0 0.0
    %3154 = vmatprep.subr.mxu0 0.0
    %3155 = vmatpush1.msra.mxu0 0.0
    %3156 = vmatprep.subr.mxu0 0.0
    %3157 = vmatpush1.msra.mxu0 0.0
    %3158 = vmatprep.subr.mxu0 0.0
    %3159 = vmatpush1.msra.mxu0 0.0
    %3160 = vmatprep.subr.mxu0 0.0
    %3161 = vmatpush1.msra.mxu0 0.0
    %3162 = vmatprep.subr.mxu0 0.0
    %3163 = vmatpush1.msra.mxu0 0.0
    %3164 = vmatprep.subr.mxu0 0.0
    %3165 = vmatpush1.msra.mxu0 0.0
    %3166 = vmatprep.subr.mxu0 0.0
    %3167 = vmatpush1.msra.mxu0 0.0
    %3168 = vmatprep.subr.mxu0 0.0
    %3169 = vmatpush1.msra.mxu0 0.0
    %3170 = vmatprep.subr.mxu0 0.0
    %3171 = vmatpush1.msra.mxu0 0.0
    %3172 = vmatprep.subr.mxu0 0.0
    %3173 = vmatpush1.msra.mxu0 0.0
    %3174 = vmatprep.subr.mxu0 0.0
    %3175 = vmatpush1.msra.mxu0 0.0
    %3176 = vmatprep.subr.mxu0 0.0
    %3177 = vmatpush1.msra.mxu0 0.0
    %3178 = vmatprep.mubr.f32.mxu0 0.0
    %3179 = vmatmul.mubr.f32.gmra.mrb[0].mxu0 %v3109
    %v3180 = vpop.f32.mrb[0].mxu0
    %v3181 = vadd.f32 %v3100, %v3180
    %v3182 = vpop.f32.mrb[0].mxu0
    %3183 = vmatprep.mubr.f32.mxu0 0.0
    %3184 = vmatmul.mubr.f32.gmra.mrb[0].mxu0 %v3112
    %v3185 = vpop.f32.mrb[0].mxu0
    %v3186 = vadd.f32 %v3105, %v3185
    %v3187 = vpop.f32.mrb[0].mxu0
    %3188 = vdwg.mxu0
    %v3189 = vld [vmem:[%s10] sm:$0x1]
    %v3191 = vlaneseq
    %v3192 = vshrl.u32 %v3191, 7
    %v3193 = vsub.s32 0, %v3192
    %v3194 = vrot.slane %v3189, %v3193
    %v3196 = vadd.f32 %v3181, %v3194
    %v3197 = vadd.f32 %v3186, %v3194
    %v3198 = vtanh.pop %v3196
    %v3199 = vtanh.pop %v3197
    %v3200 = vld [vmem:[%s11] sm:$0xff]
    %v3201 = vld [vmem:[%s11 + $0x8] sm:$0xff]
    %v3202 = vld [vmem:[%s11 + $0x10] sm:$0xff]
    %v3203 = vld [vmem:[%s11 + $0x18] sm:$0xff]
    %v3204 = vld [vmem:[%s12] sm:$0x1]
    %v3206 = vlaneseq
    %v3207 = vshrl.u32 %v3206, 7
    %v3208 = vsub.s32 0, %v3207
    %v3209 = vrot.slane %v3204, %v3208
    %v3212 = vsel %vm156, %v3198, 0
    %v3215 = vsel %vm156, %v3199, 0
    %3217 = vmatprep.subr.mxu0 0.0
    %3218 = vmatpush1.msra.mxu0 %v3200
    %3219 = vmatprep.subr.mxu0 0.0
    %3220 = vmatpush1.msra.mxu0 %v3201
    %3221 = vmatprep.subr.mxu0 0.0
    %3222 = vmatpush1.msra.mxu0 %v3202
    %3223 = vmatprep.subr.mxu0 0.0
    %3224 = vmatpush1.msra.mxu0 %v3203
    %3225 = vmatprep.subr.mxu0 0.0
    %3226 = vmatpush1.msra.mxu0 0.0
    %3227 = vmatprep.subr.mxu0 0.0
    %3228 = vmatpush1.msra.mxu0 0.0
    %3229 = vmatprep.subr.mxu0 0.0
    %3230 = vmatpush1.msra.mxu0 0.0
    %3231 = vmatprep.subr.mxu0 0.0
    %3232 = vmatpush1.msra.mxu0 0.0
    %3233 = vmatprep.subr.mxu0 0.0
    %3234 = vmatpush1.msra.mxu0 0.0
    %3235 = vmatprep.subr.mxu0 0.0
    %3236 = vmatpush1.msra.mxu0 0.0
    %3237 = vmatprep.subr.mxu0 0.0
    %3238 = vmatpush1.msra.mxu0 0.0
    %3239 = vmatprep.subr.mxu0 0.0
    %3240 = vmatpush1.msra.mxu0 0.0
    %3241 = vmatprep.subr.mxu0 0.0
    %3242 = vmatpush1.msra.mxu0 0.0
    %3243 = vmatprep.subr.mxu0 0.0
    %3244 = vmatpush1.msra.mxu0 0.0
    %3245 = vmatprep.subr.mxu0 0.0
    %3246 = vmatpush1.msra.mxu0 0.0
    %3247 = vmatprep.subr.mxu0 0.0
    %3248 = vmatpush1.msra.mxu0 0.0
    %3249 = vmatprep.subr.mxu0 0.0
    %3250 = vmatpush1.msra.mxu0 0.0
    %3251 = vmatprep.subr.mxu0 0.0
    %3252 = vmatpush1.msra.mxu0 0.0
    %3253 = vmatprep.subr.mxu0 0.0
    %3254 = vmatpush1.msra.mxu0 0.0
    %3255 = vmatprep.subr.mxu0 0.0
    %3256 = vmatpush1.msra.mxu0 0.0
    %3257 = vmatprep.subr.mxu0 0.0
    %3258 = vmatpush1.msra.mxu0 0.0
    %3259 = vmatprep.subr.mxu0 0.0
    %3260 = vmatpush1.msra.mxu0 0.0
    %3261 = vmatprep.subr.mxu0 0.0
    %3262 = vmatpush1.msra.mxu0 0.0
    %3263 = vmatprep.subr.mxu0 0.0
    %3264 = vmatpush1.msra.mxu0 0.0
    %3265 = vmatprep.subr.mxu0 0.0
    %3266 = vmatpush1.msra.mxu0 0.0
    %3267 = vmatprep.subr.mxu0 0.0
    %3268 = vmatpush1.msra.mxu0 0.0
    %3269 = vmatprep.subr.mxu0 0.0
    %3270 = vmatpush1.msra.mxu0 0.0
    %3271 = vmatprep.subr.mxu0 0.0
    %3272 = vmatpush1.msra.mxu0 0.0
    %3273 = vmatprep.subr.mxu0 0.0
    %3274 = vmatpush1.msra.mxu0 0.0
    %3275 = vmatprep.subr.mxu0 0.0
    %3276 = vmatpush1.msra.mxu0 0.0
    %3277 = vmatprep.subr.mxu0 0.0
    %3278 = vmatpush1.msra.mxu0 0.0
    %3279 = vmatprep.subr.mxu0 0.0
    %3280 = vmatpush1.msra.mxu0 0.0
    %3281 = vmatprep.mubr.f32.mxu0 0.0
    %3282 = vmatmul.mubr.f32.gmra.mrb[0].mxu0 %v3212
    %v3283 = vpop.f32.mrb[0].mxu0
    %v3284 = vadd.f32 %v3209, %v3283
    %v3285 = vpop.f32.mrb[0].mxu0
    %3286 = vmatprep.mubr.f32.mxu0 0.0
    %3287 = vmatmul.mubr.f32.gmra.mrb[0].mxu0 %v3215
    %v3288 = vpop.f32.mrb[0].mxu0
    %v3289 = vadd.f32 %v3209, %v3288
    %v3290 = vpop.f32.mrb[0].mxu0
    %3291 = vdwg.mxu0
    %3292 = vst [vmem:[#allocation15] sm:$0xff] %v3284
    %3293 = vst [vmem:[#allocation15 + $0x8] sm:$0xff] %v3289
    // Predicated region
    $region82: #{_forward_impl.1} parent=1 // pred_check
      _
    $region83: #{_forward_impl.1} parent=1 // pred_check_branch
      %3295 = sbr.rel (0) target = $region85
    $region84: #{_forward_impl.1} parent=1 // pred_region
      %s3297 = ssub.s32 256, 256
      %3298 = vsyncadd [#allocation5], %s3297
      %s3299 = sshll.u32 [#allocation15], 4
      %s3300 = int_to_ptr.vmem [resolvable:$true] %s3299
      %3305 = dma.vmem_to_hbm [thread:$0]  %s3300, 256, %s13, [#allocation5], 128, 128, 8
    $region85: #{_forward_impl.1} parent=1 // pred_fallthru
      _
    // Predicated region
    $region86: #{_forward_impl.1} parent=1 // pred_check
      _
    $region87: #{_forward_impl.1} parent=1 // pred_check_branch
      %3307 = sbr.rel (0) target = $region89
    $region88: #{_forward_impl.1} parent=1 // pred_region
      _
    $region89: #{_forward_impl.1} parent=1 // pred_fallthru
      _
    // Predicated region
    $region90: #{_forward_impl.1} parent=1 // pred_check
      _
    $region91: #{_forward_impl.1} parent=1 // pred_check_branch
      %3309 = sbr.rel (0) target = $region93
    $region92: #{_forward_impl.1} parent=1 // pred_region
      _
    $region93: #{_forward_impl.1} parent=1 // pred_fallthru
      _
    // Predicated region
    $region94: #{_forward_impl.1} parent=1 // pred_check
      _
    $region95: #{_forward_impl.1} parent=1 // pred_check_branch
      %3311 = sbr.rel (0) target = $region97
    $region96: #{_forward_impl.1} parent=1 // pred_region
      %3312 = dma.done [#allocation5], 256
    $region97: #{_forward_impl.1} parent=1 // pred_fallthru
      _
    // Predicated region
    $region98: #{_forward_impl.1} parent=1 // pred_check
      _
    $region99: #{_forward_impl.1} parent=1 // pred_check_branch
      %3314 = sbr.rel (0) target = $region101
    $region100: #{_forward_impl.1} parent=1 // pred_region
      _
    $region101: #{_forward_impl.1} parent=1 // pred_fallthru
      _
    // Predicated region
    $region102: #{_forward_impl.1} parent=1 // pred_check
      _
    $region103: #{_forward_impl.1} parent=1 // pred_check_branch
      %3316 = sbr.rel (0) target = $region105
    $region104: #{_forward_impl.1} parent=1 // pred_region
      _
    $region105: #{_forward_impl.1} parent=1 // pred_fallthru
      _
    %3317 = vsyncpa [#allocation4], 1
    %3318 = vsyncpa [#allocation7], 1
    %3319 = vsyncpa [#allocation10], 1
    %3320 = vsyncpa [#allocation13], 1
    %3321 = vsyncpa [#allocation5], 1

</llo_original>
